<compile_context>
chip_gen: v6e
topology: v6e:2x2x1
jax: 0.10.0
libtpu: 0.0.40
codegen_flags: <defaults>
</compile_context>

<pallas_src>
import functools

import jax
import jax.numpy as jnp
from jax.experimental import pallas as pl
from jax.experimental.pallas import tpu as pltpu

INPUT_LEN = 8          # self.input_len in the PyTorch module
MAX_NEI_DIS = 5.0      # self.max_nei_dis


def _slstm_kernel(tracks_ref, w_pos_ref, b_pos_ref, w_big_ref, w_de_ref,
                  b_de_ref, preds_ref, *, n, hidden_size, pre_length):
    f32, bf16 = jnp.float32, jnp.bfloat16
    H = hidden_size
    G = 4 * H                                   # gate width, columns = [i|f|o|g]

    tracks = tracks_ref[...]                    # [T*n, 2] f32, loaded once
    w_pos = w_pos_ref[...]                      # [2, 4H]  bf16 (embedding folded in)
    b_pos = b_pos_ref[...]                      # [1, 4H]  f32  (b_emb@Wx + b_ih + b_hh)
    w_big = w_big_ref[...]                      # [H, 8H]  bf16 ([W_social | W_hidden])
    w_de = w_de_ref[...]                        # [H, 2]   bf16
    b_de = b_de_ref[...]                        # [1, 2]   f32

    ones_n2 = jnp.ones((n, 2), f32)
    dn = (((1,), (1,)), ((), ()))               # contract last dims (A @ B^T)

    def adjacency(pos):
        """[n,2] -> {0,1} neighbour mask via Gram-matrix distances.

        Self-edges are intentionally included and the comparison is strictly
        '<', matching encode_/decode_social_pooling in the reference."""
        p2 = pos * pos
        gram = jax.lax.dot_general(pos, pos, dn, preferred_element_type=f32)
        sq_i = jax.lax.dot_general(p2, ones_n2, dn, preferred_element_type=f32)
        sq_j = jax.lax.dot_general(ones_n2, p2, dn, preferred_element_type=f32)
        d2 = sq_i + sq_j - 2.0 * gram
        return (d2 < MAX_NEI_DIS * MAX_NEI_DIS).astype(f32)

    def apply_gates(gates, c):
        # gate columns permuted to [i | f | o | g]: one sigmoid, one tanh
        sig = jax.nn.sigmoid(gates[:, :3 * H])
        g = jnp.tanh(gates[:, 3 * H:])
        i_g, f_g, o_g = sig[:, :H], sig[:, H:2 * H], sig[:, 2 * H:3 * H]
        c_new = f_g * c + i_g * g
        h_new = o_g * jnp.tanh(c_new)
        return h_new, c_new

    def lstm_step(pos_gates, adj, h, c):
        # gates = pos_gates + social@Ws + h@Wh, with social = adj@h, using
        # social@Ws == adj@(h@Ws) so h is projected by a single fused matmul.
        hw = jnp.dot(h.astype(bf16), w_big, preferred_element_type=f32)   # [n, 8H]
        social_g = jnp.dot(adj.astype(bf16), hw[:, :G].astype(bf16),
                           preferred_element_type=f32)                     # [n, 4H]
        return apply_gates(pos_gates + social_g + hw[:, G:], c)

    # ---- recurrence-independent precompute (one batched MXU pass) ----
    pos_gates_all = (jnp.dot(tracks.astype(bf16), w_pos,
                             preferred_element_type=f32) + b_pos)          # [T*n, 4H]
    adj_obs = [adjacency(tracks[f * n:(f + 1) * n, :])
               for f in range(INPUT_LEN)]

    zeros_h = jnp.zeros((n, H), f32)

    # ---------------- group_encode ----------------
    # init step: embedding(frame 0) + zero social, zero state
    h, c = apply_gates(pos_gates_all[0:n, :], zeros_h)
    # frames 0..input_len-2 (frame 0 is revisited with social pooling, exactly
    # like the PyTorch reference)
    for f in range(INPUT_LEN - 1):
        h, c = lstm_step(pos_gates_all[f * n:(f + 1) * n, :], adj_obs[f], h, c)

    # ---------------- decode / rollout ----------------
    pos_gates = pos_gates_all[(INPUT_LEN - 1) * n:INPUT_LEN * n, :]
    adj = adj_obs[INPUT_LEN - 1]
    preds = []
    for step in range(pre_length):
        h, c = lstm_step(pos_gates, adj, h, c)
        pos = jnp.dot(h.astype(bf16), w_de, preferred_element_type=f32) + b_de  # [n, 2]
        preds.append(pos)
        if step + 1 < pre_length:
            pos_gates = (jnp.dot(pos.astype(bf16), w_pos,
                                 preferred_element_type=f32) + b_pos)
            adj = adjacency(pos)

    # single store of all predictions (step-major rows)
    preds_ref[...] = jnp.concatenate(preds, axis=0)                 # [pre_length*n, 2]


def slstm_forward(group_track, params, pre_length):
    """group_track: [N, INPUT_LEN, 2]; returns group_track[0] extended to
    [INPUT_LEN + pre_length, 2] exactly like slstm_net.forward."""
    n, t, _ = group_track.shape
    assert t == INPUT_LEN, "all tracks must have length input_len=8"
    hidden_size = params["w_de"].shape[0]

    # time-major rows: row f*n + agent = position of `agent` at frame f
    tracks_flat = (jnp.transpose(group_track, (1, 0, 2))
                   .reshape(t * n, 2).astype(jnp.float32))

    kernel = functools.partial(_slstm_kernel, n=n, hidden_size=hidden_size,
                               pre_length=pre_length)
    vmem = lambda: pl.BlockSpec(memory_space=pltpu.MemorySpace.VMEM)

    preds = pl.pallas_call(
        kernel,
        out_shape=jax.ShapeDtypeStruct((pre_length * n, 2), jnp.float32),
        in_specs=[vmem() for _ in range(6)],
        out_specs=vmem(),
    )(tracks_flat, params["w_pos"], params["b_pos"], params["w_big"],
      params["w_de"], params["b_de"])

    preds = preds.reshape(pre_length, n, 2)
    # final append loop of forward(): track 0 gets the predicted positions
    return jnp.concatenate([group_track[0].astype(jnp.float32),
                            preds[:, 0, :]], axis=0)


def init_params(key, embadding_size, hidden_size):
    """Torch-layout parameters (nn.Linear / nn.LSTMCell shapes, gate order i,f,g,o)."""
    E, H = embadding_size, hidden_size
    ks = jax.random.split(key, 8)
    s_ih = 1.0 / jnp.sqrt(jnp.float32(E + H))
    s_hh = 1.0 / jnp.sqrt(jnp.float32(H))
    return {
        "w_emb": jax.random.normal(ks[0], (E, 2), jnp.float32) * 0.5,       # Linear(2,E).weight
        "b_emb": jax.random.normal(ks[1], (E,), jnp.float32) * 0.1,
        "w_ih": jax.random.normal(ks[2], (4 * H, E + H), jnp.float32) * s_ih,  # LSTMCell.weight_ih
        "w_hh": jax.random.normal(ks[3], (4 * H, H), jnp.float32) * s_hh,      # LSTMCell.weight_hh
        "b_ih": jax.random.normal(ks[4], (4 * H,), jnp.float32) * 0.1,
        "b_hh": jax.random.normal(ks[5], (4 * H,), jnp.float32) * 0.1,
        "w_de": jax.random.normal(ks[6], (2, H), jnp.float32) * s_hh,        # Linear(H,2).weight
        "b_de": jax.random.normal(ks[7], (2,), jnp.float32) * 0.1,
    }


def prepare_params(raw, embadding_size, hidden_size):
    """Fold/permute torch-layout weights into the kernel's fused layout."""
    E, H = embadding_size, hidden_size

    def perm(w):  # reorder torch LSTM gate columns (i,f,g,o) -> (i,f,o,g)
        return jnp.concatenate([w[..., :2 * H], w[..., 3 * H:],
                                w[..., 2 * H:3 * H]], axis=-1)

    w_ih_t = raw["w_ih"].T                       # [E+H, 4H]; rows: [embedding | social]
    wx = perm(w_ih_t[:E, :])                     # [E, 4H]  embedding rows
    ws = perm(w_ih_t[E:, :])                     # [H, 4H]  social rows
    wh = perm(raw["w_hh"].T)                     # [H, 4H]
    bias = perm((raw["b_ih"] + raw["b_hh"])[None, :])   # [1, 4H]
    w_emb_t = raw["w_emb"].T                     # [2, E]

    return {
        # position -> gate pre-activation (embedding Linear folded in):
        #   gates_pos = pos @ w_pos + b_pos
        "w_pos": (w_emb_t @ wx).astype(jnp.bfloat16),                        # [2, 4H]
        "b_pos": (raw["b_emb"][None, :] @ wx + bias).astype(jnp.float32),    # [1, 4H]
        # fused [W_social | W_hidden] so h is projected by one matmul
        "w_big": jnp.concatenate([ws, wh], axis=1).astype(jnp.bfloat16),     # [H, 8H]
        "w_de": raw["w_de"].T.astype(jnp.bfloat16),                          # [H, 2]
        "b_de": raw["b_de"][None, :].astype(jnp.float32),                    # [1, 2]
    }


if __name__ == "__main__":
    # small, deterministic example consistent with the module's forward
    N = 8                 # number of agents in the group
    T = INPUT_LEN         # 8 observed frames per track
    E = 16                # args.embadding_size
    H = 32                # args.hidden_size
    PRE_LENGTH = 4        # args.pre_length

    key = jax.random.PRNGKey(0)
    k_params, k_tracks = jax.random.split(key)
    raw = init_params(k_params, E, H)
    params = prepare_params(raw, E, H)
    # positions ~ a few meters apart so the 5 m neighbourhood mask is non-trivial
    group_track = jax.random.normal(k_tracks, (N, T, 2), jnp.float32) * 3.0

    out = slstm_forward(group_track, params, PRE_LENGTH)
    out = jax.block_until_ready(out)
    assert out.shape == (T + PRE_LENGTH, 2)
    assert bool(jnp.all(jnp.isfinite(out)))
    print("KERNEL_OK")
</pallas_src>

<mosaic_0001>
module attributes {stable_mosaic.version = 11 : i64} {
  func.func @_slstm_kernel(%arg0: memref<64x2xf32, #tpu.memory_space<vmem>>, %arg1: memref<2x128xbf16, #tpu.memory_space<vmem>>, %arg2: memref<1x128xf32, #tpu.memory_space<vmem>>, %arg3: memref<32x256xbf16, #tpu.memory_space<vmem>>, %arg4: memref<32x2xbf16, #tpu.memory_space<vmem>>, %arg5: memref<1x2xf32, #tpu.memory_space<vmem>>, %arg6: memref<32x2xf32, #tpu.memory_space<vmem>>) attributes {dimension_semantics = [], scalar_prefetch = 0 : i64, scratch_operands = 0 : i64, tpu.core_type = #tpu.core_type<tc>} {
    %c0 = arith.constant 0 : index
    %c0_0 = arith.constant 0 : index
    %0 = vector.load %arg0[%c0, %c0_0] : memref<64x2xf32, #tpu.memory_space<vmem>>, vector<64x2xf32>
    %c0_1 = arith.constant 0 : index
    %c0_2 = arith.constant 0 : index
    %1 = vector.load %arg1[%c0_1, %c0_2] : memref<2x128xbf16, #tpu.memory_space<vmem>>, vector<2x128xbf16>
    %c0_3 = arith.constant 0 : index
    %c0_4 = arith.constant 0 : index
    %2 = vector.load %arg2[%c0_3, %c0_4] : memref<1x128xf32, #tpu.memory_space<vmem>>, vector<1x128xf32>
    %c0_5 = arith.constant 0 : index
    %c0_6 = arith.constant 0 : index
    %3 = vector.load %arg3[%c0_5, %c0_6] : memref<32x256xbf16, #tpu.memory_space<vmem>>, vector<32x256xbf16>
    %c0_7 = arith.constant 0 : index
    %c0_8 = arith.constant 0 : index
    %4 = vector.load %arg4[%c0_7, %c0_8] : memref<32x2xbf16, #tpu.memory_space<vmem>>, vector<32x2xbf16>
    %c0_9 = arith.constant 0 : index
    %c0_10 = arith.constant 0 : index
    %5 = vector.load %arg5[%c0_9, %c0_10] : memref<1x2xf32, #tpu.memory_space<vmem>>, vector<1x2xf32>
    %cst = arith.constant 1.000000e+00 : f32
    %6 = vector.broadcast %cst : f32 to vector<8x2xf32>
    %7 = arith.truncf %0 : vector<64x2xf32> to vector<64x2xbf16>
    %cst_11 = arith.constant dense<0.000000e+00> : vector<64x128xf32>
    %8 = tpu.matmul %7, %1, %cst_11 {dimension_numbers = #tpu.dot_dimension_numbers<[1], [0], [0], [1], [0, 0, 1, 1], [], []>} : vector<64x2xbf16>, vector<2x128xbf16>, vector<64x128xf32> -> vector<64x128xf32>
    %9 = vector.broadcast %2 : vector<1x128xf32> to vector<64x128xf32>
    %10 = arith.addf %8, %9 : vector<64x128xf32>
    %11 = vector.extract_strided_slice %0 {offsets = [0, 0], sizes = [8, 2], strides = [1, 1]} : vector<64x2xf32> to vector<8x2xf32>
    %12 = arith.mulf %11, %11 : vector<8x2xf32>
    %cst_12 = arith.constant dense<0.000000e+00> : vector<8x8xf32>
    %13 = tpu.matmul %11, %11, %cst_12 {dimension_numbers = #tpu.dot_dimension_numbers<[1], [1], [0], [0], [0, 0, 1, 0], [], []>} : vector<8x2xf32>, vector<8x2xf32>, vector<8x8xf32> -> vector<8x8xf32>
    %cst_13 = arith.constant dense<0.000000e+00> : vector<8x8xf32>
    %14 = tpu.matmul %12, %6, %cst_13 {dimension_numbers = #tpu.dot_dimension_numbers<[1], [1], [0], [0], [0, 0, 1, 0], [], []>} : vector<8x2xf32>, vector<8x2xf32>, vector<8x8xf32> -> vector<8x8xf32>
    %cst_14 = arith.constant dense<0.000000e+00> : vector<8x8xf32>
    %15 = tpu.matmul %6, %12, %cst_14 {dimension_numbers = #tpu.dot_dimension_numbers<[1], [1], [0], [0], [0, 0, 1, 0], [], []>} : vector<8x2xf32>, vector<8x2xf32>, vector<8x8xf32> -> vector<8x8xf32>
    %16 = arith.addf %14, %15 : vector<8x8xf32>
    %cst_15 = arith.constant 2.000000e+00 : f32
    %17 = vector.broadcast %cst_15 : f32 to vector<8x8xf32>
    %18 = arith.mulf %17, %13 : vector<8x8xf32>
    %19 = arith.subf %16, %18 : vector<8x8xf32>
    %cst_16 = arith.constant 2.500000e+01 : f32
    %20 = vector.broadcast %cst_16 : f32 to vector<8x8xf32>
    %21 = arith.cmpf olt, %19, %20 : vector<8x8xf32>
    %22 = arith.extui %21 : vector<8x8xi1> to vector<8x8xi32>
    %23 = arith.sitofp %22 : vector<8x8xi32> to vector<8x8xf32>
    %24 = vector.extract_strided_slice %0 {offsets = [8, 0], sizes = [8, 2], strides = [1, 1]} : vector<64x2xf32> to vector<8x2xf32>
    %25 = arith.mulf %24, %24 : vector<8x2xf32>
    %cst_17 = arith.constant dense<0.000000e+00> : vector<8x8xf32>
    %26 = tpu.matmul %24, %24, %cst_17 {dimension_numbers = #tpu.dot_dimension_numbers<[1], [1], [0], [0], [0, 0, 1, 0], [], []>} : vector<8x2xf32>, vector<8x2xf32>, vector<8x8xf32> -> vector<8x8xf32>
    %cst_18 = arith.constant dense<0.000000e+00> : vector<8x8xf32>
    %27 = tpu.matmul %25, %6, %cst_18 {dimension_numbers = #tpu.dot_dimension_numbers<[1], [1], [0], [0], [0, 0, 1, 0], [], []>} : vector<8x2xf32>, vector<8x2xf32>, vector<8x8xf32> -> vector<8x8xf32>
    %cst_19 = arith.constant dense<0.000000e+00> : vector<8x8xf32>
    %28 = tpu.matmul %6, %25, %cst_19 {dimension_numbers = #tpu.dot_dimension_numbers<[1], [1], [0], [0], [0, 0, 1, 0], [], []>} : vector<8x2xf32>, vector<8x2xf32>, vector<8x8xf32> -> vector<8x8xf32>
    %29 = arith.addf %27, %28 : vector<8x8xf32>
    %cst_20 = arith.constant 2.000000e+00 : f32
    %30 = vector.broadcast %cst_20 : f32 to vector<8x8xf32>
    %31 = arith.mulf %30, %26 : vector<8x8xf32>
    %32 = arith.subf %29, %31 : vector<8x8xf32>
    %cst_21 = arith.constant 2.500000e+01 : f32
    %33 = vector.broadcast %cst_21 : f32 to vector<8x8xf32>
    %34 = arith.cmpf olt, %32, %33 : vector<8x8xf32>
    %35 = arith.extui %34 : vector<8x8xi1> to vector<8x8xi32>
    %36 = arith.sitofp %35 : vector<8x8xi32> to vector<8x8xf32>
    %37 = vector.extract_strided_slice %0 {offsets = [16, 0], sizes = [8, 2], strides = [1, 1]} : vector<64x2xf32> to vector<8x2xf32>
    %38 = arith.mulf %37, %37 : vector<8x2xf32>
    %cst_22 = arith.constant dense<0.000000e+00> : vector<8x8xf32>
    %39 = tpu.matmul %37, %37, %cst_22 {dimension_numbers = #tpu.dot_dimension_numbers<[1], [1], [0], [0], [0, 0, 1, 0], [], []>} : vector<8x2xf32>, vector<8x2xf32>, vector<8x8xf32> -> vector<8x8xf32>
    %cst_23 = arith.constant dense<0.000000e+00> : vector<8x8xf32>
    %40 = tpu.matmul %38, %6, %cst_23 {dimension_numbers = #tpu.dot_dimension_numbers<[1], [1], [0], [0], [0, 0, 1, 0], [], []>} : vector<8x2xf32>, vector<8x2xf32>, vector<8x8xf32> -> vector<8x8xf32>
    %cst_24 = arith.constant dense<0.000000e+00> : vector<8x8xf32>
    %41 = tpu.matmul %6, %38, %cst_24 {dimension_numbers = #tpu.dot_dimension_numbers<[1], [1], [0], [0], [0, 0, 1, 0], [], []>} : vector<8x2xf32>, vector<8x2xf32>, vector<8x8xf32> -> vector<8x8xf32>
    %42 = arith.addf %40, %41 : vector<8x8xf32>
    %cst_25 = arith.constant 2.000000e+00 : f32
    %43 = vector.broadcast %cst_25 : f32 to vector<8x8xf32>
    %44 = arith.mulf %43, %39 : vector<8x8xf32>
    %45 = arith.subf %42, %44 : vector<8x8xf32>
    %cst_26 = arith.constant 2.500000e+01 : f32
    %46 = vector.broadcast %cst_26 : f32 to vector<8x8xf32>
    %47 = arith.cmpf olt, %45, %46 : vector<8x8xf32>
    %48 = arith.extui %47 : vector<8x8xi1> to vector<8x8xi32>
    %49 = arith.sitofp %48 : vector<8x8xi32> to vector<8x8xf32>
    %50 = vector.extract_strided_slice %0 {offsets = [24, 0], sizes = [8, 2], strides = [1, 1]} : vector<64x2xf32> to vector<8x2xf32>
    %51 = arith.mulf %50, %50 : vector<8x2xf32>
    %cst_27 = arith.constant dense<0.000000e+00> : vector<8x8xf32>
    %52 = tpu.matmul %50, %50, %cst_27 {dimension_numbers = #tpu.dot_dimension_numbers<[1], [1], [0], [0], [0, 0, 1, 0], [], []>} : vector<8x2xf32>, vector<8x2xf32>, vector<8x8xf32> -> vector<8x8xf32>
    %cst_28 = arith.constant dense<0.000000e+00> : vector<8x8xf32>
    %53 = tpu.matmul %51, %6, %cst_28 {dimension_numbers = #tpu.dot_dimension_numbers<[1], [1], [0], [0], [0, 0, 1, 0], [], []>} : vector<8x2xf32>, vector<8x2xf32>, vector<8x8xf32> -> vector<8x8xf32>
    %cst_29 = arith.constant dense<0.000000e+00> : vector<8x8xf32>
    %54 = tpu.matmul %6, %51, %cst_29 {dimension_numbers = #tpu.dot_dimension_numbers<[1], [1], [0], [0], [0, 0, 1, 0], [], []>} : vector<8x2xf32>, vector<8x2xf32>, vector<8x8xf32> -> vector<8x8xf32>
    %55 = arith.addf %53, %54 : vector<8x8xf32>
    %cst_30 = arith.constant 2.000000e+00 : f32
    %56 = vector.broadcast %cst_30 : f32 to vector<8x8xf32>
    %57 = arith.mulf %56, %52 : vector<8x8xf32>
    %58 = arith.subf %55, %57 : vector<8x8xf32>
    %cst_31 = arith.constant 2.500000e+01 : f32
    %59 = vector.broadcast %cst_31 : f32 to vector<8x8xf32>
    %60 = arith.cmpf olt, %58, %59 : vector<8x8xf32>
    %61 = arith.extui %60 : vector<8x8xi1> to vector<8x8xi32>
    %62 = arith.sitofp %61 : vector<8x8xi32> to vector<8x8xf32>
    %63 = vector.extract_strided_slice %0 {offsets = [32, 0], sizes = [8, 2], strides = [1, 1]} : vector<64x2xf32> to vector<8x2xf32>
    %64 = arith.mulf %63, %63 : vector<8x2xf32>
    %cst_32 = arith.constant dense<0.000000e+00> : vector<8x8xf32>
    %65 = tpu.matmul %63, %63, %cst_32 {dimension_numbers = #tpu.dot_dimension_numbers<[1], [1], [0], [0], [0, 0, 1, 0], [], []>} : vector<8x2xf32>, vector<8x2xf32>, vector<8x8xf32> -> vector<8x8xf32>
    %cst_33 = arith.constant dense<0.000000e+00> : vector<8x8xf32>
    %66 = tpu.matmul %64, %6, %cst_33 {dimension_numbers = #tpu.dot_dimension_numbers<[1], [1], [0], [0], [0, 0, 1, 0], [], []>} : vector<8x2xf32>, vector<8x2xf32>, vector<8x8xf32> -> vector<8x8xf32>
    %cst_34 = arith.constant dense<0.000000e+00> : vector<8x8xf32>
    %67 = tpu.matmul %6, %64, %cst_34 {dimension_numbers = #tpu.dot_dimension_numbers<[1], [1], [0], [0], [0, 0, 1, 0], [], []>} : vector<8x2xf32>, vector<8x2xf32>, vector<8x8xf32> -> vector<8x8xf32>
    %68 = arith.addf %66, %67 : vector<8x8xf32>
    %cst_35 = arith.constant 2.000000e+00 : f32
    %69 = vector.broadcast %cst_35 : f32 to vector<8x8xf32>
    %70 = arith.mulf %69, %65 : vector<8x8xf32>
    %71 = arith.subf %68, %70 : vector<8x8xf32>
    %cst_36 = arith.constant 2.500000e+01 : f32
    %72 = vector.broadcast %cst_36 : f32 to vector<8x8xf32>
    %73 = arith.cmpf olt, %71, %72 : vector<8x8xf32>
    %74 = arith.extui %73 : vector<8x8xi1> to vector<8x8xi32>
    %75 = arith.sitofp %74 : vector<8x8xi32> to vector<8x8xf32>
    %76 = vector.extract_strided_slice %0 {offsets = [40, 0], sizes = [8, 2], strides = [1, 1]} : vector<64x2xf32> to vector<8x2xf32>
    %77 = arith.mulf %76, %76 : vector<8x2xf32>
    %cst_37 = arith.constant dense<0.000000e+00> : vector<8x8xf32>
    %78 = tpu.matmul %76, %76, %cst_37 {dimension_numbers = #tpu.dot_dimension_numbers<[1], [1], [0], [0], [0, 0, 1, 0], [], []>} : vector<8x2xf32>, vector<8x2xf32>, vector<8x8xf32> -> vector<8x8xf32>
    %cst_38 = arith.constant dense<0.000000e+00> : vector<8x8xf32>
    %79 = tpu.matmul %77, %6, %cst_38 {dimension_numbers = #tpu.dot_dimension_numbers<[1], [1], [0], [0], [0, 0, 1, 0], [], []>} : vector<8x2xf32>, vector<8x2xf32>, vector<8x8xf32> -> vector<8x8xf32>
    %cst_39 = arith.constant dense<0.000000e+00> : vector<8x8xf32>
    %80 = tpu.matmul %6, %77, %cst_39 {dimension_numbers = #tpu.dot_dimension_numbers<[1], [1], [0], [0], [0, 0, 1, 0], [], []>} : vector<8x2xf32>, vector<8x2xf32>, vector<8x8xf32> -> vector<8x8xf32>
    %81 = arith.addf %79, %80 : vector<8x8xf32>
    %cst_40 = arith.constant 2.000000e+00 : f32
    %82 = vector.broadcast %cst_40 : f32 to vector<8x8xf32>
    %83 = arith.mulf %82, %78 : vector<8x8xf32>
    %84 = arith.subf %81, %83 : vector<8x8xf32>
    %cst_41 = arith.constant 2.500000e+01 : f32
    %85 = vector.broadcast %cst_41 : f32 to vector<8x8xf32>
    %86 = arith.cmpf olt, %84, %85 : vector<8x8xf32>
    %87 = arith.extui %86 : vector<8x8xi1> to vector<8x8xi32>
    %88 = arith.sitofp %87 : vector<8x8xi32> to vector<8x8xf32>
    %89 = vector.extract_strided_slice %0 {offsets = [48, 0], sizes = [8, 2], strides = [1, 1]} : vector<64x2xf32> to vector<8x2xf32>
    %90 = arith.mulf %89, %89 : vector<8x2xf32>
    %cst_42 = arith.constant dense<0.000000e+00> : vector<8x8xf32>
    %91 = tpu.matmul %89, %89, %cst_42 {dimension_numbers = #tpu.dot_dimension_numbers<[1], [1], [0], [0], [0, 0, 1, 0], [], []>} : vector<8x2xf32>, vector<8x2xf32>, vector<8x8xf32> -> vector<8x8xf32>
    %cst_43 = arith.constant dense<0.000000e+00> : vector<8x8xf32>
    %92 = tpu.matmul %90, %6, %cst_43 {dimension_numbers = #tpu.dot_dimension_numbers<[1], [1], [0], [0], [0, 0, 1, 0], [], []>} : vector<8x2xf32>, vector<8x2xf32>, vector<8x8xf32> -> vector<8x8xf32>
    %cst_44 = arith.constant dense<0.000000e+00> : vector<8x8xf32>
    %93 = tpu.matmul %6, %90, %cst_44 {dimension_numbers = #tpu.dot_dimension_numbers<[1], [1], [0], [0], [0, 0, 1, 0], [], []>} : vector<8x2xf32>, vector<8x2xf32>, vector<8x8xf32> -> vector<8x8xf32>
    %94 = arith.addf %92, %93 : vector<8x8xf32>
    %cst_45 = arith.constant 2.000000e+00 : f32
    %95 = vector.broadcast %cst_45 : f32 to vector<8x8xf32>
    %96 = arith.mulf %95, %91 : vector<8x8xf32>
    %97 = arith.subf %94, %96 : vector<8x8xf32>
    %cst_46 = arith.constant 2.500000e+01 : f32
    %98 = vector.broadcast %cst_46 : f32 to vector<8x8xf32>
    %99 = arith.cmpf olt, %97, %98 : vector<8x8xf32>
    %100 = arith.extui %99 : vector<8x8xi1> to vector<8x8xi32>
    %101 = arith.sitofp %100 : vector<8x8xi32> to vector<8x8xf32>
    %102 = vector.extract_strided_slice %0 {offsets = [56, 0], sizes = [8, 2], strides = [1, 1]} : vector<64x2xf32> to vector<8x2xf32>
    %103 = arith.mulf %102, %102 : vector<8x2xf32>
    %cst_47 = arith.constant dense<0.000000e+00> : vector<8x8xf32>
    %104 = tpu.matmul %102, %102, %cst_47 {dimension_numbers = #tpu.dot_dimension_numbers<[1], [1], [0], [0], [0, 0, 1, 0], [], []>} : vector<8x2xf32>, vector<8x2xf32>, vector<8x8xf32> -> vector<8x8xf32>
    %cst_48 = arith.constant dense<0.000000e+00> : vector<8x8xf32>
    %105 = tpu.matmul %103, %6, %cst_48 {dimension_numbers = #tpu.dot_dimension_numbers<[1], [1], [0], [0], [0, 0, 1, 0], [], []>} : vector<8x2xf32>, vector<8x2xf32>, vector<8x8xf32> -> vector<8x8xf32>
    %cst_49 = arith.constant dense<0.000000e+00> : vector<8x8xf32>
    %106 = tpu.matmul %6, %103, %cst_49 {dimension_numbers = #tpu.dot_dimension_numbers<[1], [1], [0], [0], [0, 0, 1, 0], [], []>} : vector<8x2xf32>, vector<8x2xf32>, vector<8x8xf32> -> vector<8x8xf32>
    %107 = arith.addf %105, %106 : vector<8x8xf32>
    %cst_50 = arith.constant 2.000000e+00 : f32
    %108 = vector.broadcast %cst_50 : f32 to vector<8x8xf32>
    %109 = arith.mulf %108, %104 : vector<8x8xf32>
    %110 = arith.subf %107, %109 : vector<8x8xf32>
    %cst_51 = arith.constant 2.500000e+01 : f32
    %111 = vector.broadcast %cst_51 : f32 to vector<8x8xf32>
    %112 = arith.cmpf olt, %110, %111 : vector<8x8xf32>
    %113 = arith.extui %112 : vector<8x8xi1> to vector<8x8xi32>
    %114 = arith.sitofp %113 : vector<8x8xi32> to vector<8x8xf32>
    %cst_52 = arith.constant 0.000000e+00 : f32
    %115 = vector.broadcast %cst_52 : f32 to vector<8x32xf32>
    %116 = vector.extract_strided_slice %10 {offsets = [0, 0], sizes = [8, 128], strides = [1, 1]} : vector<64x128xf32> to vector<8x128xf32>
    %117 = vector.extract_strided_slice %116 {offsets = [0, 0], sizes = [8, 96], strides = [1, 1]} : vector<8x128xf32> to vector<8x96xf32>
    %118 = arith.negf %117 : vector<8x96xf32>
    %119 = math.exp %118 : vector<8x96xf32>
    %cst_53 = arith.constant 1.000000e+00 : f32
    %120 = vector.broadcast %cst_53 : f32 to vector<8x96xf32>
    %121 = arith.addf %120, %119 : vector<8x96xf32>
    %122 = arith.divf %120, %121 : vector<8x96xf32>
    %123 = vector.extract_strided_slice %116 {offsets = [0, 96], sizes = [8, 32], strides = [1, 1]} : vector<8x128xf32> to vector<8x32xf32>
    %124 = math.tanh %123 : vector<8x32xf32>
    %125 = vector.extract_strided_slice %122 {offsets = [0, 0], sizes = [8, 32], strides = [1, 1]} : vector<8x96xf32> to vector<8x32xf32>
    %126 = vector.extract_strided_slice %122 {offsets = [0, 32], sizes = [8, 32], strides = [1, 1]} : vector<8x96xf32> to vector<8x32xf32>
    %127 = vector.extract_strided_slice %122 {offsets = [0, 64], sizes = [8, 32], strides = [1, 1]} : vector<8x96xf32> to vector<8x32xf32>
    %128 = arith.mulf %126, %115 : vector<8x32xf32>
    %129 = arith.mulf %125, %124 : vector<8x32xf32>
    %130 = arith.addf %128, %129 : vector<8x32xf32>
    %131 = math.tanh %130 : vector<8x32xf32>
    %132 = arith.mulf %127, %131 : vector<8x32xf32>
    %133 = vector.extract_strided_slice %10 {offsets = [0, 0], sizes = [8, 128], strides = [1, 1]} : vector<64x128xf32> to vector<8x128xf32>
    %134 = arith.truncf %132 : vector<8x32xf32> to vector<8x32xbf16>
    %cst_54 = arith.constant dense<0.000000e+00> : vector<8x256xf32>
    %135 = tpu.matmul %134, %3, %cst_54 {dimension_numbers = #tpu.dot_dimension_numbers<[1], [0], [0], [1], [0, 0, 1, 1], [], []>} : vector<8x32xbf16>, vector<32x256xbf16>, vector<8x256xf32> -> vector<8x256xf32>
    %136 = arith.truncf %23 : vector<8x8xf32> to vector<8x8xbf16>
    %137 = vector.extract_strided_slice %135 {offsets = [0, 0], sizes = [8, 128], strides = [1, 1]} : vector<8x256xf32> to vector<8x128xf32>
    %138 = arith.truncf %137 : vector<8x128xf32> to vector<8x128xbf16>
    %cst_55 = arith.constant dense<0.000000e+00> : vector<8x128xf32>
    %139 = tpu.matmul %136, %138, %cst_55 {dimension_numbers = #tpu.dot_dimension_numbers<[1], [0], [0], [1], [0, 0, 1, 1], [], []>} : vector<8x8xbf16>, vector<8x128xbf16>, vector<8x128xf32> -> vector<8x128xf32>
    %140 = arith.addf %133, %139 : vector<8x128xf32>
    %141 = vector.extract_strided_slice %135 {offsets = [0, 128], sizes = [8, 128], strides = [1, 1]} : vector<8x256xf32> to vector<8x128xf32>
    %142 = arith.addf %140, %141 : vector<8x128xf32>
    %143 = vector.extract_strided_slice %142 {offsets = [0, 0], sizes = [8, 96], strides = [1, 1]} : vector<8x128xf32> to vector<8x96xf32>
    %144 = arith.negf %143 : vector<8x96xf32>
    %145 = math.exp %144 : vector<8x96xf32>
    %cst_56 = arith.constant 1.000000e+00 : f32
    %146 = vector.broadcast %cst_56 : f32 to vector<8x96xf32>
    %147 = arith.addf %146, %145 : vector<8x96xf32>
    %148 = arith.divf %146, %147 : vector<8x96xf32>
    %149 = vector.extract_strided_slice %142 {offsets = [0, 96], sizes = [8, 32], strides = [1, 1]} : vector<8x128xf32> to vector<8x32xf32>
    %150 = math.tanh %149 : vector<8x32xf32>
    %151 = vector.extract_strided_slice %148 {offsets = [0, 0], sizes = [8, 32], strides = [1, 1]} : vector<8x96xf32> to vector<8x32xf32>
    %152 = vector.extract_strided_slice %148 {offsets = [0, 32], sizes = [8, 32], strides = [1, 1]} : vector<8x96xf32> to vector<8x32xf32>
    %153 = vector.extract_strided_slice %148 {offsets = [0, 64], sizes = [8, 32], strides = [1, 1]} : vector<8x96xf32> to vector<8x32xf32>
    %154 = arith.mulf %152, %130 : vector<8x32xf32>
    %155 = arith.mulf %151, %150 : vector<8x32xf32>
    %156 = arith.addf %154, %155 : vector<8x32xf32>
    %157 = math.tanh %156 : vector<8x32xf32>
    %158 = arith.mulf %153, %157 : vector<8x32xf32>
    %159 = vector.extract_strided_slice %10 {offsets = [8, 0], sizes = [8, 128], strides = [1, 1]} : vector<64x128xf32> to vector<8x128xf32>
    %160 = arith.truncf %158 : vector<8x32xf32> to vector<8x32xbf16>
    %cst_57 = arith.constant dense<0.000000e+00> : vector<8x256xf32>
    %161 = tpu.matmul %160, %3, %cst_57 {dimension_numbers = #tpu.dot_dimension_numbers<[1], [0], [0], [1], [0, 0, 1, 1], [], []>} : vector<8x32xbf16>, vector<32x256xbf16>, vector<8x256xf32> -> vector<8x256xf32>
    %162 = arith.truncf %36 : vector<8x8xf32> to vector<8x8xbf16>
    %163 = vector.extract_strided_slice %161 {offsets = [0, 0], sizes = [8, 128], strides = [1, 1]} : vector<8x256xf32> to vector<8x128xf32>
    %164 = arith.truncf %163 : vector<8x128xf32> to vector<8x128xbf16>
    %cst_58 = arith.constant dense<0.000000e+00> : vector<8x128xf32>
    %165 = tpu.matmul %162, %164, %cst_58 {dimension_numbers = #tpu.dot_dimension_numbers<[1], [0], [0], [1], [0, 0, 1, 1], [], []>} : vector<8x8xbf16>, vector<8x128xbf16>, vector<8x128xf32> -> vector<8x128xf32>
    %166 = arith.addf %159, %165 : vector<8x128xf32>
    %167 = vector.extract_strided_slice %161 {offsets = [0, 128], sizes = [8, 128], strides = [1, 1]} : vector<8x256xf32> to vector<8x128xf32>
    %168 = arith.addf %166, %167 : vector<8x128xf32>
    %169 = vector.extract_strided_slice %168 {offsets = [0, 0], sizes = [8, 96], strides = [1, 1]} : vector<8x128xf32> to vector<8x96xf32>
    %170 = arith.negf %169 : vector<8x96xf32>
    %171 = math.exp %170 : vector<8x96xf32>
    %cst_59 = arith.constant 1.000000e+00 : f32
    %172 = vector.broadcast %cst_59 : f32 to vector<8x96xf32>
    %173 = arith.addf %172, %171 : vector<8x96xf32>
    %174 = arith.divf %172, %173 : vector<8x96xf32>
    %175 = vector.extract_strided_slice %168 {offsets = [0, 96], sizes = [8, 32], strides = [1, 1]} : vector<8x128xf32> to vector<8x32xf32>
    %176 = math.tanh %175 : vector<8x32xf32>
    %177 = vector.extract_strided_slice %174 {offsets = [0, 0], sizes = [8, 32], strides = [1, 1]} : vector<8x96xf32> to vector<8x32xf32>
    %178 = vector.extract_strided_slice %174 {offsets = [0, 32], sizes = [8, 32], strides = [1, 1]} : vector<8x96xf32> to vector<8x32xf32>
    %179 = vector.extract_strided_slice %174 {offsets = [0, 64], sizes = [8, 32], strides = [1, 1]} : vector<8x96xf32> to vector<8x32xf32>
    %180 = arith.mulf %178, %156 : vector<8x32xf32>
    %181 = arith.mulf %177, %176 : vector<8x32xf32>
    %182 = arith.addf %180, %181 : vector<8x32xf32>
    %183 = math.tanh %182 : vector<8x32xf32>
    %184 = arith.mulf %179, %183 : vector<8x32xf32>
    %185 = vector.extract_strided_slice %10 {offsets = [16, 0], sizes = [8, 128], strides = [1, 1]} : vector<64x128xf32> to vector<8x128xf32>
    %186 = arith.truncf %184 : vector<8x32xf32> to vector<8x32xbf16>
    %cst_60 = arith.constant dense<0.000000e+00> : vector<8x256xf32>
    %187 = tpu.matmul %186, %3, %cst_60 {dimension_numbers = #tpu.dot_dimension_numbers<[1], [0], [0], [1], [0, 0, 1, 1], [], []>} : vector<8x32xbf16>, vector<32x256xbf16>, vector<8x256xf32> -> vector<8x256xf32>
    %188 = arith.truncf %49 : vector<8x8xf32> to vector<8x8xbf16>
    %189 = vector.extract_strided_slice %187 {offsets = [0, 0], sizes = [8, 128], strides = [1, 1]} : vector<8x256xf32> to vector<8x128xf32>
    %190 = arith.truncf %189 : vector<8x128xf32> to vector<8x128xbf16>
    %cst_61 = arith.constant dense<0.000000e+00> : vector<8x128xf32>
    %191 = tpu.matmul %188, %190, %cst_61 {dimension_numbers = #tpu.dot_dimension_numbers<[1], [0], [0], [1], [0, 0, 1, 1], [], []>} : vector<8x8xbf16>, vector<8x128xbf16>, vector<8x128xf32> -> vector<8x128xf32>
    %192 = arith.addf %185, %191 : vector<8x128xf32>
    %193 = vector.extract_strided_slice %187 {offsets = [0, 128], sizes = [8, 128], strides = [1, 1]} : vector<8x256xf32> to vector<8x128xf32>
    %194 = arith.addf %192, %193 : vector<8x128xf32>
    %195 = vector.extract_strided_slice %194 {offsets = [0, 0], sizes = [8, 96], strides = [1, 1]} : vector<8x128xf32> to vector<8x96xf32>
    %196 = arith.negf %195 : vector<8x96xf32>
    %197 = math.exp %196 : vector<8x96xf32>
    %cst_62 = arith.constant 1.000000e+00 : f32
    %198 = vector.broadcast %cst_62 : f32 to vector<8x96xf32>
    %199 = arith.addf %198, %197 : vector<8x96xf32>
    %200 = arith.divf %198, %199 : vector<8x96xf32>
    %201 = vector.extract_strided_slice %194 {offsets = [0, 96], sizes = [8, 32], strides = [1, 1]} : vector<8x128xf32> to vector<8x32xf32>
    %202 = math.tanh %201 : vector<8x32xf32>
    %203 = vector.extract_strided_slice %200 {offsets = [0, 0], sizes = [8, 32], strides = [1, 1]} : vector<8x96xf32> to vector<8x32xf32>
    %204 = vector.extract_strided_slice %200 {offsets = [0, 32], sizes = [8, 32], strides = [1, 1]} : vector<8x96xf32> to vector<8x32xf32>
    %205 = vector.extract_strided_slice %200 {offsets = [0, 64], sizes = [8, 32], strides = [1, 1]} : vector<8x96xf32> to vector<8x32xf32>
    %206 = arith.mulf %204, %182 : vector<8x32xf32>
    %207 = arith.mulf %203, %202 : vector<8x32xf32>
    %208 = arith.addf %206, %207 : vector<8x32xf32>
    %209 = math.tanh %208 : vector<8x32xf32>
    %210 = arith.mulf %205, %209 : vector<8x32xf32>
    %211 = vector.extract_strided_slice %10 {offsets = [24, 0], sizes = [8, 128], strides = [1, 1]} : vector<64x128xf32> to vector<8x128xf32>
    %212 = arith.truncf %210 : vector<8x32xf32> to vector<8x32xbf16>
    %cst_63 = arith.constant dense<0.000000e+00> : vector<8x256xf32>
    %213 = tpu.matmul %212, %3, %cst_63 {dimension_numbers = #tpu.dot_dimension_numbers<[1], [0], [0], [1], [0, 0, 1, 1], [], []>} : vector<8x32xbf16>, vector<32x256xbf16>, vector<8x256xf32> -> vector<8x256xf32>
    %214 = arith.truncf %62 : vector<8x8xf32> to vector<8x8xbf16>
    %215 = vector.extract_strided_slice %213 {offsets = [0, 0], sizes = [8, 128], strides = [1, 1]} : vector<8x256xf32> to vector<8x128xf32>
    %216 = arith.truncf %215 : vector<8x128xf32> to vector<8x128xbf16>
    %cst_64 = arith.constant dense<0.000000e+00> : vector<8x128xf32>
    %217 = tpu.matmul %214, %216, %cst_64 {dimension_numbers = #tpu.dot_dimension_numbers<[1], [0], [0], [1], [0, 0, 1, 1], [], []>} : vector<8x8xbf16>, vector<8x128xbf16>, vector<8x128xf32> -> vector<8x128xf32>
    %218 = arith.addf %211, %217 : vector<8x128xf32>
    %219 = vector.extract_strided_slice %213 {offsets = [0, 128], sizes = [8, 128], strides = [1, 1]} : vector<8x256xf32> to vector<8x128xf32>
    %220 = arith.addf %218, %219 : vector<8x128xf32>
    %221 = vector.extract_strided_slice %220 {offsets = [0, 0], sizes = [8, 96], strides = [1, 1]} : vector<8x128xf32> to vector<8x96xf32>
    %222 = arith.negf %221 : vector<8x96xf32>
    %223 = math.exp %222 : vector<8x96xf32>
    %cst_65 = arith.constant 1.000000e+00 : f32
    %224 = vector.broadcast %cst_65 : f32 to vector<8x96xf32>
    %225 = arith.addf %224, %223 : vector<8x96xf32>
    %226 = arith.divf %224, %225 : vector<8x96xf32>
    %227 = vector.extract_strided_slice %220 {offsets = [0, 96], sizes = [8, 32], strides = [1, 1]} : vector<8x128xf32> to vector<8x32xf32>
    %228 = math.tanh %227 : vector<8x32xf32>
    %229 = vector.extract_strided_slice %226 {offsets = [0, 0], sizes = [8, 32], strides = [1, 1]} : vector<8x96xf32> to vector<8x32xf32>
    %230 = vector.extract_strided_slice %226 {offsets = [0, 32], sizes = [8, 32], strides = [1, 1]} : vector<8x96xf32> to vector<8x32xf32>
    %231 = vector.extract_strided_slice %226 {offsets = [0, 64], sizes = [8, 32], strides = [1, 1]} : vector<8x96xf32> to vector<8x32xf32>
    %232 = arith.mulf %230, %208 : vector<8x32xf32>
    %233 = arith.mulf %229, %228 : vector<8x32xf32>
    %234 = arith.addf %232, %233 : vector<8x32xf32>
    %235 = math.tanh %234 : vector<8x32xf32>
    %236 = arith.mulf %231, %235 : vector<8x32xf32>
    %237 = vector.extract_strided_slice %10 {offsets = [32, 0], sizes = [8, 128], strides = [1, 1]} : vector<64x128xf32> to vector<8x128xf32>
    %238 = arith.truncf %236 : vector<8x32xf32> to vector<8x32xbf16>
    %cst_66 = arith.constant dense<0.000000e+00> : vector<8x256xf32>
    %239 = tpu.matmul %238, %3, %cst_66 {dimension_numbers = #tpu.dot_dimension_numbers<[1], [0], [0], [1], [0, 0, 1, 1], [], []>} : vector<8x32xbf16>, vector<32x256xbf16>, vector<8x256xf32> -> vector<8x256xf32>
    %240 = arith.truncf %75 : vector<8x8xf32> to vector<8x8xbf16>
    %241 = vector.extract_strided_slice %239 {offsets = [0, 0], sizes = [8, 128], strides = [1, 1]} : vector<8x256xf32> to vector<8x128xf32>
    %242 = arith.truncf %241 : vector<8x128xf32> to vector<8x128xbf16>
    %cst_67 = arith.constant dense<0.000000e+00> : vector<8x128xf32>
    %243 = tpu.matmul %240, %242, %cst_67 {dimension_numbers = #tpu.dot_dimension_numbers<[1], [0], [0], [1], [0, 0, 1, 1], [], []>} : vector<8x8xbf16>, vector<8x128xbf16>, vector<8x128xf32> -> vector<8x128xf32>
    %244 = arith.addf %237, %243 : vector<8x128xf32>
    %245 = vector.extract_strided_slice %239 {offsets = [0, 128], sizes = [8, 128], strides = [1, 1]} : vector<8x256xf32> to vector<8x128xf32>
    %246 = arith.addf %244, %245 : vector<8x128xf32>
    %247 = vector.extract_strided_slice %246 {offsets = [0, 0], sizes = [8, 96], strides = [1, 1]} : vector<8x128xf32> to vector<8x96xf32>
    %248 = arith.negf %247 : vector<8x96xf32>
    %249 = math.exp %248 : vector<8x96xf32>
    %cst_68 = arith.constant 1.000000e+00 : f32
    %250 = vector.broadcast %cst_68 : f32 to vector<8x96xf32>
    %251 = arith.addf %250, %249 : vector<8x96xf32>
    %252 = arith.divf %250, %251 : vector<8x96xf32>
    %253 = vector.extract_strided_slice %246 {offsets = [0, 96], sizes = [8, 32], strides = [1, 1]} : vector<8x128xf32> to vector<8x32xf32>
    %254 = math.tanh %253 : vector<8x32xf32>
    %255 = vector.extract_strided_slice %252 {offsets = [0, 0], sizes = [8, 32], strides = [1, 1]} : vector<8x96xf32> to vector<8x32xf32>
    %256 = vector.extract_strided_slice %252 {offsets = [0, 32], sizes = [8, 32], strides = [1, 1]} : vector<8x96xf32> to vector<8x32xf32>
    %257 = vector.extract_strided_slice %252 {offsets = [0, 64], sizes = [8, 32], strides = [1, 1]} : vector<8x96xf32> to vector<8x32xf32>
    %258 = arith.mulf %256, %234 : vector<8x32xf32>
    %259 = arith.mulf %255, %254 : vector<8x32xf32>
    %260 = arith.addf %258, %259 : vector<8x32xf32>
    %261 = math.tanh %260 : vector<8x32xf32>
    %262 = arith.mulf %257, %261 : vector<8x32xf32>
    %263 = vector.extract_strided_slice %10 {offsets = [40, 0], sizes = [8, 128], strides = [1, 1]} : vector<64x128xf32> to vector<8x128xf32>
    %264 = arith.truncf %262 : vector<8x32xf32> to vector<8x32xbf16>
    %cst_69 = arith.constant dense<0.000000e+00> : vector<8x256xf32>
    %265 = tpu.matmul %264, %3, %cst_69 {dimension_numbers = #tpu.dot_dimension_numbers<[1], [0], [0], [1], [0, 0, 1, 1], [], []>} : vector<8x32xbf16>, vector<32x256xbf16>, vector<8x256xf32> -> vector<8x256xf32>
    %266 = arith.truncf %88 : vector<8x8xf32> to vector<8x8xbf16>
    %267 = vector.extract_strided_slice %265 {offsets = [0, 0], sizes = [8, 128], strides = [1, 1]} : vector<8x256xf32> to vector<8x128xf32>
    %268 = arith.truncf %267 : vector<8x128xf32> to vector<8x128xbf16>
    %cst_70 = arith.constant dense<0.000000e+00> : vector<8x128xf32>
    %269 = tpu.matmul %266, %268, %cst_70 {dimension_numbers = #tpu.dot_dimension_numbers<[1], [0], [0], [1], [0, 0, 1, 1], [], []>} : vector<8x8xbf16>, vector<8x128xbf16>, vector<8x128xf32> -> vector<8x128xf32>
    %270 = arith.addf %263, %269 : vector<8x128xf32>
    %271 = vector.extract_strided_slice %265 {offsets = [0, 128], sizes = [8, 128], strides = [1, 1]} : vector<8x256xf32> to vector<8x128xf32>
    %272 = arith.addf %270, %271 : vector<8x128xf32>
    %273 = vector.extract_strided_slice %272 {offsets = [0, 0], sizes = [8, 96], strides = [1, 1]} : vector<8x128xf32> to vector<8x96xf32>
    %274 = arith.negf %273 : vector<8x96xf32>
    %275 = math.exp %274 : vector<8x96xf32>
    %cst_71 = arith.constant 1.000000e+00 : f32
    %276 = vector.broadcast %cst_71 : f32 to vector<8x96xf32>
    %277 = arith.addf %276, %275 : vector<8x96xf32>
    %278 = arith.divf %276, %277 : vector<8x96xf32>
    %279 = vector.extract_strided_slice %272 {offsets = [0, 96], sizes = [8, 32], strides = [1, 1]} : vector<8x128xf32> to vector<8x32xf32>
    %280 = math.tanh %279 : vector<8x32xf32>
    %281 = vector.extract_strided_slice %278 {offsets = [0, 0], sizes = [8, 32], strides = [1, 1]} : vector<8x96xf32> to vector<8x32xf32>
    %282 = vector.extract_strided_slice %278 {offsets = [0, 32], sizes = [8, 32], strides = [1, 1]} : vector<8x96xf32> to vector<8x32xf32>
    %283 = vector.extract_strided_slice %278 {offsets = [0, 64], sizes = [8, 32], strides = [1, 1]} : vector<8x96xf32> to vector<8x32xf32>
    %284 = arith.mulf %282, %260 : vector<8x32xf32>
    %285 = arith.mulf %281, %280 : vector<8x32xf32>
    %286 = arith.addf %284, %285 : vector<8x32xf32>
    %287 = math.tanh %286 : vector<8x32xf32>
    %288 = arith.mulf %283, %287 : vector<8x32xf32>
    %289 = vector.extract_strided_slice %10 {offsets = [48, 0], sizes = [8, 128], strides = [1, 1]} : vector<64x128xf32> to vector<8x128xf32>
    %290 = arith.truncf %288 : vector<8x32xf32> to vector<8x32xbf16>
    %cst_72 = arith.constant dense<0.000000e+00> : vector<8x256xf32>
    %291 = tpu.matmul %290, %3, %cst_72 {dimension_numbers = #tpu.dot_dimension_numbers<[1], [0], [0], [1], [0, 0, 1, 1], [], []>} : vector<8x32xbf16>, vector<32x256xbf16>, vector<8x256xf32> -> vector<8x256xf32>
    %292 = arith.truncf %101 : vector<8x8xf32> to vector<8x8xbf16>
    %293 = vector.extract_strided_slice %291 {offsets = [0, 0], sizes = [8, 128], strides = [1, 1]} : vector<8x256xf32> to vector<8x128xf32>
    %294 = arith.truncf %293 : vector<8x128xf32> to vector<8x128xbf16>
    %cst_73 = arith.constant dense<0.000000e+00> : vector<8x128xf32>
    %295 = tpu.matmul %292, %294, %cst_73 {dimension_numbers = #tpu.dot_dimension_numbers<[1], [0], [0], [1], [0, 0, 1, 1], [], []>} : vector<8x8xbf16>, vector<8x128xbf16>, vector<8x128xf32> -> vector<8x128xf32>
    %296 = arith.addf %289, %295 : vector<8x128xf32>
    %297 = vector.extract_strided_slice %291 {offsets = [0, 128], sizes = [8, 128], strides = [1, 1]} : vector<8x256xf32> to vector<8x128xf32>
    %298 = arith.addf %296, %297 : vector<8x128xf32>
    %299 = vector.extract_strided_slice %298 {offsets = [0, 0], sizes = [8, 96], strides = [1, 1]} : vector<8x128xf32> to vector<8x96xf32>
    %300 = arith.negf %299 : vector<8x96xf32>
    %301 = math.exp %300 : vector<8x96xf32>
    %cst_74 = arith.constant 1.000000e+00 : f32
    %302 = vector.broadcast %cst_74 : f32 to vector<8x96xf32>
    %303 = arith.addf %302, %301 : vector<8x96xf32>
    %304 = arith.divf %302, %303 : vector<8x96xf32>
    %305 = vector.extract_strided_slice %298 {offsets = [0, 96], sizes = [8, 32], strides = [1, 1]} : vector<8x128xf32> to vector<8x32xf32>
    %306 = math.tanh %305 : vector<8x32xf32>
    %307 = vector.extract_strided_slice %304 {offsets = [0, 0], sizes = [8, 32], strides = [1, 1]} : vector<8x96xf32> to vector<8x32xf32>
    %308 = vector.extract_strided_slice %304 {offsets = [0, 32], sizes = [8, 32], strides = [1, 1]} : vector<8x96xf32> to vector<8x32xf32>
    %309 = vector.extract_strided_slice %304 {offsets = [0, 64], sizes = [8, 32], strides = [1, 1]} : vector<8x96xf32> to vector<8x32xf32>
    %310 = arith.mulf %308, %286 : vector<8x32xf32>
    %311 = arith.mulf %307, %306 : vector<8x32xf32>
    %312 = arith.addf %310, %311 : vector<8x32xf32>
    %313 = math.tanh %312 : vector<8x32xf32>
    %314 = arith.mulf %309, %313 : vector<8x32xf32>
    %315 = vector.extract_strided_slice %10 {offsets = [56, 0], sizes = [8, 128], strides = [1, 1]} : vector<64x128xf32> to vector<8x128xf32>
    %316 = arith.truncf %314 : vector<8x32xf32> to vector<8x32xbf16>
    %cst_75 = arith.constant dense<0.000000e+00> : vector<8x256xf32>
    %317 = tpu.matmul %316, %3, %cst_75 {dimension_numbers = #tpu.dot_dimension_numbers<[1], [0], [0], [1], [0, 0, 1, 1], [], []>} : vector<8x32xbf16>, vector<32x256xbf16>, vector<8x256xf32> -> vector<8x256xf32>
    %318 = arith.truncf %114 : vector<8x8xf32> to vector<8x8xbf16>
    %319 = vector.extract_strided_slice %317 {offsets = [0, 0], sizes = [8, 128], strides = [1, 1]} : vector<8x256xf32> to vector<8x128xf32>
    %320 = arith.truncf %319 : vector<8x128xf32> to vector<8x128xbf16>
    %cst_76 = arith.constant dense<0.000000e+00> : vector<8x128xf32>
    %321 = tpu.matmul %318, %320, %cst_76 {dimension_numbers = #tpu.dot_dimension_numbers<[1], [0], [0], [1], [0, 0, 1, 1], [], []>} : vector<8x8xbf16>, vector<8x128xbf16>, vector<8x128xf32> -> vector<8x128xf32>
    %322 = arith.addf %315, %321 : vector<8x128xf32>
    %323 = vector.extract_strided_slice %317 {offsets = [0, 128], sizes = [8, 128], strides = [1, 1]} : vector<8x256xf32> to vector<8x128xf32>
    %324 = arith.addf %322, %323 : vector<8x128xf32>
    %325 = vector.extract_strided_slice %324 {offsets = [0, 0], sizes = [8, 96], strides = [1, 1]} : vector<8x128xf32> to vector<8x96xf32>
    %326 = arith.negf %325 : vector<8x96xf32>
    %327 = math.exp %326 : vector<8x96xf32>
    %cst_77 = arith.constant 1.000000e+00 : f32
    %328 = vector.broadcast %cst_77 : f32 to vector<8x96xf32>
    %329 = arith.addf %328, %327 : vector<8x96xf32>
    %330 = arith.divf %328, %329 : vector<8x96xf32>
    %331 = vector.extract_strided_slice %324 {offsets = [0, 96], sizes = [8, 32], strides = [1, 1]} : vector<8x128xf32> to vector<8x32xf32>
    %332 = math.tanh %331 : vector<8x32xf32>
    %333 = vector.extract_strided_slice %330 {offsets = [0, 0], sizes = [8, 32], strides = [1, 1]} : vector<8x96xf32> to vector<8x32xf32>
    %334 = vector.extract_strided_slice %330 {offsets = [0, 32], sizes = [8, 32], strides = [1, 1]} : vector<8x96xf32> to vector<8x32xf32>
    %335 = vector.extract_strided_slice %330 {offsets = [0, 64], sizes = [8, 32], strides = [1, 1]} : vector<8x96xf32> to vector<8x32xf32>
    %336 = arith.mulf %334, %312 : vector<8x32xf32>
    %337 = arith.mulf %333, %332 : vector<8x32xf32>
    %338 = arith.addf %336, %337 : vector<8x32xf32>
    %339 = math.tanh %338 : vector<8x32xf32>
    %340 = arith.mulf %335, %339 : vector<8x32xf32>
    %341 = arith.truncf %340 : vector<8x32xf32> to vector<8x32xbf16>
    %cst_78 = arith.constant dense<0.000000e+00> : vector<8x2xf32>
    %342 = tpu.matmul %341, %4, %cst_78 {dimension_numbers = #tpu.dot_dimension_numbers<[1], [0], [0], [1], [0, 0, 1, 1], [], []>} : vector<8x32xbf16>, vector<32x2xbf16>, vector<8x2xf32> -> vector<8x2xf32>
    %343 = vector.broadcast %5 : vector<1x2xf32> to vector<8x2xf32>
    %344 = arith.addf %342, %343 : vector<8x2xf32>
    %345 = arith.truncf %344 : vector<8x2xf32> to vector<8x2xbf16>
    %cst_79 = arith.constant dense<0.000000e+00> : vector<8x128xf32>
    %346 = tpu.matmul %345, %1, %cst_79 {dimension_numbers = #tpu.dot_dimension_numbers<[1], [0], [0], [1], [0, 0, 1, 1], [], []>} : vector<8x2xbf16>, vector<2x128xbf16>, vector<8x128xf32> -> vector<8x128xf32>
    %347 = vector.broadcast %2 : vector<1x128xf32> to vector<8x128xf32>
    %348 = arith.addf %346, %347 : vector<8x128xf32>
    %349 = arith.mulf %344, %344 : vector<8x2xf32>
    %cst_80 = arith.constant dense<0.000000e+00> : vector<8x8xf32>
    %350 = tpu.matmul %344, %344, %cst_80 {dimension_numbers = #tpu.dot_dimension_numbers<[1], [1], [0], [0], [0, 0, 1, 0], [], []>} : vector<8x2xf32>, vector<8x2xf32>, vector<8x8xf32> -> vector<8x8xf32>
    %cst_81 = arith.constant dense<0.000000e+00> : vector<8x8xf32>
    %351 = tpu.matmul %349, %6, %cst_81 {dimension_numbers = #tpu.dot_dimension_numbers<[1], [1], [0], [0], [0, 0, 1, 0], [], []>} : vector<8x2xf32>, vector<8x2xf32>, vector<8x8xf32> -> vector<8x8xf32>
    %cst_82 = arith.constant dense<0.000000e+00> : vector<8x8xf32>
    %352 = tpu.matmul %6, %349, %cst_82 {dimension_numbers = #tpu.dot_dimension_numbers<[1], [1], [0], [0], [0, 0, 1, 0], [], []>} : vector<8x2xf32>, vector<8x2xf32>, vector<8x8xf32> -> vector<8x8xf32>
    %353 = arith.addf %351, %352 : vector<8x8xf32>
    %cst_83 = arith.constant 2.000000e+00 : f32
    %354 = vector.broadcast %cst_83 : f32 to vector<8x8xf32>
    %355 = arith.mulf %354, %350 : vector<8x8xf32>
    %356 = arith.subf %353, %355 : vector<8x8xf32>
    %cst_84 = arith.constant 2.500000e+01 : f32
    %357 = vector.broadcast %cst_84 : f32 to vector<8x8xf32>
    %358 = arith.cmpf olt, %356, %357 : vector<8x8xf32>
    %359 = arith.extui %358 : vector<8x8xi1> to vector<8x8xi32>
    %360 = arith.sitofp %359 : vector<8x8xi32> to vector<8x8xf32>
    %361 = arith.truncf %340 : vector<8x32xf32> to vector<8x32xbf16>
    %cst_85 = arith.constant dense<0.000000e+00> : vector<8x256xf32>
    %362 = tpu.matmul %361, %3, %cst_85 {dimension_numbers = #tpu.dot_dimension_numbers<[1], [0], [0], [1], [0, 0, 1, 1], [], []>} : vector<8x32xbf16>, vector<32x256xbf16>, vector<8x256xf32> -> vector<8x256xf32>
    %363 = arith.truncf %360 : vector<8x8xf32> to vector<8x8xbf16>
    %364 = vector.extract_strided_slice %362 {offsets = [0, 0], sizes = [8, 128], strides = [1, 1]} : vector<8x256xf32> to vector<8x128xf32>
    %365 = arith.truncf %364 : vector<8x128xf32> to vector<8x128xbf16>
    %cst_86 = arith.constant dense<0.000000e+00> : vector<8x128xf32>
    %366 = tpu.matmul %363, %365, %cst_86 {dimension_numbers = #tpu.dot_dimension_numbers<[1], [0], [0], [1], [0, 0, 1, 1], [], []>} : vector<8x8xbf16>, vector<8x128xbf16>, vector<8x128xf32> -> vector<8x128xf32>
    %367 = arith.addf %348, %366 : vector<8x128xf32>
    %368 = vector.extract_strided_slice %362 {offsets = [0, 128], sizes = [8, 128], strides = [1, 1]} : vector<8x256xf32> to vector<8x128xf32>
    %369 = arith.addf %367, %368 : vector<8x128xf32>
    %370 = vector.extract_strided_slice %369 {offsets = [0, 0], sizes = [8, 96], strides = [1, 1]} : vector<8x128xf32> to vector<8x96xf32>
    %371 = arith.negf %370 : vector<8x96xf32>
    %372 = math.exp %371 : vector<8x96xf32>
    %cst_87 = arith.constant 1.000000e+00 : f32
    %373 = vector.broadcast %cst_87 : f32 to vector<8x96xf32>
    %374 = arith.addf %373, %372 : vector<8x96xf32>
    %375 = arith.divf %373, %374 : vector<8x96xf32>
    %376 = vector.extract_strided_slice %369 {offsets = [0, 96], sizes = [8, 32], strides = [1, 1]} : vector<8x128xf32> to vector<8x32xf32>
    %377 = math.tanh %376 : vector<8x32xf32>
    %378 = vector.extract_strided_slice %375 {offsets = [0, 0], sizes = [8, 32], strides = [1, 1]} : vector<8x96xf32> to vector<8x32xf32>
    %379 = vector.extract_strided_slice %375 {offsets = [0, 32], sizes = [8, 32], strides = [1, 1]} : vector<8x96xf32> to vector<8x32xf32>
    %380 = vector.extract_strided_slice %375 {offsets = [0, 64], sizes = [8, 32], strides = [1, 1]} : vector<8x96xf32> to vector<8x32xf32>
    %381 = arith.mulf %379, %338 : vector<8x32xf32>
    %382 = arith.mulf %378, %377 : vector<8x32xf32>
    %383 = arith.addf %381, %382 : vector<8x32xf32>
    %384 = math.tanh %383 : vector<8x32xf32>
    %385 = arith.mulf %380, %384 : vector<8x32xf32>
    %386 = arith.truncf %385 : vector<8x32xf32> to vector<8x32xbf16>
    %cst_88 = arith.constant dense<0.000000e+00> : vector<8x2xf32>
    %387 = tpu.matmul %386, %4, %cst_88 {dimension_numbers = #tpu.dot_dimension_numbers<[1], [0], [0], [1], [0, 0, 1, 1], [], []>} : vector<8x32xbf16>, vector<32x2xbf16>, vector<8x2xf32> -> vector<8x2xf32>
    %388 = vector.broadcast %5 : vector<1x2xf32> to vector<8x2xf32>
    %389 = arith.addf %387, %388 : vector<8x2xf32>
    %390 = arith.truncf %389 : vector<8x2xf32> to vector<8x2xbf16>
    %cst_89 = arith.constant dense<0.000000e+00> : vector<8x128xf32>
    %391 = tpu.matmul %390, %1, %cst_89 {dimension_numbers = #tpu.dot_dimension_numbers<[1], [0], [0], [1], [0, 0, 1, 1], [], []>} : vector<8x2xbf16>, vector<2x128xbf16>, vector<8x128xf32> -> vector<8x128xf32>
    %392 = vector.broadcast %2 : vector<1x128xf32> to vector<8x128xf32>
    %393 = arith.addf %391, %392 : vector<8x128xf32>
    %394 = arith.mulf %389, %389 : vector<8x2xf32>
    %cst_90 = arith.constant dense<0.000000e+00> : vector<8x8xf32>
    %395 = tpu.matmul %389, %389, %cst_90 {dimension_numbers = #tpu.dot_dimension_numbers<[1], [1], [0], [0], [0, 0, 1, 0], [], []>} : vector<8x2xf32>, vector<8x2xf32>, vector<8x8xf32> -> vector<8x8xf32>
    %cst_91 = arith.constant dense<0.000000e+00> : vector<8x8xf32>
    %396 = tpu.matmul %394, %6, %cst_91 {dimension_numbers = #tpu.dot_dimension_numbers<[1], [1], [0], [0], [0, 0, 1, 0], [], []>} : vector<8x2xf32>, vector<8x2xf32>, vector<8x8xf32> -> vector<8x8xf32>
    %cst_92 = arith.constant dense<0.000000e+00> : vector<8x8xf32>
    %397 = tpu.matmul %6, %394, %cst_92 {dimension_numbers = #tpu.dot_dimension_numbers<[1], [1], [0], [0], [0, 0, 1, 0], [], []>} : vector<8x2xf32>, vector<8x2xf32>, vector<8x8xf32> -> vector<8x8xf32>
    %398 = arith.addf %396, %397 : vector<8x8xf32>
    %cst_93 = arith.constant 2.000000e+00 : f32
    %399 = vector.broadcast %cst_93 : f32 to vector<8x8xf32>
    %400 = arith.mulf %399, %395 : vector<8x8xf32>
    %401 = arith.subf %398, %400 : vector<8x8xf32>
    %cst_94 = arith.constant 2.500000e+01 : f32
    %402 = vector.broadcast %cst_94 : f32 to vector<8x8xf32>
    %403 = arith.cmpf olt, %401, %402 : vector<8x8xf32>
    %404 = arith.extui %403 : vector<8x8xi1> to vector<8x8xi32>
    %405 = arith.sitofp %404 : vector<8x8xi32> to vector<8x8xf32>
    %406 = arith.truncf %385 : vector<8x32xf32> to vector<8x32xbf16>
    %cst_95 = arith.constant dense<0.000000e+00> : vector<8x256xf32>
    %407 = tpu.matmul %406, %3, %cst_95 {dimension_numbers = #tpu.dot_dimension_numbers<[1], [0], [0], [1], [0, 0, 1, 1], [], []>} : vector<8x32xbf16>, vector<32x256xbf16>, vector<8x256xf32> -> vector<8x256xf32>
    %408 = arith.truncf %405 : vector<8x8xf32> to vector<8x8xbf16>
    %409 = vector.extract_strided_slice %407 {offsets = [0, 0], sizes = [8, 128], strides = [1, 1]} : vector<8x256xf32> to vector<8x128xf32>
    %410 = arith.truncf %409 : vector<8x128xf32> to vector<8x128xbf16>
    %cst_96 = arith.constant dense<0.000000e+00> : vector<8x128xf32>
    %411 = tpu.matmul %408, %410, %cst_96 {dimension_numbers = #tpu.dot_dimension_numbers<[1], [0], [0], [1], [0, 0, 1, 1], [], []>} : vector<8x8xbf16>, vector<8x128xbf16>, vector<8x128xf32> -> vector<8x128xf32>
    %412 = arith.addf %393, %411 : vector<8x128xf32>
    %413 = vector.extract_strided_slice %407 {offsets = [0, 128], sizes = [8, 128], strides = [1, 1]} : vector<8x256xf32> to vector<8x128xf32>
    %414 = arith.addf %412, %413 : vector<8x128xf32>
    %415 = vector.extract_strided_slice %414 {offsets = [0, 0], sizes = [8, 96], strides = [1, 1]} : vector<8x128xf32> to vector<8x96xf32>
    %416 = arith.negf %415 : vector<8x96xf32>
    %417 = math.exp %416 : vector<8x96xf32>
    %cst_97 = arith.constant 1.000000e+00 : f32
    %418 = vector.broadcast %cst_97 : f32 to vector<8x96xf32>
    %419 = arith.addf %418, %417 : vector<8x96xf32>
    %420 = arith.divf %418, %419 : vector<8x96xf32>
    %421 = vector.extract_strided_slice %414 {offsets = [0, 96], sizes = [8, 32], strides = [1, 1]} : vector<8x128xf32> to vector<8x32xf32>
    %422 = math.tanh %421 : vector<8x32xf32>
    %423 = vector.extract_strided_slice %420 {offsets = [0, 0], sizes = [8, 32], strides = [1, 1]} : vector<8x96xf32> to vector<8x32xf32>
    %424 = vector.extract_strided_slice %420 {offsets = [0, 32], sizes = [8, 32], strides = [1, 1]} : vector<8x96xf32> to vector<8x32xf32>
    %425 = vector.extract_strided_slice %420 {offsets = [0, 64], sizes = [8, 32], strides = [1, 1]} : vector<8x96xf32> to vector<8x32xf32>
    %426 = arith.mulf %424, %383 : vector<8x32xf32>
    %427 = arith.mulf %423, %422 : vector<8x32xf32>
    %428 = arith.addf %426, %427 : vector<8x32xf32>
    %429 = math.tanh %428 : vector<8x32xf32>
    %430 = arith.mulf %425, %429 : vector<8x32xf32>
    %431 = arith.truncf %430 : vector<8x32xf32> to vector<8x32xbf16>
    %cst_98 = arith.constant dense<0.000000e+00> : vector<8x2xf32>
    %432 = tpu.matmul %431, %4, %cst_98 {dimension_numbers = #tpu.dot_dimension_numbers<[1], [0], [0], [1], [0, 0, 1, 1], [], []>} : vector<8x32xbf16>, vector<32x2xbf16>, vector<8x2xf32> -> vector<8x2xf32>
    %433 = vector.broadcast %5 : vector<1x2xf32> to vector<8x2xf32>
    %434 = arith.addf %432, %433 : vector<8x2xf32>
    %435 = arith.truncf %434 : vector<8x2xf32> to vector<8x2xbf16>
    %cst_99 = arith.constant dense<0.000000e+00> : vector<8x128xf32>
    %436 = tpu.matmul %435, %1, %cst_99 {dimension_numbers = #tpu.dot_dimension_numbers<[1], [0], [0], [1], [0, 0, 1, 1], [], []>} : vector<8x2xbf16>, vector<2x128xbf16>, vector<8x128xf32> -> vector<8x128xf32>
    %437 = vector.broadcast %2 : vector<1x128xf32> to vector<8x128xf32>
    %438 = arith.addf %436, %437 : vector<8x128xf32>
    %439 = arith.mulf %434, %434 : vector<8x2xf32>
    %cst_100 = arith.constant dense<0.000000e+00> : vector<8x8xf32>
    %440 = tpu.matmul %434, %434, %cst_100 {dimension_numbers = #tpu.dot_dimension_numbers<[1], [1], [0], [0], [0, 0, 1, 0], [], []>} : vector<8x2xf32>, vector<8x2xf32>, vector<8x8xf32> -> vector<8x8xf32>
    %cst_101 = arith.constant dense<0.000000e+00> : vector<8x8xf32>
    %441 = tpu.matmul %439, %6, %cst_101 {dimension_numbers = #tpu.dot_dimension_numbers<[1], [1], [0], [0], [0, 0, 1, 0], [], []>} : vector<8x2xf32>, vector<8x2xf32>, vector<8x8xf32> -> vector<8x8xf32>
    %cst_102 = arith.constant dense<0.000000e+00> : vector<8x8xf32>
    %442 = tpu.matmul %6, %439, %cst_102 {dimension_numbers = #tpu.dot_dimension_numbers<[1], [1], [0], [0], [0, 0, 1, 0], [], []>} : vector<8x2xf32>, vector<8x2xf32>, vector<8x8xf32> -> vector<8x8xf32>
    %443 = arith.addf %441, %442 : vector<8x8xf32>
    %cst_103 = arith.constant 2.000000e+00 : f32
    %444 = vector.broadcast %cst_103 : f32 to vector<8x8xf32>
    %445 = arith.mulf %444, %440 : vector<8x8xf32>
    %446 = arith.subf %443, %445 : vector<8x8xf32>
    %cst_104 = arith.constant 2.500000e+01 : f32
    %447 = vector.broadcast %cst_104 : f32 to vector<8x8xf32>
    %448 = arith.cmpf olt, %446, %447 : vector<8x8xf32>
    %449 = arith.extui %448 : vector<8x8xi1> to vector<8x8xi32>
    %450 = arith.sitofp %449 : vector<8x8xi32> to vector<8x8xf32>
    %451 = arith.truncf %430 : vector<8x32xf32> to vector<8x32xbf16>
    %cst_105 = arith.constant dense<0.000000e+00> : vector<8x256xf32>
    %452 = tpu.matmul %451, %3, %cst_105 {dimension_numbers = #tpu.dot_dimension_numbers<[1], [0], [0], [1], [0, 0, 1, 1], [], []>} : vector<8x32xbf16>, vector<32x256xbf16>, vector<8x256xf32> -> vector<8x256xf32>
    %453 = arith.truncf %450 : vector<8x8xf32> to vector<8x8xbf16>
    %454 = vector.extract_strided_slice %452 {offsets = [0, 0], sizes = [8, 128], strides = [1, 1]} : vector<8x256xf32> to vector<8x128xf32>
    %455 = arith.truncf %454 : vector<8x128xf32> to vector<8x128xbf16>
    %cst_106 = arith.constant dense<0.000000e+00> : vector<8x128xf32>
    %456 = tpu.matmul %453, %455, %cst_106 {dimension_numbers = #tpu.dot_dimension_numbers<[1], [0], [0], [1], [0, 0, 1, 1], [], []>} : vector<8x8xbf16>, vector<8x128xbf16>, vector<8x128xf32> -> vector<8x128xf32>
    %457 = arith.addf %438, %456 : vector<8x128xf32>
    %458 = vector.extract_strided_slice %452 {offsets = [0, 128], sizes = [8, 128], strides = [1, 1]} : vector<8x256xf32> to vector<8x128xf32>
    %459 = arith.addf %457, %458 : vector<8x128xf32>
    %460 = vector.extract_strided_slice %459 {offsets = [0, 0], sizes = [8, 96], strides = [1, 1]} : vector<8x128xf32> to vector<8x96xf32>
    %461 = arith.negf %460 : vector<8x96xf32>
    %462 = math.exp %461 : vector<8x96xf32>
    %cst_107 = arith.constant 1.000000e+00 : f32
    %463 = vector.broadcast %cst_107 : f32 to vector<8x96xf32>
    %464 = arith.addf %463, %462 : vector<8x96xf32>
    %465 = arith.divf %463, %464 : vector<8x96xf32>
    %466 = vector.extract_strided_slice %459 {offsets = [0, 96], sizes = [8, 32], strides = [1, 1]} : vector<8x128xf32> to vector<8x32xf32>
    %467 = math.tanh %466 : vector<8x32xf32>
    %468 = vector.extract_strided_slice %465 {offsets = [0, 0], sizes = [8, 32], strides = [1, 1]} : vector<8x96xf32> to vector<8x32xf32>
    %469 = vector.extract_strided_slice %465 {offsets = [0, 32], sizes = [8, 32], strides = [1, 1]} : vector<8x96xf32> to vector<8x32xf32>
    %470 = vector.extract_strided_slice %465 {offsets = [0, 64], sizes = [8, 32], strides = [1, 1]} : vector<8x96xf32> to vector<8x32xf32>
    %471 = arith.mulf %469, %428 : vector<8x32xf32>
    %472 = arith.mulf %468, %467 : vector<8x32xf32>
    %473 = arith.addf %471, %472 : vector<8x32xf32>
    %474 = math.tanh %473 : vector<8x32xf32>
    %475 = arith.mulf %470, %474 : vector<8x32xf32>
    %476 = arith.truncf %475 : vector<8x32xf32> to vector<8x32xbf16>
    %cst_108 = arith.constant dense<0.000000e+00> : vector<8x2xf32>
    %477 = tpu.matmul %476, %4, %cst_108 {dimension_numbers = #tpu.dot_dimension_numbers<[1], [0], [0], [1], [0, 0, 1, 1], [], []>} : vector<8x32xbf16>, vector<32x2xbf16>, vector<8x2xf32> -> vector<8x2xf32>
    %478 = vector.broadcast %5 : vector<1x2xf32> to vector<8x2xf32>
    %479 = arith.addf %477, %478 : vector<8x2xf32>
    %480 = tpu.concatenate %344, %389, %434, %479 in 0 : vector<8x2xf32>, vector<8x2xf32>, vector<8x2xf32>, vector<8x2xf32> -> vector<32x2xf32>
    %c0_109 = arith.constant 0 : index
    %c0_110 = arith.constant 0 : index
    %481 = vector.load %arg6[%c0_109, %c0_110] : memref<32x2xf32, #tpu.memory_space<vmem>>, vector<32x2xf32>
    tpu.vector_store %arg6[%c0_109, %c0_110], %480 {strides = array<i32>} : memref<32x2xf32, #tpu.memory_space<vmem>>, vector<32x2xf32>,
    return
  }
}

</mosaic_0001>

<llo_original>
// kernel: tpu_custom_call.1
$region0: #{tpu_custom_call.1}
  #allocation0 [shape = 'u32[]', space=smem, size = 0x4, offset = 0x4, fixed_abs, tag = 'smem constant byte address 0x4 - core index']
  #allocation1 [shape = 'u32[144,128]{1,0:T(1,128)}', space=vmem, size = 0x12000, scoped, tag = 'internal scratch']
  %s0 = inlined_call_operand.vmem [shape: f32[64,2], index: 0, kind: input, shape index: {}]
  %s1 = inlined_call_operand.vmem [shape: bf16[2,128], index: 1, kind: input, shape index: {}]
  %s2 = inlined_call_operand.vmem [shape: f32[1,128], index: 2, kind: input, shape index: {}]
  %s3 = inlined_call_operand.vmem [shape: bf16[32,256], index: 3, kind: input, shape index: {}]
  %s4 = inlined_call_operand.vmem [shape: bf16[32,2], index: 4, kind: input, shape index: {}]
  %s5 = inlined_call_operand.vmem [shape: f32[1,2], index: 5, kind: input, shape index: {}]
  %s6 = inlined_call_operand.vmem [shape: f32[32,2], index: 6, kind: output, shape index: {}]
  %s7 = sld [smem:[#allocation0]]
  $region34: #{tpu_custom_call.1} parent=0
    _
  %s9 = ssub.s32 1, %s7
  %s10 = scalar_select 0, %s9, %s7
  // Predicated region
  $region2: #{tpu_custom_call.1} parent=0 // pred_check
    _
  $region3: #{tpu_custom_call.1} parent=0 // pred_check_branch
    %12 = sbr.rel (0) target = $region5
  $region4: #{tpu_custom_call.1} parent=0 // pred_region
    _
  $region5: #{tpu_custom_call.1} parent=0 // pred_fallthru
    _
  // Predicated region
  $region6: #{tpu_custom_call.1} parent=0 // pred_check
    _
  $region7: #{tpu_custom_call.1} parent=0 // pred_check_branch
    %14 = sbr.rel (0) target = $region9
  $region8: #{tpu_custom_call.1} parent=0 // pred_region
    _
  $region9: #{tpu_custom_call.1} parent=0 // pred_fallthru
    _
  // Predicated region
  $region10: #{tpu_custom_call.1} parent=0 // pred_check
    _
  $region11: #{tpu_custom_call.1} parent=0 // pred_check_branch
    %16 = sbr.rel (0) target = $region13
  $region12: #{tpu_custom_call.1} parent=0 // pred_region
    _
  $region13: #{tpu_custom_call.1} parent=0 // pred_fallthru
    _
  // Predicated region
  $region14: #{tpu_custom_call.1} parent=0 // pred_check
    _
  $region15: #{tpu_custom_call.1} parent=0 // pred_check_branch
    %18 = sbr.rel (0) target = $region17
  $region16: #{tpu_custom_call.1} parent=0 // pred_region
    _
  $region17: #{tpu_custom_call.1} parent=0 // pred_fallthru
    _
  // Predicated region
  $region18: #{tpu_custom_call.1} parent=0 // pred_check
    _
  $region19: #{tpu_custom_call.1} parent=0 // pred_check_branch
    %20 = sbr.rel (0) target = $region21
  $region20: #{tpu_custom_call.1} parent=0 // pred_region
    _
  $region21: #{tpu_custom_call.1} parent=0 // pred_fallthru
    _
  // Predicated region
  $region22: #{tpu_custom_call.1} parent=0 // pred_check
    _
  $region23: #{tpu_custom_call.1} parent=0 // pred_check_branch
    %22 = sbr.rel (0) target = $region25
  $region24: #{tpu_custom_call.1} parent=0 // pred_region
    _
  $region25: #{tpu_custom_call.1} parent=0 // pred_fallthru
    _
  %v24 = vld [vmem:[%s0] sm:$0xff]
  %v25 = vld [vmem:[%s0 + $0x8] sm:$0xff]
  %v26 = vld [vmem:[%s0 + $0x10] sm:$0xff]
  %v27 = vld [vmem:[%s0 + $0x18] sm:$0xff]
  %v28 = vld [vmem:[%s0 + $0x20] sm:$0xff]
  %v29 = vld [vmem:[%s0 + $0x28] sm:$0xff]
  %v30 = vld [vmem:[%s0 + $0x30] sm:$0xff]
  %v31 = vld [vmem:[%s0 + $0x38] sm:$0xff]
  %v32 = vld [vmem:[%s1] sm:$0x1]
  %v33 = vld [vmem:[%s2] sm:$0x1]
  %v34 = vld [vmem:[%s3] sm:$0xff]
  %v35 = vld [vmem:[%s3 + $0x8] sm:$0xff]
  %v36 = vld [vmem:[%s3 + $0x10] sm:$0xff]
  %v37 = vld [vmem:[%s3 + $0x18] sm:$0xff]
  %v38 = vld [vmem:[%s4] sm:$0xf]
  %v39 = vld [vmem:[%s4 + $0x4] sm:$0xf]
  %v40 = vld [vmem:[%s4 + $0x8] sm:$0xf]
  %v41 = vld [vmem:[%s4 + $0xc] sm:$0xf]
  %v42 = vld [vmem:[%s5] sm:$0x1]
  %v43 = vpack.c.bf16 %v25, %v24
  %v44 = vpack.c.bf16 %v27, %v26
  %v45 = vpack.c.bf16 %v29, %v28
  %v46 = vpack.c.bf16 %v31, %v30
  %v48 = vlaneseq
  %v49 = vshrl.u32 %v48, 7
  %v50 = vsub.s32 0, %v49
  %v51 = vrot.slane %v33, %v50
  %vm53 = vcmask 15360
  %v55 = vsel %vm53, %v43, 0
  %v58 = vsel %vm53, %v44, 0
  %v61 = vsel %vm53, %v45, 0
  %v64 = vsel %vm53, %v46, 0
  %vm66 = vcmask 1040384
  %v68 = vsel %vm66, %v32, 0
  %70 = vmatprep.subr.bf16.mxu0 0
  %71 = vmatpush1.bf16.msra.mxu0 0
  %72 = vmatprep.subr.bf16.mxu0 0
  %73 = vmatpush1.bf16.msra.mxu0 0
  %74 = vmatprep.subr.bf16.mxu0 0
  %75 = vmatpush1.bf16.msra.mxu0 0
  %76 = vmatprep.subr.bf16.mxu0 0
  %77 = vmatpush1.bf16.msra.mxu0 0
  %78 = vmatprep.subr.bf16.mxu0 0
  %79 = vmatpush1.bf16.msra.mxu0 0
  %80 = vmatprep.subr.bf16.mxu0 0
  %81 = vmatpush1.bf16.msra.mxu0 0
  %82 = vmatprep.subr.bf16.mxu0 0
  %83 = vmatpush1.bf16.msra.mxu0 0
  %84 = vmatprep.subr.bf16.mxu0 0
  %85 = vmatpush1.bf16.msra.mxu0 %v68
  %86 = vmatprep.subr.bf16.mxu0 0
  %87 = vmatpush2.bf16.msra.mxu0 0
  %88 = vmatprep.subr.bf16.mxu0 0
  %89 = vmatpush2.bf16.msra.mxu0 0
  %90 = vmatprep.subr.bf16.mxu0 0
  %91 = vmatpush2.bf16.msra.mxu0 0
  %92 = vmatprep.subr.bf16.mxu0 0
  %93 = vmatpush2.bf16.msra.mxu0 0
  %94 = vmatprep.subr.bf16.mxu0 0
  %95 = vmatpush2.bf16.msra.mxu0 0
  %96 = vmatprep.subr.bf16.mxu0 0
  %97 = vmatpush2.bf16.msra.mxu0 0
  %98 = vmatprep.subr.bf16.mxu0 0
  %99 = vmatpush2.bf16.msra.mxu0 0
  %100 = vmatprep.subr.bf16.mxu0 0
  %101 = vmatpush2.bf16.msra.mxu0 0
  %102 = vmatprep.mubr.bf16.mxu0 0
  %103 = vmatmul.mubr.bf16.gmra.mxu0 %v55
  %v104 = vpop.f32.mrf.mxu0
  %v105 = vadd.f32 %v51, %v104
  %v106 = vpop.f32.mrf.mxu0
  %v107 = vpop.f32.mrf.mxu0
  %v108 = vadd.f32 %v51, %v107
  %v109 = vpop.f32.mrf.mxu0
  %110 = vmatprep.mubr.bf16.mxu0 0
  %111 = vmatmul.mubr.bf16.gmra.mxu0 %v58
  %v112 = vpop.f32.mrf.mxu0
  %v113 = vadd.f32 %v51, %v112
  %v114 = vpop.f32.mrf.mxu0
  %v115 = vpop.f32.mrf.mxu0
  %v116 = vadd.f32 %v51, %v115
  %v117 = vpop.f32.mrf.mxu0
  %118 = vmatprep.mubr.bf16.mxu0 0
  %119 = vmatmul.mubr.bf16.gmra.mxu0 %v61
  %v120 = vpop.f32.mrf.mxu0
  %v121 = vadd.f32 %v51, %v120
  %v122 = vpop.f32.mrf.mxu0
  %v123 = vpop.f32.mrf.mxu0
  %v124 = vadd.f32 %v51, %v123
  %v125 = vpop.f32.mrf.mxu0
  %126 = vmatprep.mubr.bf16.mxu0 0
  %127 = vmatmul.mubr.bf16.gmra.mxu0 %v64
  %v128 = vpop.f32.mrf.mxu0
  %v129 = vadd.f32 %v51, %v128
  %v130 = vpop.f32.mrf.mxu0
  %v131 = vpop.f32.mrf.mxu0
  %v132 = vadd.f32 %v51, %v131
  %v133 = vpop.f32.mrf.mxu0
  %134 = vdwg.mxu0
  %v135 = vmul.f32 %v24, %v24
  %v137 = vsel %vm53, %v24, 0
  %139 = vmatprep.subr.mxu0 0.0
  %140 = vmatpush1.xpose.msra.mxu0 0.0
  %141 = vmatprep.subr.mxu0 0.0
  %142 = vmatpush1.xpose.msra.mxu0 0.0
  %143 = vmatprep.subr.mxu0 0.0
  %144 = vmatpush1.xpose.msra.mxu0 0.0
  %145 = vmatprep.subr.mxu0 0.0
  %146 = vmatpush1.xpose.msra.mxu0 0.0
  %147 = vmatprep.subr.mxu0 0.0
  %148 = vmatpush1.xpose.msra.mxu0 0.0
  %149 = vmatprep.subr.mxu0 0.0
  %150 = vmatpush1.xpose.msra.mxu0 0.0
  %151 = vmatprep.subr.mxu0 0.0
  %152 = vmatpush1.xpose.msra.mxu0 0.0
  %153 = vmatprep.subr.mxu0 0.0
  %154 = vmatpush1.xpose.msra.mxu0 0.0
  %155 = vmatprep.subr.mxu0 0.0
  %156 = vmatpush1.xpose.msra.mxu0 0.0
  %157 = vmatprep.subr.mxu0 0.0
  %158 = vmatpush1.xpose.msra.mxu0 0.0
  %159 = vmatprep.subr.mxu0 0.0
  %160 = vmatpush1.xpose.msra.mxu0 0.0
  %161 = vmatprep.subr.mxu0 0.0
  %162 = vmatpush1.xpose.msra.mxu0 0.0
  %163 = vmatprep.subr.mxu0 0.0
  %164 = vmatpush1.xpose.msra.mxu0 0.0
  %165 = vmatprep.subr.mxu0 0.0
  %166 = vmatpush1.xpose.msra.mxu0 0.0
  %167 = vmatprep.subr.mxu0 0.0
  %168 = vmatpush1.xpose.msra.mxu0 0.0
  %169 = vmatprep.subr.mxu0 0.0
  %170 = vmatpush1.xpose.msra.mxu0 %v137
  %171 = vmatprep.subr.mxu0 0.0
  %172 = vmatpush2.xpose.msra.mxu0 0.0
  %173 = vmatprep.subr.mxu0 0.0
  %174 = vmatpush2.xpose.msra.mxu0 0.0
  %175 = vmatprep.subr.mxu0 0.0
  %176 = vmatpush2.xpose.msra.mxu0 0.0
  %177 = vmatprep.subr.mxu0 0.0
  %178 = vmatpush2.xpose.msra.mxu0 0.0
  %179 = vmatprep.subr.mxu0 0.0
  %180 = vmatpush2.xpose.msra.mxu0 0.0
  %181 = vmatprep.subr.mxu0 0.0
  %182 = vmatpush2.xpose.msra.mxu0 0.0
  %183 = vmatprep.subr.mxu0 0.0
  %184 = vmatpush2.xpose.msra.mxu0 0.0
  %185 = vmatprep.subr.mxu0 0.0
  %186 = vmatpush2.xpose.msra.mxu0 0.0
  %187 = vmatprep.subr.mxu0 0.0
  %188 = vmatpush2.xpose.msra.mxu0 0.0
  %189 = vmatprep.subr.mxu0 0.0
  %190 = vmatpush2.xpose.msra.mxu0 0.0
  %191 = vmatprep.subr.mxu0 0.0
  %192 = vmatpush2.xpose.msra.mxu0 0.0
  %193 = vmatprep.subr.mxu0 0.0
  %194 = vmatpush2.xpose.msra.mxu0 0.0
  %195 = vmatprep.subr.mxu0 0.0
  %196 = vmatpush2.xpose.msra.mxu0 0.0
  %197 = vmatprep.subr.mxu0 0.0
  %198 = vmatpush2.xpose.msra.mxu0 0.0
  %199 = vmatprep.subr.mxu0 0.0
  %200 = vmatpush2.xpose.msra.mxu0 0.0
  %201 = vmatprep.subr.mxu0 0.0
  %202 = vmatpush2.xpose.msra.mxu0 0.0
  %203 = vmatprep.mubr.f32.mxu0 0.0
  %204 = vmatmul.mubr.f32.gmra.mxu0 %v137
  %v205 = vpop.f32.mrf.mxu0
  %v206 = vadd.f32 0.0, %v205
  %v207 = vpop.f32.mrf.mxu0
  %208 = vdwg.mxu0
  %v210 = vsel %vm53, 1.0, 0
  %v213 = vsel %vm53, %v135, 0
  %215 = vmatprep.subr.mxu0 0.0
  %216 = vmatpush1.xpose.msra.mxu0 0.0
  %217 = vmatprep.subr.mxu0 0.0
  %218 = vmatpush1.xpose.msra.mxu0 0.0
  %219 = vmatprep.subr.mxu0 0.0
  %220 = vmatpush1.xpose.msra.mxu0 0.0
  %221 = vmatprep.subr.mxu0 0.0
  %222 = vmatpush1.xpose.msra.mxu0 0.0
  %223 = vmatprep.subr.mxu0 0.0
  %224 = vmatpush1.xpose.msra.mxu0 0.0
  %225 = vmatprep.subr.mxu0 0.0
  %226 = vmatpush1.xpose.msra.mxu0 0.0
  %227 = vmatprep.subr.mxu0 0.0
  %228 = vmatpush1.xpose.msra.mxu0 0.0
  %229 = vmatprep.subr.mxu0 0.0
  %230 = vmatpush1.xpose.msra.mxu0 0.0
  %231 = vmatprep.subr.mxu0 0.0
  %232 = vmatpush1.xpose.msra.mxu0 0.0
  %233 = vmatprep.subr.mxu0 0.0
  %234 = vmatpush1.xpose.msra.mxu0 0.0
  %235 = vmatprep.subr.mxu0 0.0
  %236 = vmatpush1.xpose.msra.mxu0 0.0
  %237 = vmatprep.subr.mxu0 0.0
  %238 = vmatpush1.xpose.msra.mxu0 0.0
  %239 = vmatprep.subr.mxu0 0.0
  %240 = vmatpush1.xpose.msra.mxu0 0.0
  %241 = vmatprep.subr.mxu0 0.0
  %242 = vmatpush1.xpose.msra.mxu0 0.0
  %243 = vmatprep.subr.mxu0 0.0
  %244 = vmatpush1.xpose.msra.mxu0 0.0
  %245 = vmatprep.subr.mxu0 0.0
  %246 = vmatpush1.xpose.msra.mxu0 %v213
  %247 = vmatprep.subr.mxu0 0.0
  %248 = vmatpush2.xpose.msra.mxu0 0.0
  %249 = vmatprep.subr.mxu0 0.0
  %250 = vmatpush2.xpose.msra.mxu0 0.0
  %251 = vmatprep.subr.mxu0 0.0
  %252 = vmatpush2.xpose.msra.mxu0 0.0
  %253 = vmatprep.subr.mxu0 0.0
  %254 = vmatpush2.xpose.msra.mxu0 0.0
  %255 = vmatprep.subr.mxu0 0.0
  %256 = vmatpush2.xpose.msra.mxu0 0.0
  %257 = vmatprep.subr.mxu0 0.0
  %258 = vmatpush2.xpose.msra.mxu0 0.0
  %259 = vmatprep.subr.mxu0 0.0
  %260 = vmatpush2.xpose.msra.mxu0 0.0
  %261 = vmatprep.subr.mxu0 0.0
  %262 = vmatpush2.xpose.msra.mxu0 0.0
  %263 = vmatprep.subr.mxu0 0.0
  %264 = vmatpush2.xpose.msra.mxu0 0.0
  %265 = vmatprep.subr.mxu0 0.0
  %266 = vmatpush2.xpose.msra.mxu0 0.0
  %267 = vmatprep.subr.mxu0 0.0
  %268 = vmatpush2.xpose.msra.mxu0 0.0
  %269 = vmatprep.subr.mxu0 0.0
  %270 = vmatpush2.xpose.msra.mxu0 0.0
  %271 = vmatprep.subr.mxu0 0.0
  %272 = vmatpush2.xpose.msra.mxu0 0.0
  %273 = vmatprep.subr.mxu0 0.0
  %274 = vmatpush2.xpose.msra.mxu0 0.0
  %275 = vmatprep.subr.mxu0 0.0
  %276 = vmatpush2.xpose.msra.mxu0 0.0
  %277 = vmatprep.subr.mxu0 0.0
  %278 = vmatpush2.xpose.msra.mxu0 0.0
  %279 = vmatprep.mubr.f32.mxu0 0.0
  %280 = vmatmul.mubr.f32.gmra.mxu0 %v210
  %v281 = vpop.f32.mrf.mxu0
  %v282 = vadd.f32 0.0, %v281
  %v283 = vpop.f32.mrf.mxu0
  %284 = vdwg.mxu0
  %285 = vmatprep.subr.mxu0 0.0
  %286 = vmatpush1.xpose.msra.mxu0 0.0
  %287 = vmatprep.subr.mxu0 0.0
  %288 = vmatpush1.xpose.msra.mxu0 0.0
  %289 = vmatprep.subr.mxu0 0.0
  %290 = vmatpush1.xpose.msra.mxu0 0.0
  %291 = vmatprep.subr.mxu0 0.0
  %292 = vmatpush1.xpose.msra.mxu0 0.0
  %293 = vmatprep.subr.mxu0 0.0
  %294 = vmatpush1.xpose.msra.mxu0 0.0
  %295 = vmatprep.subr.mxu0 0.0
  %296 = vmatpush1.xpose.msra.mxu0 0.0
  %297 = vmatprep.subr.mxu0 0.0
  %298 = vmatpush1.xpose.msra.mxu0 0.0
  %299 = vmatprep.subr.mxu0 0.0
  %300 = vmatpush1.xpose.msra.mxu0 0.0
  %301 = vmatprep.subr.mxu0 0.0
  %302 = vmatpush1.xpose.msra.mxu0 0.0
  %303 = vmatprep.subr.mxu0 0.0
  %304 = vmatpush1.xpose.msra.mxu0 0.0
  %305 = vmatprep.subr.mxu0 0.0
  %306 = vmatpush1.xpose.msra.mxu0 0.0
  %307 = vmatprep.subr.mxu0 0.0
  %308 = vmatpush1.xpose.msra.mxu0 0.0
  %309 = vmatprep.subr.mxu0 0.0
  %310 = vmatpush1.xpose.msra.mxu0 0.0
  %311 = vmatprep.subr.mxu0 0.0
  %312 = vmatpush1.xpose.msra.mxu0 0.0
  %313 = vmatprep.subr.mxu0 0.0
  %314 = vmatpush1.xpose.msra.mxu0 0.0
  %315 = vmatprep.subr.mxu0 0.0
  %316 = vmatpush1.xpose.msra.mxu0 %v210
  %317 = vmatprep.subr.mxu0 0.0
  %318 = vmatpush2.xpose.msra.mxu0 0.0
  %319 = vmatprep.subr.mxu0 0.0
  %320 = vmatpush2.xpose.msra.mxu0 0.0
  %321 = vmatprep.subr.mxu0 0.0
  %322 = vmatpush2.xpose.msra.mxu0 0.0
  %323 = vmatprep.subr.mxu0 0.0
  %324 = vmatpush2.xpose.msra.mxu0 0.0
  %325 = vmatprep.subr.mxu0 0.0
  %326 = vmatpush2.xpose.msra.mxu0 0.0
  %327 = vmatprep.subr.mxu0 0.0
  %328 = vmatpush2.xpose.msra.mxu0 0.0
  %329 = vmatprep.subr.mxu0 0.0
  %330 = vmatpush2.xpose.msra.mxu0 0.0
  %331 = vmatprep.subr.mxu0 0.0
  %332 = vmatpush2.xpose.msra.mxu0 0.0
  %333 = vmatprep.subr.mxu0 0.0
  %334 = vmatpush2.xpose.msra.mxu0 0.0
  %335 = vmatprep.subr.mxu0 0.0
  %336 = vmatpush2.xpose.msra.mxu0 0.0
  %337 = vmatprep.subr.mxu0 0.0
  %338 = vmatpush2.xpose.msra.mxu0 0.0
  %339 = vmatprep.subr.mxu0 0.0
  %340 = vmatpush2.xpose.msra.mxu0 0.0
  %341 = vmatprep.subr.mxu0 0.0
  %342 = vmatpush2.xpose.msra.mxu0 0.0
  %343 = vmatprep.subr.mxu0 0.0
  %344 = vmatpush2.xpose.msra.mxu0 0.0
  %345 = vmatprep.subr.mxu0 0.0
  %346 = vmatpush2.xpose.msra.mxu0 0.0
  %347 = vmatprep.subr.mxu0 0.0
  %348 = vmatpush2.xpose.msra.mxu0 0.0
  %349 = vmatprep.mubr.f32.mxu0 0.0
  %350 = vmatmul.mubr.f32.gmra.mxu0 %v213
  %v351 = vpop.f32.mrf.mxu0
  %v352 = vadd.f32 %v282, %v351
  %v353 = vpop.f32.mrf.mxu0
  %354 = vdwg.mxu0
  %v355 = vmul.f32 %v206, 2.0
  %v356 = vsub.f32 %v352, %v355
  %vm357 = vcmp.lt.f32.partialorder %v356, 25.0
  %v358 = vmul.f32 %v25, %v25
  %v360 = vsel %vm53, %v25, 0
  %362 = vmatprep.subr.mxu0 0.0
  %363 = vmatpush1.xpose.msra.mxu0 0.0
  %364 = vmatprep.subr.mxu0 0.0
  %365 = vmatpush1.xpose.msra.mxu0 0.0
  %366 = vmatprep.subr.mxu0 0.0
  %367 = vmatpush1.xpose.msra.mxu0 0.0
  %368 = vmatprep.subr.mxu0 0.0
  %369 = vmatpush1.xpose.msra.mxu0 0.0
  %370 = vmatprep.subr.mxu0 0.0
  %371 = vmatpush1.xpose.msra.mxu0 0.0
  %372 = vmatprep.subr.mxu0 0.0
  %373 = vmatpush1.xpose.msra.mxu0 0.0
  %374 = vmatprep.subr.mxu0 0.0
  %375 = vmatpush1.xpose.msra.mxu0 0.0
  %376 = vmatprep.subr.mxu0 0.0
  %377 = vmatpush1.xpose.msra.mxu0 0.0
  %378 = vmatprep.subr.mxu0 0.0
  %379 = vmatpush1.xpose.msra.mxu0 0.0
  %380 = vmatprep.subr.mxu0 0.0
  %381 = vmatpush1.xpose.msra.mxu0 0.0
  %382 = vmatprep.subr.mxu0 0.0
  %383 = vmatpush1.xpose.msra.mxu0 0.0
  %384 = vmatprep.subr.mxu0 0.0
  %385 = vmatpush1.xpose.msra.mxu0 0.0
  %386 = vmatprep.subr.mxu0 0.0
  %387 = vmatpush1.xpose.msra.mxu0 0.0
  %388 = vmatprep.subr.mxu0 0.0
  %389 = vmatpush1.xpose.msra.mxu0 0.0
  %390 = vmatprep.subr.mxu0 0.0
  %391 = vmatpush1.xpose.msra.mxu0 0.0
  %392 = vmatprep.subr.mxu0 0.0
  %393 = vmatpush1.xpose.msra.mxu0 %v360
  %394 = vmatprep.subr.mxu0 0.0
  %395 = vmatpush2.xpose.msra.mxu0 0.0
  %396 = vmatprep.subr.mxu0 0.0
  %397 = vmatpush2.xpose.msra.mxu0 0.0
  %398 = vmatprep.subr.mxu0 0.0
  %399 = vmatpush2.xpose.msra.mxu0 0.0
  %400 = vmatprep.subr.mxu0 0.0
  %401 = vmatpush2.xpose.msra.mxu0 0.0
  %402 = vmatprep.subr.mxu0 0.0
  %403 = vmatpush2.xpose.msra.mxu0 0.0
  %404 = vmatprep.subr.mxu0 0.0
  %405 = vmatpush2.xpose.msra.mxu0 0.0
  %406 = vmatprep.subr.mxu0 0.0
  %407 = vmatpush2.xpose.msra.mxu0 0.0
  %408 = vmatprep.subr.mxu0 0.0
  %409 = vmatpush2.xpose.msra.mxu0 0.0
  %410 = vmatprep.subr.mxu0 0.0
  %411 = vmatpush2.xpose.msra.mxu0 0.0
  %412 = vmatprep.subr.mxu0 0.0
  %413 = vmatpush2.xpose.msra.mxu0 0.0
  %414 = vmatprep.subr.mxu0 0.0
  %415 = vmatpush2.xpose.msra.mxu0 0.0
  %416 = vmatprep.subr.mxu0 0.0
  %417 = vmatpush2.xpose.msra.mxu0 0.0
  %418 = vmatprep.subr.mxu0 0.0
  %419 = vmatpush2.xpose.msra.mxu0 0.0
  %420 = vmatprep.subr.mxu0 0.0
  %421 = vmatpush2.xpose.msra.mxu0 0.0
  %422 = vmatprep.subr.mxu0 0.0
  %423 = vmatpush2.xpose.msra.mxu0 0.0
  %424 = vmatprep.subr.mxu0 0.0
  %425 = vmatpush2.xpose.msra.mxu0 0.0
  %426 = vmatprep.mubr.f32.mxu0 0.0
  %427 = vmatmul.mubr.f32.gmra.mxu0 %v360
  %v428 = vpop.f32.mrf.mxu0
  %v429 = vadd.f32 0.0, %v428
  %v430 = vpop.f32.mrf.mxu0
  %431 = vdwg.mxu0
  %v433 = vsel %vm53, %v358, 0
  %435 = vmatprep.subr.mxu0 0.0
  %436 = vmatpush1.xpose.msra.mxu0 0.0
  %437 = vmatprep.subr.mxu0 0.0
  %438 = vmatpush1.xpose.msra.mxu0 0.0
  %439 = vmatprep.subr.mxu0 0.0
  %440 = vmatpush1.xpose.msra.mxu0 0.0
  %441 = vmatprep.subr.mxu0 0.0
  %442 = vmatpush1.xpose.msra.mxu0 0.0
  %443 = vmatprep.subr.mxu0 0.0
  %444 = vmatpush1.xpose.msra.mxu0 0.0
  %445 = vmatprep.subr.mxu0 0.0
  %446 = vmatpush1.xpose.msra.mxu0 0.0
  %447 = vmatprep.subr.mxu0 0.0
  %448 = vmatpush1.xpose.msra.mxu0 0.0
  %449 = vmatprep.subr.mxu0 0.0
  %450 = vmatpush1.xpose.msra.mxu0 0.0
  %451 = vmatprep.subr.mxu0 0.0
  %452 = vmatpush1.xpose.msra.mxu0 0.0
  %453 = vmatprep.subr.mxu0 0.0
  %454 = vmatpush1.xpose.msra.mxu0 0.0
  %455 = vmatprep.subr.mxu0 0.0
  %456 = vmatpush1.xpose.msra.mxu0 0.0
  %457 = vmatprep.subr.mxu0 0.0
  %458 = vmatpush1.xpose.msra.mxu0 0.0
  %459 = vmatprep.subr.mxu0 0.0
  %460 = vmatpush1.xpose.msra.mxu0 0.0
  %461 = vmatprep.subr.mxu0 0.0
  %462 = vmatpush1.xpose.msra.mxu0 0.0
  %463 = vmatprep.subr.mxu0 0.0
  %464 = vmatpush1.xpose.msra.mxu0 0.0
  %465 = vmatprep.subr.mxu0 0.0
  %466 = vmatpush1.xpose.msra.mxu0 %v433
  %467 = vmatprep.subr.mxu0 0.0
  %468 = vmatpush2.xpose.msra.mxu0 0.0
  %469 = vmatprep.subr.mxu0 0.0
  %470 = vmatpush2.xpose.msra.mxu0 0.0
  %471 = vmatprep.subr.mxu0 0.0
  %472 = vmatpush2.xpose.msra.mxu0 0.0
  %473 = vmatprep.subr.mxu0 0.0
  %474 = vmatpush2.xpose.msra.mxu0 0.0
  %475 = vmatprep.subr.mxu0 0.0
  %476 = vmatpush2.xpose.msra.mxu0 0.0
  %477 = vmatprep.subr.mxu0 0.0
  %478 = vmatpush2.xpose.msra.mxu0 0.0
  %479 = vmatprep.subr.mxu0 0.0
  %480 = vmatpush2.xpose.msra.mxu0 0.0
  %481 = vmatprep.subr.mxu0 0.0
  %482 = vmatpush2.xpose.msra.mxu0 0.0
  %483 = vmatprep.subr.mxu0 0.0
  %484 = vmatpush2.xpose.msra.mxu0 0.0
  %485 = vmatprep.subr.mxu0 0.0
  %486 = vmatpush2.xpose.msra.mxu0 0.0
  %487 = vmatprep.subr.mxu0 0.0
  %488 = vmatpush2.xpose.msra.mxu0 0.0
  %489 = vmatprep.subr.mxu0 0.0
  %490 = vmatpush2.xpose.msra.mxu0 0.0
  %491 = vmatprep.subr.mxu0 0.0
  %492 = vmatpush2.xpose.msra.mxu0 0.0
  %493 = vmatprep.subr.mxu0 0.0
  %494 = vmatpush2.xpose.msra.mxu0 0.0
  %495 = vmatprep.subr.mxu0 0.0
  %496 = vmatpush2.xpose.msra.mxu0 0.0
  %497 = vmatprep.subr.mxu0 0.0
  %498 = vmatpush2.xpose.msra.mxu0 0.0
  %499 = vmatprep.mubr.f32.mxu0 0.0
  %500 = vmatmul.mubr.f32.gmra.mxu0 %v210
  %v501 = vpop.f32.mrf.mxu0
  %v502 = vadd.f32 0.0, %v501
  %v503 = vpop.f32.mrf.mxu0
  %504 = vdwg.mxu0
  %505 = vmatprep.subr.mxu0 0.0
  %506 = vmatpush1.xpose.msra.mxu0 0.0
  %507 = vmatprep.subr.mxu0 0.0
  %508 = vmatpush1.xpose.msra.mxu0 0.0
  %509 = vmatprep.subr.mxu0 0.0
  %510 = vmatpush1.xpose.msra.mxu0 0.0
  %511 = vmatprep.subr.mxu0 0.0
  %512 = vmatpush1.xpose.msra.mxu0 0.0
  %513 = vmatprep.subr.mxu0 0.0
  %514 = vmatpush1.xpose.msra.mxu0 0.0
  %515 = vmatprep.subr.mxu0 0.0
  %516 = vmatpush1.xpose.msra.mxu0 0.0
  %517 = vmatprep.subr.mxu0 0.0
  %518 = vmatpush1.xpose.msra.mxu0 0.0
  %519 = vmatprep.subr.mxu0 0.0
  %520 = vmatpush1.xpose.msra.mxu0 0.0
  %521 = vmatprep.subr.mxu0 0.0
  %522 = vmatpush1.xpose.msra.mxu0 0.0
  %523 = vmatprep.subr.mxu0 0.0
  %524 = vmatpush1.xpose.msra.mxu0 0.0
  %525 = vmatprep.subr.mxu0 0.0
  %526 = vmatpush1.xpose.msra.mxu0 0.0
  %527 = vmatprep.subr.mxu0 0.0
  %528 = vmatpush1.xpose.msra.mxu0 0.0
  %529 = vmatprep.subr.mxu0 0.0
  %530 = vmatpush1.xpose.msra.mxu0 0.0
  %531 = vmatprep.subr.mxu0 0.0
  %532 = vmatpush1.xpose.msra.mxu0 0.0
  %533 = vmatprep.subr.mxu0 0.0
  %534 = vmatpush1.xpose.msra.mxu0 0.0
  %535 = vmatprep.subr.mxu0 0.0
  %536 = vmatpush1.xpose.msra.mxu0 %v210
  %537 = vmatprep.subr.mxu0 0.0
  %538 = vmatpush2.xpose.msra.mxu0 0.0
  %539 = vmatprep.subr.mxu0 0.0
  %540 = vmatpush2.xpose.msra.mxu0 0.0
  %541 = vmatprep.subr.mxu0 0.0
  %542 = vmatpush2.xpose.msra.mxu0 0.0
  %543 = vmatprep.subr.mxu0 0.0
  %544 = vmatpush2.xpose.msra.mxu0 0.0
  %545 = vmatprep.subr.mxu0 0.0
  %546 = vmatpush2.xpose.msra.mxu0 0.0
  %547 = vmatprep.subr.mxu0 0.0
  %548 = vmatpush2.xpose.msra.mxu0 0.0
  %549 = vmatprep.subr.mxu0 0.0
  %550 = vmatpush2.xpose.msra.mxu0 0.0
  %551 = vmatprep.subr.mxu0 0.0
  %552 = vmatpush2.xpose.msra.mxu0 0.0
  %553 = vmatprep.subr.mxu0 0.0
  %554 = vmatpush2.xpose.msra.mxu0 0.0
  %555 = vmatprep.subr.mxu0 0.0
  %556 = vmatpush2.xpose.msra.mxu0 0.0
  %557 = vmatprep.subr.mxu0 0.0
  %558 = vmatpush2.xpose.msra.mxu0 0.0
  %559 = vmatprep.subr.mxu0 0.0
  %560 = vmatpush2.xpose.msra.mxu0 0.0
  %561 = vmatprep.subr.mxu0 0.0
  %562 = vmatpush2.xpose.msra.mxu0 0.0
  %563 = vmatprep.subr.mxu0 0.0
  %564 = vmatpush2.xpose.msra.mxu0 0.0
  %565 = vmatprep.subr.mxu0 0.0
  %566 = vmatpush2.xpose.msra.mxu0 0.0
  %567 = vmatprep.subr.mxu0 0.0
  %568 = vmatpush2.xpose.msra.mxu0 0.0
  %569 = vmatprep.mubr.f32.mxu0 0.0
  %570 = vmatmul.mubr.f32.gmra.mxu0 %v433
  %v571 = vpop.f32.mrf.mxu0
  %v572 = vadd.f32 %v502, %v571
  %v573 = vpop.f32.mrf.mxu0
  %574 = vdwg.mxu0
  %v575 = vmul.f32 %v429, 2.0
  %v576 = vsub.f32 %v572, %v575
  %vm577 = vcmp.lt.f32.partialorder %v576, 25.0
  %v578 = vmul.f32 %v26, %v26
  %v580 = vsel %vm53, %v26, 0
  %582 = vmatprep.subr.mxu0 0.0
  %583 = vmatpush1.xpose.msra.mxu0 0.0
  %584 = vmatprep.subr.mxu0 0.0
  %585 = vmatpush1.xpose.msra.mxu0 0.0
  %586 = vmatprep.subr.mxu0 0.0
  %587 = vmatpush1.xpose.msra.mxu0 0.0
  %588 = vmatprep.subr.mxu0 0.0
  %589 = vmatpush1.xpose.msra.mxu0 0.0
  %590 = vmatprep.subr.mxu0 0.0
  %591 = vmatpush1.xpose.msra.mxu0 0.0
  %592 = vmatprep.subr.mxu0 0.0
  %593 = vmatpush1.xpose.msra.mxu0 0.0
  %594 = vmatprep.subr.mxu0 0.0
  %595 = vmatpush1.xpose.msra.mxu0 0.0
  %596 = vmatprep.subr.mxu0 0.0
  %597 = vmatpush1.xpose.msra.mxu0 0.0
  %598 = vmatprep.subr.mxu0 0.0
  %599 = vmatpush1.xpose.msra.mxu0 0.0
  %600 = vmatprep.subr.mxu0 0.0
  %601 = vmatpush1.xpose.msra.mxu0 0.0
  %602 = vmatprep.subr.mxu0 0.0
  %603 = vmatpush1.xpose.msra.mxu0 0.0
  %604 = vmatprep.subr.mxu0 0.0
  %605 = vmatpush1.xpose.msra.mxu0 0.0
  %606 = vmatprep.subr.mxu0 0.0
  %607 = vmatpush1.xpose.msra.mxu0 0.0
  %608 = vmatprep.subr.mxu0 0.0
  %609 = vmatpush1.xpose.msra.mxu0 0.0
  %610 = vmatprep.subr.mxu0 0.0
  %611 = vmatpush1.xpose.msra.mxu0 0.0
  %612 = vmatprep.subr.mxu0 0.0
  %613 = vmatpush1.xpose.msra.mxu0 %v580
  %614 = vmatprep.subr.mxu0 0.0
  %615 = vmatpush2.xpose.msra.mxu0 0.0
  %616 = vmatprep.subr.mxu0 0.0
  %617 = vmatpush2.xpose.msra.mxu0 0.0
  %618 = vmatprep.subr.mxu0 0.0
  %619 = vmatpush2.xpose.msra.mxu0 0.0
  %620 = vmatprep.subr.mxu0 0.0
  %621 = vmatpush2.xpose.msra.mxu0 0.0
  %622 = vmatprep.subr.mxu0 0.0
  %623 = vmatpush2.xpose.msra.mxu0 0.0
  %624 = vmatprep.subr.mxu0 0.0
  %625 = vmatpush2.xpose.msra.mxu0 0.0
  %626 = vmatprep.subr.mxu0 0.0
  %627 = vmatpush2.xpose.msra.mxu0 0.0
  %628 = vmatprep.subr.mxu0 0.0
  %629 = vmatpush2.xpose.msra.mxu0 0.0
  %630 = vmatprep.subr.mxu0 0.0
  %631 = vmatpush2.xpose.msra.mxu0 0.0
  %632 = vmatprep.subr.mxu0 0.0
  %633 = vmatpush2.xpose.msra.mxu0 0.0
  %634 = vmatprep.subr.mxu0 0.0
  %635 = vmatpush2.xpose.msra.mxu0 0.0
  %636 = vmatprep.subr.mxu0 0.0
  %637 = vmatpush2.xpose.msra.mxu0 0.0
  %638 = vmatprep.subr.mxu0 0.0
  %639 = vmatpush2.xpose.msra.mxu0 0.0
  %640 = vmatprep.subr.mxu0 0.0
  %641 = vmatpush2.xpose.msra.mxu0 0.0
  %642 = vmatprep.subr.mxu0 0.0
  %643 = vmatpush2.xpose.msra.mxu0 0.0
  %644 = vmatprep.subr.mxu0 0.0
  %645 = vmatpush2.xpose.msra.mxu0 0.0
  %646 = vmatprep.mubr.f32.mxu0 0.0
  %647 = vmatmul.mubr.f32.gmra.mxu0 %v580
  %v648 = vpop.f32.mrf.mxu0
  %v649 = vadd.f32 0.0, %v648
  %v650 = vpop.f32.mrf.mxu0
  %651 = vdwg.mxu0
  %v653 = vsel %vm53, %v578, 0
  %655 = vmatprep.subr.mxu0 0.0
  %656 = vmatpush1.xpose.msra.mxu0 0.0
  %657 = vmatprep.subr.mxu0 0.0
  %658 = vmatpush1.xpose.msra.mxu0 0.0
  %659 = vmatprep.subr.mxu0 0.0
  %660 = vmatpush1.xpose.msra.mxu0 0.0
  %661 = vmatprep.subr.mxu0 0.0
  %662 = vmatpush1.xpose.msra.mxu0 0.0
  %663 = vmatprep.subr.mxu0 0.0
  %664 = vmatpush1.xpose.msra.mxu0 0.0
  %665 = vmatprep.subr.mxu0 0.0
  %666 = vmatpush1.xpose.msra.mxu0 0.0
  %667 = vmatprep.subr.mxu0 0.0
  %668 = vmatpush1.xpose.msra.mxu0 0.0
  %669 = vmatprep.subr.mxu0 0.0
  %670 = vmatpush1.xpose.msra.mxu0 0.0
  %671 = vmatprep.subr.mxu0 0.0
  %672 = vmatpush1.xpose.msra.mxu0 0.0
  %673 = vmatprep.subr.mxu0 0.0
  %674 = vmatpush1.xpose.msra.mxu0 0.0
  %675 = vmatprep.subr.mxu0 0.0
  %676 = vmatpush1.xpose.msra.mxu0 0.0
  %677 = vmatprep.subr.mxu0 0.0
  %678 = vmatpush1.xpose.msra.mxu0 0.0
  %679 = vmatprep.subr.mxu0 0.0
  %680 = vmatpush1.xpose.msra.mxu0 0.0
  %681 = vmatprep.subr.mxu0 0.0
  %682 = vmatpush1.xpose.msra.mxu0 0.0
  %683 = vmatprep.subr.mxu0 0.0
  %684 = vmatpush1.xpose.msra.mxu0 0.0
  %685 = vmatprep.subr.mxu0 0.0
  %686 = vmatpush1.xpose.msra.mxu0 %v653
  %687 = vmatprep.subr.mxu0 0.0
  %688 = vmatpush2.xpose.msra.mxu0 0.0
  %689 = vmatprep.subr.mxu0 0.0
  %690 = vmatpush2.xpose.msra.mxu0 0.0
  %691 = vmatprep.subr.mxu0 0.0
  %692 = vmatpush2.xpose.msra.mxu0 0.0
  %693 = vmatprep.subr.mxu0 0.0
  %694 = vmatpush2.xpose.msra.mxu0 0.0
  %695 = vmatprep.subr.mxu0 0.0
  %696 = vmatpush2.xpose.msra.mxu0 0.0
  %697 = vmatprep.subr.mxu0 0.0
  %698 = vmatpush2.xpose.msra.mxu0 0.0
  %699 = vmatprep.subr.mxu0 0.0
  %700 = vmatpush2.xpose.msra.mxu0 0.0
  %701 = vmatprep.subr.mxu0 0.0
  %702 = vmatpush2.xpose.msra.mxu0 0.0
  %703 = vmatprep.subr.mxu0 0.0
  %704 = vmatpush2.xpose.msra.mxu0 0.0
  %705 = vmatprep.subr.mxu0 0.0
  %706 = vmatpush2.xpose.msra.mxu0 0.0
  %707 = vmatprep.subr.mxu0 0.0
  %708 = vmatpush2.xpose.msra.mxu0 0.0
  %709 = vmatprep.subr.mxu0 0.0
  %710 = vmatpush2.xpose.msra.mxu0 0.0
  %711 = vmatprep.subr.mxu0 0.0
  %712 = vmatpush2.xpose.msra.mxu0 0.0
  %713 = vmatprep.subr.mxu0 0.0
  %714 = vmatpush2.xpose.msra.mxu0 0.0
  %715 = vmatprep.subr.mxu0 0.0
  %716 = vmatpush2.xpose.msra.mxu0 0.0
  %717 = vmatprep.subr.mxu0 0.0
  %718 = vmatpush2.xpose.msra.mxu0 0.0
  %719 = vmatprep.mubr.f32.mxu0 0.0
  %720 = vmatmul.mubr.f32.gmra.mxu0 %v210
  %v721 = vpop.f32.mrf.mxu0
  %v722 = vadd.f32 0.0, %v721
  %v723 = vpop.f32.mrf.mxu0
  %724 = vdwg.mxu0
  %725 = vmatprep.subr.mxu0 0.0
  %726 = vmatpush1.xpose.msra.mxu0 0.0
  %727 = vmatprep.subr.mxu0 0.0
  %728 = vmatpush1.xpose.msra.mxu0 0.0
  %729 = vmatprep.subr.mxu0 0.0
  %730 = vmatpush1.xpose.msra.mxu0 0.0
  %731 = vmatprep.subr.mxu0 0.0
  %732 = vmatpush1.xpose.msra.mxu0 0.0
  %733 = vmatprep.subr.mxu0 0.0
  %734 = vmatpush1.xpose.msra.mxu0 0.0
  %735 = vmatprep.subr.mxu0 0.0
  %736 = vmatpush1.xpose.msra.mxu0 0.0
  %737 = vmatprep.subr.mxu0 0.0
  %738 = vmatpush1.xpose.msra.mxu0 0.0
  %739 = vmatprep.subr.mxu0 0.0
  %740 = vmatpush1.xpose.msra.mxu0 0.0
  %741 = vmatprep.subr.mxu0 0.0
  %742 = vmatpush1.xpose.msra.mxu0 0.0
  %743 = vmatprep.subr.mxu0 0.0
  %744 = vmatpush1.xpose.msra.mxu0 0.0
  %745 = vmatprep.subr.mxu0 0.0
  %746 = vmatpush1.xpose.msra.mxu0 0.0
  %747 = vmatprep.subr.mxu0 0.0
  %748 = vmatpush1.xpose.msra.mxu0 0.0
  %749 = vmatprep.subr.mxu0 0.0
  %750 = vmatpush1.xpose.msra.mxu0 0.0
  %751 = vmatprep.subr.mxu0 0.0
  %752 = vmatpush1.xpose.msra.mxu0 0.0
  %753 = vmatprep.subr.mxu0 0.0
  %754 = vmatpush1.xpose.msra.mxu0 0.0
  %755 = vmatprep.subr.mxu0 0.0
  %756 = vmatpush1.xpose.msra.mxu0 %v210
  %757 = vmatprep.subr.mxu0 0.0
  %758 = vmatpush2.xpose.msra.mxu0 0.0
  %759 = vmatprep.subr.mxu0 0.0
  %760 = vmatpush2.xpose.msra.mxu0 0.0
  %761 = vmatprep.subr.mxu0 0.0
  %762 = vmatpush2.xpose.msra.mxu0 0.0
  %763 = vmatprep.subr.mxu0 0.0
  %764 = vmatpush2.xpose.msra.mxu0 0.0
  %765 = vmatprep.subr.mxu0 0.0
  %766 = vmatpush2.xpose.msra.mxu0 0.0
  %767 = vmatprep.subr.mxu0 0.0
  %768 = vmatpush2.xpose.msra.mxu0 0.0
  %769 = vmatprep.subr.mxu0 0.0
  %770 = vmatpush2.xpose.msra.mxu0 0.0
  %771 = vmatprep.subr.mxu0 0.0
  %772 = vmatpush2.xpose.msra.mxu0 0.0
  %773 = vmatprep.subr.mxu0 0.0
  %774 = vmatpush2.xpose.msra.mxu0 0.0
  %775 = vmatprep.subr.mxu0 0.0
  %776 = vmatpush2.xpose.msra.mxu0 0.0
  %777 = vmatprep.subr.mxu0 0.0
  %778 = vmatpush2.xpose.msra.mxu0 0.0
  %779 = vmatprep.subr.mxu0 0.0
  %780 = vmatpush2.xpose.msra.mxu0 0.0
  %781 = vmatprep.subr.mxu0 0.0
  %782 = vmatpush2.xpose.msra.mxu0 0.0
  %783 = vmatprep.subr.mxu0 0.0
  %784 = vmatpush2.xpose.msra.mxu0 0.0
  %785 = vmatprep.subr.mxu0 0.0
  %786 = vmatpush2.xpose.msra.mxu0 0.0
  %787 = vmatprep.subr.mxu0 0.0
  %788 = vmatpush2.xpose.msra.mxu0 0.0
  %789 = vmatprep.mubr.f32.mxu0 0.0
  %790 = vmatmul.mubr.f32.gmra.mxu0 %v653
  %v791 = vpop.f32.mrf.mxu0
  %v792 = vadd.f32 %v722, %v791
  %v793 = vpop.f32.mrf.mxu0
  %794 = vdwg.mxu0
  %v795 = vmul.f32 %v649, 2.0
  %v796 = vsub.f32 %v792, %v795
  %vm797 = vcmp.lt.f32.partialorder %v796, 25.0
  %v798 = vmul.f32 %v27, %v27
  %v800 = vsel %vm53, %v27, 0
  %802 = vmatprep.subr.mxu0 0.0
  %803 = vmatpush1.xpose.msra.mxu0 0.0
  %804 = vmatprep.subr.mxu0 0.0
  %805 = vmatpush1.xpose.msra.mxu0 0.0
  %806 = vmatprep.subr.mxu0 0.0
  %807 = vmatpush1.xpose.msra.mxu0 0.0
  %808 = vmatprep.subr.mxu0 0.0
  %809 = vmatpush1.xpose.msra.mxu0 0.0
  %810 = vmatprep.subr.mxu0 0.0
  %811 = vmatpush1.xpose.msra.mxu0 0.0
  %812 = vmatprep.subr.mxu0 0.0
  %813 = vmatpush1.xpose.msra.mxu0 0.0
  %814 = vmatprep.subr.mxu0 0.0
  %815 = vmatpush1.xpose.msra.mxu0 0.0
  %816 = vmatprep.subr.mxu0 0.0
  %817 = vmatpush1.xpose.msra.mxu0 0.0
  %818 = vmatprep.subr.mxu0 0.0
  %819 = vmatpush1.xpose.msra.mxu0 0.0
  %820 = vmatprep.subr.mxu0 0.0
  %821 = vmatpush1.xpose.msra.mxu0 0.0
  %822 = vmatprep.subr.mxu0 0.0
  %823 = vmatpush1.xpose.msra.mxu0 0.0
  %824 = vmatprep.subr.mxu0 0.0
  %825 = vmatpush1.xpose.msra.mxu0 0.0
  %826 = vmatprep.subr.mxu0 0.0
  %827 = vmatpush1.xpose.msra.mxu0 0.0
  %828 = vmatprep.subr.mxu0 0.0
  %829 = vmatpush1.xpose.msra.mxu0 0.0
  %830 = vmatprep.subr.mxu0 0.0
  %831 = vmatpush1.xpose.msra.mxu0 0.0
  %832 = vmatprep.subr.mxu0 0.0
  %833 = vmatpush1.xpose.msra.mxu0 %v800
  %834 = vmatprep.subr.mxu0 0.0
  %835 = vmatpush2.xpose.msra.mxu0 0.0
  %836 = vmatprep.subr.mxu0 0.0
  %837 = vmatpush2.xpose.msra.mxu0 0.0
  %838 = vmatprep.subr.mxu0 0.0
  %839 = vmatpush2.xpose.msra.mxu0 0.0
  %840 = vmatprep.subr.mxu0 0.0
  %841 = vmatpush2.xpose.msra.mxu0 0.0
  %842 = vmatprep.subr.mxu0 0.0
  %843 = vmatpush2.xpose.msra.mxu0 0.0
  %844 = vmatprep.subr.mxu0 0.0
  %845 = vmatpush2.xpose.msra.mxu0 0.0
  %846 = vmatprep.subr.mxu0 0.0
  %847 = vmatpush2.xpose.msra.mxu0 0.0
  %848 = vmatprep.subr.mxu0 0.0
  %849 = vmatpush2.xpose.msra.mxu0 0.0
  %850 = vmatprep.subr.mxu0 0.0
  %851 = vmatpush2.xpose.msra.mxu0 0.0
  %852 = vmatprep.subr.mxu0 0.0
  %853 = vmatpush2.xpose.msra.mxu0 0.0
  %854 = vmatprep.subr.mxu0 0.0
  %855 = vmatpush2.xpose.msra.mxu0 0.0
  %856 = vmatprep.subr.mxu0 0.0
  %857 = vmatpush2.xpose.msra.mxu0 0.0
  %858 = vmatprep.subr.mxu0 0.0
  %859 = vmatpush2.xpose.msra.mxu0 0.0
  %860 = vmatprep.subr.mxu0 0.0
  %861 = vmatpush2.xpose.msra.mxu0 0.0
  %862 = vmatprep.subr.mxu0 0.0
  %863 = vmatpush2.xpose.msra.mxu0 0.0
  %864 = vmatprep.subr.mxu0 0.0
  %865 = vmatpush2.xpose.msra.mxu0 0.0
  %866 = vmatprep.mubr.f32.mxu0 0.0
  %867 = vmatmul.mubr.f32.gmra.mxu0 %v800
  %v868 = vpop.f32.mrf.mxu0
  %v869 = vadd.f32 0.0, %v868
  %v870 = vpop.f32.mrf.mxu0
  %871 = vdwg.mxu0
  %v873 = vsel %vm53, %v798, 0
  %875 = vmatprep.subr.mxu0 0.0
  %876 = vmatpush1.xpose.msra.mxu0 0.0
  %877 = vmatprep.subr.mxu0 0.0
  %878 = vmatpush1.xpose.msra.mxu0 0.0
  %879 = vmatprep.subr.mxu0 0.0
  %880 = vmatpush1.xpose.msra.mxu0 0.0
  %881 = vmatprep.subr.mxu0 0.0
  %882 = vmatpush1.xpose.msra.mxu0 0.0
  %883 = vmatprep.subr.mxu0 0.0
  %884 = vmatpush1.xpose.msra.mxu0 0.0
  %885 = vmatprep.subr.mxu0 0.0
  %886 = vmatpush1.xpose.msra.mxu0 0.0
  %887 = vmatprep.subr.mxu0 0.0
  %888 = vmatpush1.xpose.msra.mxu0 0.0
  %889 = vmatprep.subr.mxu0 0.0
  %890 = vmatpush1.xpose.msra.mxu0 0.0
  %891 = vmatprep.subr.mxu0 0.0
  %892 = vmatpush1.xpose.msra.mxu0 0.0
  %893 = vmatprep.subr.mxu0 0.0
  %894 = vmatpush1.xpose.msra.mxu0 0.0
  %895 = vmatprep.subr.mxu0 0.0
  %896 = vmatpush1.xpose.msra.mxu0 0.0
  %897 = vmatprep.subr.mxu0 0.0
  %898 = vmatpush1.xpose.msra.mxu0 0.0
  %899 = vmatprep.subr.mxu0 0.0
  %900 = vmatpush1.xpose.msra.mxu0 0.0
  %901 = vmatprep.subr.mxu0 0.0
  %902 = vmatpush1.xpose.msra.mxu0 0.0
  %903 = vmatprep.subr.mxu0 0.0
  %904 = vmatpush1.xpose.msra.mxu0 0.0
  %905 = vmatprep.subr.mxu0 0.0
  %906 = vmatpush1.xpose.msra.mxu0 %v873
  %907 = vmatprep.subr.mxu0 0.0
  %908 = vmatpush2.xpose.msra.mxu0 0.0
  %909 = vmatprep.subr.mxu0 0.0
  %910 = vmatpush2.xpose.msra.mxu0 0.0
  %911 = vmatprep.subr.mxu0 0.0
  %912 = vmatpush2.xpose.msra.mxu0 0.0
  %913 = vmatprep.subr.mxu0 0.0
  %914 = vmatpush2.xpose.msra.mxu0 0.0
  %915 = vmatprep.subr.mxu0 0.0
  %916 = vmatpush2.xpose.msra.mxu0 0.0
  %917 = vmatprep.subr.mxu0 0.0
  %918 = vmatpush2.xpose.msra.mxu0 0.0
  %919 = vmatprep.subr.mxu0 0.0
  %920 = vmatpush2.xpose.msra.mxu0 0.0
  %921 = vmatprep.subr.mxu0 0.0
  %922 = vmatpush2.xpose.msra.mxu0 0.0
  %923 = vmatprep.subr.mxu0 0.0
  %924 = vmatpush2.xpose.msra.mxu0 0.0
  %925 = vmatprep.subr.mxu0 0.0
  %926 = vmatpush2.xpose.msra.mxu0 0.0
  %927 = vmatprep.subr.mxu0 0.0
  %928 = vmatpush2.xpose.msra.mxu0 0.0
  %929 = vmatprep.subr.mxu0 0.0
  %930 = vmatpush2.xpose.msra.mxu0 0.0
  %931 = vmatprep.subr.mxu0 0.0
  %932 = vmatpush2.xpose.msra.mxu0 0.0
  %933 = vmatprep.subr.mxu0 0.0
  %934 = vmatpush2.xpose.msra.mxu0 0.0
  %935 = vmatprep.subr.mxu0 0.0
  %936 = vmatpush2.xpose.msra.mxu0 0.0
  %937 = vmatprep.subr.mxu0 0.0
  %938 = vmatpush2.xpose.msra.mxu0 0.0
  %939 = vmatprep.mubr.f32.mxu0 0.0
  %940 = vmatmul.mubr.f32.gmra.mxu0 %v210
  %v941 = vpop.f32.mrf.mxu0
  %v942 = vadd.f32 0.0, %v941
  %v943 = vpop.f32.mrf.mxu0
  %944 = vdwg.mxu0
  %945 = vmatprep.subr.mxu0 0.0
  %946 = vmatpush1.xpose.msra.mxu0 0.0
  %947 = vmatprep.subr.mxu0 0.0
  %948 = vmatpush1.xpose.msra.mxu0 0.0
  %949 = vmatprep.subr.mxu0 0.0
  %950 = vmatpush1.xpose.msra.mxu0 0.0
  %951 = vmatprep.subr.mxu0 0.0
  %952 = vmatpush1.xpose.msra.mxu0 0.0
  %953 = vmatprep.subr.mxu0 0.0
  %954 = vmatpush1.xpose.msra.mxu0 0.0
  %955 = vmatprep.subr.mxu0 0.0
  %956 = vmatpush1.xpose.msra.mxu0 0.0
  %957 = vmatprep.subr.mxu0 0.0
  %958 = vmatpush1.xpose.msra.mxu0 0.0
  %959 = vmatprep.subr.mxu0 0.0
  %960 = vmatpush1.xpose.msra.mxu0 0.0
  %961 = vmatprep.subr.mxu0 0.0
  %962 = vmatpush1.xpose.msra.mxu0 0.0
  %963 = vmatprep.subr.mxu0 0.0
  %964 = vmatpush1.xpose.msra.mxu0 0.0
  %965 = vmatprep.subr.mxu0 0.0
  %966 = vmatpush1.xpose.msra.mxu0 0.0
  %967 = vmatprep.subr.mxu0 0.0
  %968 = vmatpush1.xpose.msra.mxu0 0.0
  %969 = vmatprep.subr.mxu0 0.0
  %970 = vmatpush1.xpose.msra.mxu0 0.0
  %971 = vmatprep.subr.mxu0 0.0
  %972 = vmatpush1.xpose.msra.mxu0 0.0
  %973 = vmatprep.subr.mxu0 0.0
  %974 = vmatpush1.xpose.msra.mxu0 0.0
  %975 = vmatprep.subr.mxu0 0.0
  %976 = vmatpush1.xpose.msra.mxu0 %v210
  %977 = vmatprep.subr.mxu0 0.0
  %978 = vmatpush2.xpose.msra.mxu0 0.0
  %979 = vmatprep.subr.mxu0 0.0
  %980 = vmatpush2.xpose.msra.mxu0 0.0
  %981 = vmatprep.subr.mxu0 0.0
  %982 = vmatpush2.xpose.msra.mxu0 0.0
  %983 = vmatprep.subr.mxu0 0.0
  %984 = vmatpush2.xpose.msra.mxu0 0.0
  %985 = vmatprep.subr.mxu0 0.0
  %986 = vmatpush2.xpose.msra.mxu0 0.0
  %987 = vmatprep.subr.mxu0 0.0
  %988 = vmatpush2.xpose.msra.mxu0 0.0
  %989 = vmatprep.subr.mxu0 0.0
  %990 = vmatpush2.xpose.msra.mxu0 0.0
  %991 = vmatprep.subr.mxu0 0.0
  %992 = vmatpush2.xpose.msra.mxu0 0.0
  %993 = vmatprep.subr.mxu0 0.0
  %994 = vmatpush2.xpose.msra.mxu0 0.0
  %995 = vmatprep.subr.mxu0 0.0
  %996 = vmatpush2.xpose.msra.mxu0 0.0
  %997 = vmatprep.subr.mxu0 0.0
  %998 = vmatpush2.xpose.msra.mxu0 0.0
  %999 = vmatprep.subr.mxu0 0.0
  %1000 = vmatpush2.xpose.msra.mxu0 0.0
  %1001 = vmatprep.subr.mxu0 0.0
  %1002 = vmatpush2.xpose.msra.mxu0 0.0
  %1003 = vmatprep.subr.mxu0 0.0
  %1004 = vmatpush2.xpose.msra.mxu0 0.0
  %1005 = vmatprep.subr.mxu0 0.0
  %1006 = vmatpush2.xpose.msra.mxu0 0.0
  %1007 = vmatprep.subr.mxu0 0.0
  %1008 = vmatpush2.xpose.msra.mxu0 0.0
  %1009 = vmatprep.mubr.f32.mxu0 0.0
  %1010 = vmatmul.mubr.f32.gmra.mxu0 %v873
  %v1011 = vpop.f32.mrf.mxu0
  %v1012 = vadd.f32 %v942, %v1011
  %v1013 = vpop.f32.mrf.mxu0
  %1014 = vdwg.mxu0
  %v1015 = vmul.f32 %v869, 2.0
  %v1016 = vsub.f32 %v1012, %v1015
  %vm1017 = vcmp.lt.f32.partialorder %v1016, 25.0
  %v1018 = vmul.f32 %v28, %v28
  %v1020 = vsel %vm53, %v28, 0
  %1022 = vmatprep.subr.mxu0 0.0
  %1023 = vmatpush1.xpose.msra.mxu0 0.0
  %1024 = vmatprep.subr.mxu0 0.0
  %1025 = vmatpush1.xpose.msra.mxu0 0.0
  %1026 = vmatprep.subr.mxu0 0.0
  %1027 = vmatpush1.xpose.msra.mxu0 0.0
  %1028 = vmatprep.subr.mxu0 0.0
  %1029 = vmatpush1.xpose.msra.mxu0 0.0
  %1030 = vmatprep.subr.mxu0 0.0
  %1031 = vmatpush1.xpose.msra.mxu0 0.0
  %1032 = vmatprep.subr.mxu0 0.0
  %1033 = vmatpush1.xpose.msra.mxu0 0.0
  %1034 = vmatprep.subr.mxu0 0.0
  %1035 = vmatpush1.xpose.msra.mxu0 0.0
  %1036 = vmatprep.subr.mxu0 0.0
  %1037 = vmatpush1.xpose.msra.mxu0 0.0
  %1038 = vmatprep.subr.mxu0 0.0
  %1039 = vmatpush1.xpose.msra.mxu0 0.0
  %1040 = vmatprep.subr.mxu0 0.0
  %1041 = vmatpush1.xpose.msra.mxu0 0.0
  %1042 = vmatprep.subr.mxu0 0.0
  %1043 = vmatpush1.xpose.msra.mxu0 0.0
  %1044 = vmatprep.subr.mxu0 0.0
  %1045 = vmatpush1.xpose.msra.mxu0 0.0
  %1046 = vmatprep.subr.mxu0 0.0
  %1047 = vmatpush1.xpose.msra.mxu0 0.0
  %1048 = vmatprep.subr.mxu0 0.0
  %1049 = vmatpush1.xpose.msra.mxu0 0.0
  %1050 = vmatprep.subr.mxu0 0.0
  %1051 = vmatpush1.xpose.msra.mxu0 0.0
  %1052 = vmatprep.subr.mxu0 0.0
  %1053 = vmatpush1.xpose.msra.mxu0 %v1020
  %1054 = vmatprep.subr.mxu0 0.0
  %1055 = vmatpush2.xpose.msra.mxu0 0.0
  %1056 = vmatprep.subr.mxu0 0.0
  %1057 = vmatpush2.xpose.msra.mxu0 0.0
  %1058 = vmatprep.subr.mxu0 0.0
  %1059 = vmatpush2.xpose.msra.mxu0 0.0
  %1060 = vmatprep.subr.mxu0 0.0
  %1061 = vmatpush2.xpose.msra.mxu0 0.0
  %1062 = vmatprep.subr.mxu0 0.0
  %1063 = vmatpush2.xpose.msra.mxu0 0.0
  %1064 = vmatprep.subr.mxu0 0.0
  %1065 = vmatpush2.xpose.msra.mxu0 0.0
  %1066 = vmatprep.subr.mxu0 0.0
  %1067 = vmatpush2.xpose.msra.mxu0 0.0
  %1068 = vmatprep.subr.mxu0 0.0
  %1069 = vmatpush2.xpose.msra.mxu0 0.0
  %1070 = vmatprep.subr.mxu0 0.0
  %1071 = vmatpush2.xpose.msra.mxu0 0.0
  %1072 = vmatprep.subr.mxu0 0.0
  %1073 = vmatpush2.xpose.msra.mxu0 0.0
  %1074 = vmatprep.subr.mxu0 0.0
  %1075 = vmatpush2.xpose.msra.mxu0 0.0
  %1076 = vmatprep.subr.mxu0 0.0
  %1077 = vmatpush2.xpose.msra.mxu0 0.0
  %1078 = vmatprep.subr.mxu0 0.0
  %1079 = vmatpush2.xpose.msra.mxu0 0.0
  %1080 = vmatprep.subr.mxu0 0.0
  %1081 = vmatpush2.xpose.msra.mxu0 0.0
  %1082 = vmatprep.subr.mxu0 0.0
  %1083 = vmatpush2.xpose.msra.mxu0 0.0
  %1084 = vmatprep.subr.mxu0 0.0
  %1085 = vmatpush2.xpose.msra.mxu0 0.0
  %1086 = vmatprep.mubr.f32.mxu0 0.0
  %1087 = vmatmul.mubr.f32.gmra.mxu0 %v1020
  %v1088 = vpop.f32.mrf.mxu0
  %v1089 = vadd.f32 0.0, %v1088
  %v1090 = vpop.f32.mrf.mxu0
  %1091 = vdwg.mxu0
  %v1093 = vsel %vm53, %v1018, 0
  %1095 = vmatprep.subr.mxu0 0.0
  %1096 = vmatpush1.xpose.msra.mxu0 0.0
  %1097 = vmatprep.subr.mxu0 0.0
  %1098 = vmatpush1.xpose.msra.mxu0 0.0
  %1099 = vmatprep.subr.mxu0 0.0
  %1100 = vmatpush1.xpose.msra.mxu0 0.0
  %1101 = vmatprep.subr.mxu0 0.0
  %1102 = vmatpush1.xpose.msra.mxu0 0.0
  %1103 = vmatprep.subr.mxu0 0.0
  %1104 = vmatpush1.xpose.msra.mxu0 0.0
  %1105 = vmatprep.subr.mxu0 0.0
  %1106 = vmatpush1.xpose.msra.mxu0 0.0
  %1107 = vmatprep.subr.mxu0 0.0
  %1108 = vmatpush1.xpose.msra.mxu0 0.0
  %1109 = vmatprep.subr.mxu0 0.0
  %1110 = vmatpush1.xpose.msra.mxu0 0.0
  %1111 = vmatprep.subr.mxu0 0.0
  %1112 = vmatpush1.xpose.msra.mxu0 0.0
  %1113 = vmatprep.subr.mxu0 0.0
  %1114 = vmatpush1.xpose.msra.mxu0 0.0
  %1115 = vmatprep.subr.mxu0 0.0
  %1116 = vmatpush1.xpose.msra.mxu0 0.0
  %1117 = vmatprep.subr.mxu0 0.0
  %1118 = vmatpush1.xpose.msra.mxu0 0.0
  %1119 = vmatprep.subr.mxu0 0.0
  %1120 = vmatpush1.xpose.msra.mxu0 0.0
  %1121 = vmatprep.subr.mxu0 0.0
  %1122 = vmatpush1.xpose.msra.mxu0 0.0
  %1123 = vmatprep.subr.mxu0 0.0
  %1124 = vmatpush1.xpose.msra.mxu0 0.0
  %1125 = vmatprep.subr.mxu0 0.0
  %1126 = vmatpush1.xpose.msra.mxu0 %v1093
  %1127 = vmatprep.subr.mxu0 0.0
  %1128 = vmatpush2.xpose.msra.mxu0 0.0
  %1129 = vmatprep.subr.mxu0 0.0
  %1130 = vmatpush2.xpose.msra.mxu0 0.0
  %1131 = vmatprep.subr.mxu0 0.0
  %1132 = vmatpush2.xpose.msra.mxu0 0.0
  %1133 = vmatprep.subr.mxu0 0.0
  %1134 = vmatpush2.xpose.msra.mxu0 0.0
  %1135 = vmatprep.subr.mxu0 0.0
  %1136 = vmatpush2.xpose.msra.mxu0 0.0
  %1137 = vmatprep.subr.mxu0 0.0
  %1138 = vmatpush2.xpose.msra.mxu0 0.0
  %1139 = vmatprep.subr.mxu0 0.0
  %1140 = vmatpush2.xpose.msra.mxu0 0.0
  %1141 = vmatprep.subr.mxu0 0.0
  %1142 = vmatpush2.xpose.msra.mxu0 0.0
  %1143 = vmatprep.subr.mxu0 0.0
  %1144 = vmatpush2.xpose.msra.mxu0 0.0
  %1145 = vmatprep.subr.mxu0 0.0
  %1146 = vmatpush2.xpose.msra.mxu0 0.0
  %1147 = vmatprep.subr.mxu0 0.0
  %1148 = vmatpush2.xpose.msra.mxu0 0.0
  %1149 = vmatprep.subr.mxu0 0.0
  %1150 = vmatpush2.xpose.msra.mxu0 0.0
  %1151 = vmatprep.subr.mxu0 0.0
  %1152 = vmatpush2.xpose.msra.mxu0 0.0
  %1153 = vmatprep.subr.mxu0 0.0
  %1154 = vmatpush2.xpose.msra.mxu0 0.0
  %1155 = vmatprep.subr.mxu0 0.0
  %1156 = vmatpush2.xpose.msra.mxu0 0.0
  %1157 = vmatprep.subr.mxu0 0.0
  %1158 = vmatpush2.xpose.msra.mxu0 0.0
  %1159 = vmatprep.mubr.f32.mxu0 0.0
  %1160 = vmatmul.mubr.f32.gmra.mxu0 %v210
  %v1161 = vpop.f32.mrf.mxu0
  %v1162 = vadd.f32 0.0, %v1161
  %v1163 = vpop.f32.mrf.mxu0
  %1164 = vdwg.mxu0
  %1165 = vmatprep.subr.mxu0 0.0
  %1166 = vmatpush1.xpose.msra.mxu0 0.0
  %1167 = vmatprep.subr.mxu0 0.0
  %1168 = vmatpush1.xpose.msra.mxu0 0.0
  %1169 = vmatprep.subr.mxu0 0.0
  %1170 = vmatpush1.xpose.msra.mxu0 0.0
  %1171 = vmatprep.subr.mxu0 0.0
  %1172 = vmatpush1.xpose.msra.mxu0 0.0
  %1173 = vmatprep.subr.mxu0 0.0
  %1174 = vmatpush1.xpose.msra.mxu0 0.0
  %1175 = vmatprep.subr.mxu0 0.0
  %1176 = vmatpush1.xpose.msra.mxu0 0.0
  %1177 = vmatprep.subr.mxu0 0.0
  %1178 = vmatpush1.xpose.msra.mxu0 0.0
  %1179 = vmatprep.subr.mxu0 0.0
  %1180 = vmatpush1.xpose.msra.mxu0 0.0
  %1181 = vmatprep.subr.mxu0 0.0
  %1182 = vmatpush1.xpose.msra.mxu0 0.0
  %1183 = vmatprep.subr.mxu0 0.0
  %1184 = vmatpush1.xpose.msra.mxu0 0.0
  %1185 = vmatprep.subr.mxu0 0.0
  %1186 = vmatpush1.xpose.msra.mxu0 0.0
  %1187 = vmatprep.subr.mxu0 0.0
  %1188 = vmatpush1.xpose.msra.mxu0 0.0
  %1189 = vmatprep.subr.mxu0 0.0
  %1190 = vmatpush1.xpose.msra.mxu0 0.0
  %1191 = vmatprep.subr.mxu0 0.0
  %1192 = vmatpush1.xpose.msra.mxu0 0.0
  %1193 = vmatprep.subr.mxu0 0.0
  %1194 = vmatpush1.xpose.msra.mxu0 0.0
  %1195 = vmatprep.subr.mxu0 0.0
  %1196 = vmatpush1.xpose.msra.mxu0 %v210
  %1197 = vmatprep.subr.mxu0 0.0
  %1198 = vmatpush2.xpose.msra.mxu0 0.0
  %1199 = vmatprep.subr.mxu0 0.0
  %1200 = vmatpush2.xpose.msra.mxu0 0.0
  %1201 = vmatprep.subr.mxu0 0.0
  %1202 = vmatpush2.xpose.msra.mxu0 0.0
  %1203 = vmatprep.subr.mxu0 0.0
  %1204 = vmatpush2.xpose.msra.mxu0 0.0
  %1205 = vmatprep.subr.mxu0 0.0
  %1206 = vmatpush2.xpose.msra.mxu0 0.0
  %1207 = vmatprep.subr.mxu0 0.0
  %1208 = vmatpush2.xpose.msra.mxu0 0.0
  %1209 = vmatprep.subr.mxu0 0.0
  %1210 = vmatpush2.xpose.msra.mxu0 0.0
  %1211 = vmatprep.subr.mxu0 0.0
  %1212 = vmatpush2.xpose.msra.mxu0 0.0
  %1213 = vmatprep.subr.mxu0 0.0
  %1214 = vmatpush2.xpose.msra.mxu0 0.0
  %1215 = vmatprep.subr.mxu0 0.0
  %1216 = vmatpush2.xpose.msra.mxu0 0.0
  %1217 = vmatprep.subr.mxu0 0.0
  %1218 = vmatpush2.xpose.msra.mxu0 0.0
  %1219 = vmatprep.subr.mxu0 0.0
  %1220 = vmatpush2.xpose.msra.mxu0 0.0
  %1221 = vmatprep.subr.mxu0 0.0
  %1222 = vmatpush2.xpose.msra.mxu0 0.0
  %1223 = vmatprep.subr.mxu0 0.0
  %1224 = vmatpush2.xpose.msra.mxu0 0.0
  %1225 = vmatprep.subr.mxu0 0.0
  %1226 = vmatpush2.xpose.msra.mxu0 0.0
  %1227 = vmatprep.subr.mxu0 0.0
  %1228 = vmatpush2.xpose.msra.mxu0 0.0
  %1229 = vmatprep.mubr.f32.mxu0 0.0
  %1230 = vmatmul.mubr.f32.gmra.mxu0 %v1093
  %v1231 = vpop.f32.mrf.mxu0
  %v1232 = vadd.f32 %v1162, %v1231
  %v1233 = vpop.f32.mrf.mxu0
  %1234 = vdwg.mxu0
  %v1235 = vmul.f32 %v1089, 2.0
  %v1236 = vsub.f32 %v1232, %v1235
  %vm1237 = vcmp.lt.f32.partialorder %v1236, 25.0
  %v1238 = vmul.f32 %v29, %v29
  %v1240 = vsel %vm53, %v29, 0
  %1242 = vmatprep.subr.mxu0 0.0
  %1243 = vmatpush1.xpose.msra.mxu0 0.0
  %1244 = vmatprep.subr.mxu0 0.0
  %1245 = vmatpush1.xpose.msra.mxu0 0.0
  %1246 = vmatprep.subr.mxu0 0.0
  %1247 = vmatpush1.xpose.msra.mxu0 0.0
  %1248 = vmatprep.subr.mxu0 0.0
  %1249 = vmatpush1.xpose.msra.mxu0 0.0
  %1250 = vmatprep.subr.mxu0 0.0
  %1251 = vmatpush1.xpose.msra.mxu0 0.0
  %1252 = vmatprep.subr.mxu0 0.0
  %1253 = vmatpush1.xpose.msra.mxu0 0.0
  %1254 = vmatprep.subr.mxu0 0.0
  %1255 = vmatpush1.xpose.msra.mxu0 0.0
  %1256 = vmatprep.subr.mxu0 0.0
  %1257 = vmatpush1.xpose.msra.mxu0 0.0
  %1258 = vmatprep.subr.mxu0 0.0
  %1259 = vmatpush1.xpose.msra.mxu0 0.0
  %1260 = vmatprep.subr.mxu0 0.0
  %1261 = vmatpush1.xpose.msra.mxu0 0.0
  %1262 = vmatprep.subr.mxu0 0.0
  %1263 = vmatpush1.xpose.msra.mxu0 0.0
  %1264 = vmatprep.subr.mxu0 0.0
  %1265 = vmatpush1.xpose.msra.mxu0 0.0
  %1266 = vmatprep.subr.mxu0 0.0
  %1267 = vmatpush1.xpose.msra.mxu0 0.0
  %1268 = vmatprep.subr.mxu0 0.0
  %1269 = vmatpush1.xpose.msra.mxu0 0.0
  %1270 = vmatprep.subr.mxu0 0.0
  %1271 = vmatpush1.xpose.msra.mxu0 0.0
  %1272 = vmatprep.subr.mxu0 0.0
  %1273 = vmatpush1.xpose.msra.mxu0 %v1240
  %1274 = vmatprep.subr.mxu0 0.0
  %1275 = vmatpush2.xpose.msra.mxu0 0.0
  %1276 = vmatprep.subr.mxu0 0.0
  %1277 = vmatpush2.xpose.msra.mxu0 0.0
  %1278 = vmatprep.subr.mxu0 0.0
  %1279 = vmatpush2.xpose.msra.mxu0 0.0
  %1280 = vmatprep.subr.mxu0 0.0
  %1281 = vmatpush2.xpose.msra.mxu0 0.0
  %1282 = vmatprep.subr.mxu0 0.0
  %1283 = vmatpush2.xpose.msra.mxu0 0.0
  %1284 = vmatprep.subr.mxu0 0.0
  %1285 = vmatpush2.xpose.msra.mxu0 0.0
  %1286 = vmatprep.subr.mxu0 0.0
  %1287 = vmatpush2.xpose.msra.mxu0 0.0
  %1288 = vmatprep.subr.mxu0 0.0
  %1289 = vmatpush2.xpose.msra.mxu0 0.0
  %1290 = vmatprep.subr.mxu0 0.0
  %1291 = vmatpush2.xpose.msra.mxu0 0.0
  %1292 = vmatprep.subr.mxu0 0.0
  %1293 = vmatpush2.xpose.msra.mxu0 0.0
  %1294 = vmatprep.subr.mxu0 0.0
  %1295 = vmatpush2.xpose.msra.mxu0 0.0
  %1296 = vmatprep.subr.mxu0 0.0
  %1297 = vmatpush2.xpose.msra.mxu0 0.0
  %1298 = vmatprep.subr.mxu0 0.0
  %1299 = vmatpush2.xpose.msra.mxu0 0.0
  %1300 = vmatprep.subr.mxu0 0.0
  %1301 = vmatpush2.xpose.msra.mxu0 0.0
  %1302 = vmatprep.subr.mxu0 0.0
  %1303 = vmatpush2.xpose.msra.mxu0 0.0
  %1304 = vmatprep.subr.mxu0 0.0
  %1305 = vmatpush2.xpose.msra.mxu0 0.0
  %1306 = vmatprep.mubr.f32.mxu0 0.0
  %1307 = vmatmul.mubr.f32.gmra.mxu0 %v1240
  %v1308 = vpop.f32.mrf.mxu0
  %v1309 = vadd.f32 0.0, %v1308
  %v1310 = vpop.f32.mrf.mxu0
  %1311 = vdwg.mxu0
  %v1313 = vsel %vm53, %v1238, 0
  %1315 = vmatprep.subr.mxu0 0.0
  %1316 = vmatpush1.xpose.msra.mxu0 0.0
  %1317 = vmatprep.subr.mxu0 0.0
  %1318 = vmatpush1.xpose.msra.mxu0 0.0
  %1319 = vmatprep.subr.mxu0 0.0
  %1320 = vmatpush1.xpose.msra.mxu0 0.0
  %1321 = vmatprep.subr.mxu0 0.0
  %1322 = vmatpush1.xpose.msra.mxu0 0.0
  %1323 = vmatprep.subr.mxu0 0.0
  %1324 = vmatpush1.xpose.msra.mxu0 0.0
  %1325 = vmatprep.subr.mxu0 0.0
  %1326 = vmatpush1.xpose.msra.mxu0 0.0
  %1327 = vmatprep.subr.mxu0 0.0
  %1328 = vmatpush1.xpose.msra.mxu0 0.0
  %1329 = vmatprep.subr.mxu0 0.0
  %1330 = vmatpush1.xpose.msra.mxu0 0.0
  %1331 = vmatprep.subr.mxu0 0.0
  %1332 = vmatpush1.xpose.msra.mxu0 0.0
  %1333 = vmatprep.subr.mxu0 0.0
  %1334 = vmatpush1.xpose.msra.mxu0 0.0
  %1335 = vmatprep.subr.mxu0 0.0
  %1336 = vmatpush1.xpose.msra.mxu0 0.0
  %1337 = vmatprep.subr.mxu0 0.0
  %1338 = vmatpush1.xpose.msra.mxu0 0.0
  %1339 = vmatprep.subr.mxu0 0.0
  %1340 = vmatpush1.xpose.msra.mxu0 0.0
  %1341 = vmatprep.subr.mxu0 0.0
  %1342 = vmatpush1.xpose.msra.mxu0 0.0
  %1343 = vmatprep.subr.mxu0 0.0
  %1344 = vmatpush1.xpose.msra.mxu0 0.0
  %1345 = vmatprep.subr.mxu0 0.0
  %1346 = vmatpush1.xpose.msra.mxu0 %v1313
  %1347 = vmatprep.subr.mxu0 0.0
  %1348 = vmatpush2.xpose.msra.mxu0 0.0
  %1349 = vmatprep.subr.mxu0 0.0
  %1350 = vmatpush2.xpose.msra.mxu0 0.0
  %1351 = vmatprep.subr.mxu0 0.0
  %1352 = vmatpush2.xpose.msra.mxu0 0.0
  %1353 = vmatprep.subr.mxu0 0.0
  %1354 = vmatpush2.xpose.msra.mxu0 0.0
  %1355 = vmatprep.subr.mxu0 0.0
  %1356 = vmatpush2.xpose.msra.mxu0 0.0
  %1357 = vmatprep.subr.mxu0 0.0
  %1358 = vmatpush2.xpose.msra.mxu0 0.0
  %1359 = vmatprep.subr.mxu0 0.0
  %1360 = vmatpush2.xpose.msra.mxu0 0.0
  %1361 = vmatprep.subr.mxu0 0.0
  %1362 = vmatpush2.xpose.msra.mxu0 0.0
  %1363 = vmatprep.subr.mxu0 0.0
  %1364 = vmatpush2.xpose.msra.mxu0 0.0
  %1365 = vmatprep.subr.mxu0 0.0
  %1366 = vmatpush2.xpose.msra.mxu0 0.0
  %1367 = vmatprep.subr.mxu0 0.0
  %1368 = vmatpush2.xpose.msra.mxu0 0.0
  %1369 = vmatprep.subr.mxu0 0.0
  %1370 = vmatpush2.xpose.msra.mxu0 0.0
  %1371 = vmatprep.subr.mxu0 0.0
  %1372 = vmatpush2.xpose.msra.mxu0 0.0
  %1373 = vmatprep.subr.mxu0 0.0
  %1374 = vmatpush2.xpose.msra.mxu0 0.0
  %1375 = vmatprep.subr.mxu0 0.0
  %1376 = vmatpush2.xpose.msra.mxu0 0.0
  %1377 = vmatprep.subr.mxu0 0.0
  %1378 = vmatpush2.xpose.msra.mxu0 0.0
  %1379 = vmatprep.mubr.f32.mxu0 0.0
  %1380 = vmatmul.mubr.f32.gmra.mxu0 %v210
  %v1381 = vpop.f32.mrf.mxu0
  %v1382 = vadd.f32 0.0, %v1381
  %v1383 = vpop.f32.mrf.mxu0
  %1384 = vdwg.mxu0
  %1385 = vmatprep.subr.mxu0 0.0
  %1386 = vmatpush1.xpose.msra.mxu0 0.0
  %1387 = vmatprep.subr.mxu0 0.0
  %1388 = vmatpush1.xpose.msra.mxu0 0.0
  %1389 = vmatprep.subr.mxu0 0.0
  %1390 = vmatpush1.xpose.msra.mxu0 0.0
  %1391 = vmatprep.subr.mxu0 0.0
  %1392 = vmatpush1.xpose.msra.mxu0 0.0
  %1393 = vmatprep.subr.mxu0 0.0
  %1394 = vmatpush1.xpose.msra.mxu0 0.0
  %1395 = vmatprep.subr.mxu0 0.0
  %1396 = vmatpush1.xpose.msra.mxu0 0.0
  %1397 = vmatprep.subr.mxu0 0.0
  %1398 = vmatpush1.xpose.msra.mxu0 0.0
  %1399 = vmatprep.subr.mxu0 0.0
  %1400 = vmatpush1.xpose.msra.mxu0 0.0
  %1401 = vmatprep.subr.mxu0 0.0
  %1402 = vmatpush1.xpose.msra.mxu0 0.0
  %1403 = vmatprep.subr.mxu0 0.0
  %1404 = vmatpush1.xpose.msra.mxu0 0.0
  %1405 = vmatprep.subr.mxu0 0.0
  %1406 = vmatpush1.xpose.msra.mxu0 0.0
  %1407 = vmatprep.subr.mxu0 0.0
  %1408 = vmatpush1.xpose.msra.mxu0 0.0
  %1409 = vmatprep.subr.mxu0 0.0
  %1410 = vmatpush1.xpose.msra.mxu0 0.0
  %1411 = vmatprep.subr.mxu0 0.0
  %1412 = vmatpush1.xpose.msra.mxu0 0.0
  %1413 = vmatprep.subr.mxu0 0.0
  %1414 = vmatpush1.xpose.msra.mxu0 0.0
  %1415 = vmatprep.subr.mxu0 0.0
  %1416 = vmatpush1.xpose.msra.mxu0 %v210
  %1417 = vmatprep.subr.mxu0 0.0
  %1418 = vmatpush2.xpose.msra.mxu0 0.0
  %1419 = vmatprep.subr.mxu0 0.0
  %1420 = vmatpush2.xpose.msra.mxu0 0.0
  %1421 = vmatprep.subr.mxu0 0.0
  %1422 = vmatpush2.xpose.msra.mxu0 0.0
  %1423 = vmatprep.subr.mxu0 0.0
  %1424 = vmatpush2.xpose.msra.mxu0 0.0
  %1425 = vmatprep.subr.mxu0 0.0
  %1426 = vmatpush2.xpose.msra.mxu0 0.0
  %1427 = vmatprep.subr.mxu0 0.0
  %1428 = vmatpush2.xpose.msra.mxu0 0.0
  %1429 = vmatprep.subr.mxu0 0.0
  %1430 = vmatpush2.xpose.msra.mxu0 0.0
  %1431 = vmatprep.subr.mxu0 0.0
  %1432 = vmatpush2.xpose.msra.mxu0 0.0
  %1433 = vmatprep.subr.mxu0 0.0
  %1434 = vmatpush2.xpose.msra.mxu0 0.0
  %1435 = vmatprep.subr.mxu0 0.0
  %1436 = vmatpush2.xpose.msra.mxu0 0.0
  %1437 = vmatprep.subr.mxu0 0.0
  %1438 = vmatpush2.xpose.msra.mxu0 0.0
  %1439 = vmatprep.subr.mxu0 0.0
  %1440 = vmatpush2.xpose.msra.mxu0 0.0
  %1441 = vmatprep.subr.mxu0 0.0
  %1442 = vmatpush2.xpose.msra.mxu0 0.0
  %1443 = vmatprep.subr.mxu0 0.0
  %1444 = vmatpush2.xpose.msra.mxu0 0.0
  %1445 = vmatprep.subr.mxu0 0.0
  %1446 = vmatpush2.xpose.msra.mxu0 0.0
  %1447 = vmatprep.subr.mxu0 0.0
  %1448 = vmatpush2.xpose.msra.mxu0 0.0
  %1449 = vmatprep.mubr.f32.mxu0 0.0
  %1450 = vmatmul.mubr.f32.gmra.mxu0 %v1313
  %v1451 = vpop.f32.mrf.mxu0
  %v1452 = vadd.f32 %v1382, %v1451
  %v1453 = vpop.f32.mrf.mxu0
  %1454 = vdwg.mxu0
  %v1455 = vmul.f32 %v1309, 2.0
  %v1456 = vsub.f32 %v1452, %v1455
  %vm1457 = vcmp.lt.f32.partialorder %v1456, 25.0
  %v1458 = vmul.f32 %v30, %v30
  %v1460 = vsel %vm53, %v30, 0
  %1462 = vmatprep.subr.mxu0 0.0
  %1463 = vmatpush1.xpose.msra.mxu0 0.0
  %1464 = vmatprep.subr.mxu0 0.0
  %1465 = vmatpush1.xpose.msra.mxu0 0.0
  %1466 = vmatprep.subr.mxu0 0.0
  %1467 = vmatpush1.xpose.msra.mxu0 0.0
  %1468 = vmatprep.subr.mxu0 0.0
  %1469 = vmatpush1.xpose.msra.mxu0 0.0
  %1470 = vmatprep.subr.mxu0 0.0
  %1471 = vmatpush1.xpose.msra.mxu0 0.0
  %1472 = vmatprep.subr.mxu0 0.0
  %1473 = vmatpush1.xpose.msra.mxu0 0.0
  %1474 = vmatprep.subr.mxu0 0.0
  %1475 = vmatpush1.xpose.msra.mxu0 0.0
  %1476 = vmatprep.subr.mxu0 0.0
  %1477 = vmatpush1.xpose.msra.mxu0 0.0
  %1478 = vmatprep.subr.mxu0 0.0
  %1479 = vmatpush1.xpose.msra.mxu0 0.0
  %1480 = vmatprep.subr.mxu0 0.0
  %1481 = vmatpush1.xpose.msra.mxu0 0.0
  %1482 = vmatprep.subr.mxu0 0.0
  %1483 = vmatpush1.xpose.msra.mxu0 0.0
  %1484 = vmatprep.subr.mxu0 0.0
  %1485 = vmatpush1.xpose.msra.mxu0 0.0
  %1486 = vmatprep.subr.mxu0 0.0
  %1487 = vmatpush1.xpose.msra.mxu0 0.0
  %1488 = vmatprep.subr.mxu0 0.0
  %1489 = vmatpush1.xpose.msra.mxu0 0.0
  %1490 = vmatprep.subr.mxu0 0.0
  %1491 = vmatpush1.xpose.msra.mxu0 0.0
  %1492 = vmatprep.subr.mxu0 0.0
  %1493 = vmatpush1.xpose.msra.mxu0 %v1460
  %1494 = vmatprep.subr.mxu0 0.0
  %1495 = vmatpush2.xpose.msra.mxu0 0.0
  %1496 = vmatprep.subr.mxu0 0.0
  %1497 = vmatpush2.xpose.msra.mxu0 0.0
  %1498 = vmatprep.subr.mxu0 0.0
  %1499 = vmatpush2.xpose.msra.mxu0 0.0
  %1500 = vmatprep.subr.mxu0 0.0
  %1501 = vmatpush2.xpose.msra.mxu0 0.0
  %1502 = vmatprep.subr.mxu0 0.0
  %1503 = vmatpush2.xpose.msra.mxu0 0.0
  %1504 = vmatprep.subr.mxu0 0.0
  %1505 = vmatpush2.xpose.msra.mxu0 0.0
  %1506 = vmatprep.subr.mxu0 0.0
  %1507 = vmatpush2.xpose.msra.mxu0 0.0
  %1508 = vmatprep.subr.mxu0 0.0
  %1509 = vmatpush2.xpose.msra.mxu0 0.0
  %1510 = vmatprep.subr.mxu0 0.0
  %1511 = vmatpush2.xpose.msra.mxu0 0.0
  %1512 = vmatprep.subr.mxu0 0.0
  %1513 = vmatpush2.xpose.msra.mxu0 0.0
  %1514 = vmatprep.subr.mxu0 0.0
  %1515 = vmatpush2.xpose.msra.mxu0 0.0
  %1516 = vmatprep.subr.mxu0 0.0
  %1517 = vmatpush2.xpose.msra.mxu0 0.0
  %1518 = vmatprep.subr.mxu0 0.0
  %1519 = vmatpush2.xpose.msra.mxu0 0.0
  %1520 = vmatprep.subr.mxu0 0.0
  %1521 = vmatpush2.xpose.msra.mxu0 0.0
  %1522 = vmatprep.subr.mxu0 0.0
  %1523 = vmatpush2.xpose.msra.mxu0 0.0
  %1524 = vmatprep.subr.mxu0 0.0
  %1525 = vmatpush2.xpose.msra.mxu0 0.0
  %1526 = vmatprep.mubr.f32.mxu0 0.0
  %1527 = vmatmul.mubr.f32.gmra.mxu0 %v1460
  %v1528 = vpop.f32.mrf.mxu0
  %v1529 = vadd.f32 0.0, %v1528
  %v1530 = vpop.f32.mrf.mxu0
  %1531 = vdwg.mxu0
  %v1533 = vsel %vm53, %v1458, 0
  %1535 = vmatprep.subr.mxu0 0.0
  %1536 = vmatpush1.xpose.msra.mxu0 0.0
  %1537 = vmatprep.subr.mxu0 0.0
  %1538 = vmatpush1.xpose.msra.mxu0 0.0
  %1539 = vmatprep.subr.mxu0 0.0
  %1540 = vmatpush1.xpose.msra.mxu0 0.0
  %1541 = vmatprep.subr.mxu0 0.0
  %1542 = vmatpush1.xpose.msra.mxu0 0.0
  %1543 = vmatprep.subr.mxu0 0.0
  %1544 = vmatpush1.xpose.msra.mxu0 0.0
  %1545 = vmatprep.subr.mxu0 0.0
  %1546 = vmatpush1.xpose.msra.mxu0 0.0
  %1547 = vmatprep.subr.mxu0 0.0
  %1548 = vmatpush1.xpose.msra.mxu0 0.0
  %1549 = vmatprep.subr.mxu0 0.0
  %1550 = vmatpush1.xpose.msra.mxu0 0.0
  %1551 = vmatprep.subr.mxu0 0.0
  %1552 = vmatpush1.xpose.msra.mxu0 0.0
  %1553 = vmatprep.subr.mxu0 0.0
  %1554 = vmatpush1.xpose.msra.mxu0 0.0
  %1555 = vmatprep.subr.mxu0 0.0
  %1556 = vmatpush1.xpose.msra.mxu0 0.0
  %1557 = vmatprep.subr.mxu0 0.0
  %1558 = vmatpush1.xpose.msra.mxu0 0.0
  %1559 = vmatprep.subr.mxu0 0.0
  %1560 = vmatpush1.xpose.msra.mxu0 0.0
  %1561 = vmatprep.subr.mxu0 0.0
  %1562 = vmatpush1.xpose.msra.mxu0 0.0
  %1563 = vmatprep.subr.mxu0 0.0
  %1564 = vmatpush1.xpose.msra.mxu0 0.0
  %1565 = vmatprep.subr.mxu0 0.0
  %1566 = vmatpush1.xpose.msra.mxu0 %v1533
  %1567 = vmatprep.subr.mxu0 0.0
  %1568 = vmatpush2.xpose.msra.mxu0 0.0
  %1569 = vmatprep.subr.mxu0 0.0
  %1570 = vmatpush2.xpose.msra.mxu0 0.0
  %1571 = vmatprep.subr.mxu0 0.0
  %1572 = vmatpush2.xpose.msra.mxu0 0.0
  %1573 = vmatprep.subr.mxu0 0.0
  %1574 = vmatpush2.xpose.msra.mxu0 0.0
  %1575 = vmatprep.subr.mxu0 0.0
  %1576 = vmatpush2.xpose.msra.mxu0 0.0
  %1577 = vmatprep.subr.mxu0 0.0
  %1578 = vmatpush2.xpose.msra.mxu0 0.0
  %1579 = vmatprep.subr.mxu0 0.0
  %1580 = vmatpush2.xpose.msra.mxu0 0.0
  %1581 = vmatprep.subr.mxu0 0.0
  %1582 = vmatpush2.xpose.msra.mxu0 0.0
  %1583 = vmatprep.subr.mxu0 0.0
  %1584 = vmatpush2.xpose.msra.mxu0 0.0
  %1585 = vmatprep.subr.mxu0 0.0
  %1586 = vmatpush2.xpose.msra.mxu0 0.0
  %1587 = vmatprep.subr.mxu0 0.0
  %1588 = vmatpush2.xpose.msra.mxu0 0.0
  %1589 = vmatprep.subr.mxu0 0.0
  %1590 = vmatpush2.xpose.msra.mxu0 0.0
  %1591 = vmatprep.subr.mxu0 0.0
  %1592 = vmatpush2.xpose.msra.mxu0 0.0
  %1593 = vmatprep.subr.mxu0 0.0
  %1594 = vmatpush2.xpose.msra.mxu0 0.0
  %1595 = vmatprep.subr.mxu0 0.0
  %1596 = vmatpush2.xpose.msra.mxu0 0.0
  %1597 = vmatprep.subr.mxu0 0.0
  %1598 = vmatpush2.xpose.msra.mxu0 0.0
  %1599 = vmatprep.mubr.f32.mxu0 0.0
  %1600 = vmatmul.mubr.f32.gmra.mxu0 %v210
  %v1601 = vpop.f32.mrf.mxu0
  %v1602 = vadd.f32 0.0, %v1601
  %v1603 = vpop.f32.mrf.mxu0
  %1604 = vdwg.mxu0
  %1605 = vmatprep.subr.mxu0 0.0
  %1606 = vmatpush1.xpose.msra.mxu0 0.0
  %1607 = vmatprep.subr.mxu0 0.0
  %1608 = vmatpush1.xpose.msra.mxu0 0.0
  %1609 = vmatprep.subr.mxu0 0.0
  %1610 = vmatpush1.xpose.msra.mxu0 0.0
  %1611 = vmatprep.subr.mxu0 0.0
  %1612 = vmatpush1.xpose.msra.mxu0 0.0
  %1613 = vmatprep.subr.mxu0 0.0
  %1614 = vmatpush1.xpose.msra.mxu0 0.0
  %1615 = vmatprep.subr.mxu0 0.0
  %1616 = vmatpush1.xpose.msra.mxu0 0.0
  %1617 = vmatprep.subr.mxu0 0.0
  %1618 = vmatpush1.xpose.msra.mxu0 0.0
  %1619 = vmatprep.subr.mxu0 0.0
  %1620 = vmatpush1.xpose.msra.mxu0 0.0
  %1621 = vmatprep.subr.mxu0 0.0
  %1622 = vmatpush1.xpose.msra.mxu0 0.0
  %1623 = vmatprep.subr.mxu0 0.0
  %1624 = vmatpush1.xpose.msra.mxu0 0.0
  %1625 = vmatprep.subr.mxu0 0.0
  %1626 = vmatpush1.xpose.msra.mxu0 0.0
  %1627 = vmatprep.subr.mxu0 0.0
  %1628 = vmatpush1.xpose.msra.mxu0 0.0
  %1629 = vmatprep.subr.mxu0 0.0
  %1630 = vmatpush1.xpose.msra.mxu0 0.0
  %1631 = vmatprep.subr.mxu0 0.0
  %1632 = vmatpush1.xpose.msra.mxu0 0.0
  %1633 = vmatprep.subr.mxu0 0.0
  %1634 = vmatpush1.xpose.msra.mxu0 0.0
  %1635 = vmatprep.subr.mxu0 0.0
  %1636 = vmatpush1.xpose.msra.mxu0 %v210
  %1637 = vmatprep.subr.mxu0 0.0
  %1638 = vmatpush2.xpose.msra.mxu0 0.0
  %1639 = vmatprep.subr.mxu0 0.0
  %1640 = vmatpush2.xpose.msra.mxu0 0.0
  %1641 = vmatprep.subr.mxu0 0.0
  %1642 = vmatpush2.xpose.msra.mxu0 0.0
  %1643 = vmatprep.subr.mxu0 0.0
  %1644 = vmatpush2.xpose.msra.mxu0 0.0
  %1645 = vmatprep.subr.mxu0 0.0
  %1646 = vmatpush2.xpose.msra.mxu0 0.0
  %1647 = vmatprep.subr.mxu0 0.0
  %1648 = vmatpush2.xpose.msra.mxu0 0.0
  %1649 = vmatprep.subr.mxu0 0.0
  %1650 = vmatpush2.xpose.msra.mxu0 0.0
  %1651 = vmatprep.subr.mxu0 0.0
  %1652 = vmatpush2.xpose.msra.mxu0 0.0
  %1653 = vmatprep.subr.mxu0 0.0
  %1654 = vmatpush2.xpose.msra.mxu0 0.0
  %1655 = vmatprep.subr.mxu0 0.0
  %1656 = vmatpush2.xpose.msra.mxu0 0.0
  %1657 = vmatprep.subr.mxu0 0.0
  %1658 = vmatpush2.xpose.msra.mxu0 0.0
  %1659 = vmatprep.subr.mxu0 0.0
  %1660 = vmatpush2.xpose.msra.mxu0 0.0
  %1661 = vmatprep.subr.mxu0 0.0
  %1662 = vmatpush2.xpose.msra.mxu0 0.0
  %1663 = vmatprep.subr.mxu0 0.0
  %1664 = vmatpush2.xpose.msra.mxu0 0.0
  %1665 = vmatprep.subr.mxu0 0.0
  %1666 = vmatpush2.xpose.msra.mxu0 0.0
  %1667 = vmatprep.subr.mxu0 0.0
  %1668 = vmatpush2.xpose.msra.mxu0 0.0
  %1669 = vmatprep.mubr.f32.mxu0 0.0
  %1670 = vmatmul.mubr.f32.gmra.mxu0 %v1533
  %v1671 = vpop.f32.mrf.mxu0
  %v1672 = vadd.f32 %v1602, %v1671
  %v1673 = vpop.f32.mrf.mxu0
  %1674 = vdwg.mxu0
  %v1675 = vmul.f32 %v1529, 2.0
  %v1676 = vsub.f32 %v1672, %v1675
  %vm1677 = vcmp.lt.f32.partialorder %v1676, 25.0
  %v1678 = vmul.f32 %v31, %v31
  %v1680 = vsel %vm53, %v31, 0
  %1682 = vmatprep.subr.mxu0 0.0
  %1683 = vmatpush1.xpose.msra.mxu0 0.0
  %1684 = vmatprep.subr.mxu0 0.0
  %1685 = vmatpush1.xpose.msra.mxu0 0.0
  %1686 = vmatprep.subr.mxu0 0.0
  %1687 = vmatpush1.xpose.msra.mxu0 0.0
  %1688 = vmatprep.subr.mxu0 0.0
  %1689 = vmatpush1.xpose.msra.mxu0 0.0
  %1690 = vmatprep.subr.mxu0 0.0
  %1691 = vmatpush1.xpose.msra.mxu0 0.0
  %1692 = vmatprep.subr.mxu0 0.0
  %1693 = vmatpush1.xpose.msra.mxu0 0.0
  %1694 = vmatprep.subr.mxu0 0.0
  %1695 = vmatpush1.xpose.msra.mxu0 0.0
  %1696 = vmatprep.subr.mxu0 0.0
  %1697 = vmatpush1.xpose.msra.mxu0 0.0
  %1698 = vmatprep.subr.mxu0 0.0
  %1699 = vmatpush1.xpose.msra.mxu0 0.0
  %1700 = vmatprep.subr.mxu0 0.0
  %1701 = vmatpush1.xpose.msra.mxu0 0.0
  %1702 = vmatprep.subr.mxu0 0.0
  %1703 = vmatpush1.xpose.msra.mxu0 0.0
  %1704 = vmatprep.subr.mxu0 0.0
  %1705 = vmatpush1.xpose.msra.mxu0 0.0
  %1706 = vmatprep.subr.mxu0 0.0
  %1707 = vmatpush1.xpose.msra.mxu0 0.0
  %1708 = vmatprep.subr.mxu0 0.0
  %1709 = vmatpush1.xpose.msra.mxu0 0.0
  %1710 = vmatprep.subr.mxu0 0.0
  %1711 = vmatpush1.xpose.msra.mxu0 0.0
  %1712 = vmatprep.subr.mxu0 0.0
  %1713 = vmatpush1.xpose.msra.mxu0 %v1680
  %1714 = vmatprep.subr.mxu0 0.0
  %1715 = vmatpush2.xpose.msra.mxu0 0.0
  %1716 = vmatprep.subr.mxu0 0.0
  %1717 = vmatpush2.xpose.msra.mxu0 0.0
  %1718 = vmatprep.subr.mxu0 0.0
  %1719 = vmatpush2.xpose.msra.mxu0 0.0
  %1720 = vmatprep.subr.mxu0 0.0
  %1721 = vmatpush2.xpose.msra.mxu0 0.0
  %1722 = vmatprep.subr.mxu0 0.0
  %1723 = vmatpush2.xpose.msra.mxu0 0.0
  %1724 = vmatprep.subr.mxu0 0.0
  %1725 = vmatpush2.xpose.msra.mxu0 0.0
  %1726 = vmatprep.subr.mxu0 0.0
  %1727 = vmatpush2.xpose.msra.mxu0 0.0
  %1728 = vmatprep.subr.mxu0 0.0
  %1729 = vmatpush2.xpose.msra.mxu0 0.0
  %1730 = vmatprep.subr.mxu0 0.0
  %1731 = vmatpush2.xpose.msra.mxu0 0.0
  %1732 = vmatprep.subr.mxu0 0.0
  %1733 = vmatpush2.xpose.msra.mxu0 0.0
  %1734 = vmatprep.subr.mxu0 0.0
  %1735 = vmatpush2.xpose.msra.mxu0 0.0
  %1736 = vmatprep.subr.mxu0 0.0
  %1737 = vmatpush2.xpose.msra.mxu0 0.0
  %1738 = vmatprep.subr.mxu0 0.0
  %1739 = vmatpush2.xpose.msra.mxu0 0.0
  %1740 = vmatprep.subr.mxu0 0.0
  %1741 = vmatpush2.xpose.msra.mxu0 0.0
  %1742 = vmatprep.subr.mxu0 0.0
  %1743 = vmatpush2.xpose.msra.mxu0 0.0
  %1744 = vmatprep.subr.mxu0 0.0
  %1745 = vmatpush2.xpose.msra.mxu0 0.0
  %1746 = vmatprep.mubr.f32.mxu0 0.0
  %1747 = vmatmul.mubr.f32.gmra.mxu0 %v1680
  %v1748 = vpop.f32.mrf.mxu0
  %v1749 = vadd.f32 0.0, %v1748
  %v1750 = vpop.f32.mrf.mxu0
  %1751 = vdwg.mxu0
  %v1753 = vsel %vm53, %v1678, 0
  %1755 = vmatprep.subr.mxu0 0.0
  %1756 = vmatpush1.xpose.msra.mxu0 0.0
  %1757 = vmatprep.subr.mxu0 0.0
  %1758 = vmatpush1.xpose.msra.mxu0 0.0
  %1759 = vmatprep.subr.mxu0 0.0
  %1760 = vmatpush1.xpose.msra.mxu0 0.0
  %1761 = vmatprep.subr.mxu0 0.0
  %1762 = vmatpush1.xpose.msra.mxu0 0.0
  %1763 = vmatprep.subr.mxu0 0.0
  %1764 = vmatpush1.xpose.msra.mxu0 0.0
  %1765 = vmatprep.subr.mxu0 0.0
  %1766 = vmatpush1.xpose.msra.mxu0 0.0
  %1767 = vmatprep.subr.mxu0 0.0
  %1768 = vmatpush1.xpose.msra.mxu0 0.0
  %1769 = vmatprep.subr.mxu0 0.0
  %1770 = vmatpush1.xpose.msra.mxu0 0.0
  %1771 = vmatprep.subr.mxu0 0.0
  %1772 = vmatpush1.xpose.msra.mxu0 0.0
  %1773 = vmatprep.subr.mxu0 0.0
  %1774 = vmatpush1.xpose.msra.mxu0 0.0
  %1775 = vmatprep.subr.mxu0 0.0
  %1776 = vmatpush1.xpose.msra.mxu0 0.0
  %1777 = vmatprep.subr.mxu0 0.0
  %1778 = vmatpush1.xpose.msra.mxu0 0.0
  %1779 = vmatprep.subr.mxu0 0.0
  %1780 = vmatpush1.xpose.msra.mxu0 0.0
  %1781 = vmatprep.subr.mxu0 0.0
  %1782 = vmatpush1.xpose.msra.mxu0 0.0
  %1783 = vmatprep.subr.mxu0 0.0
  %1784 = vmatpush1.xpose.msra.mxu0 0.0
  %1785 = vmatprep.subr.mxu0 0.0
  %1786 = vmatpush1.xpose.msra.mxu0 %v1753
  %1787 = vmatprep.subr.mxu0 0.0
  %1788 = vmatpush2.xpose.msra.mxu0 0.0
  %1789 = vmatprep.subr.mxu0 0.0
  %1790 = vmatpush2.xpose.msra.mxu0 0.0
  %1791 = vmatprep.subr.mxu0 0.0
  %1792 = vmatpush2.xpose.msra.mxu0 0.0
  %1793 = vmatprep.subr.mxu0 0.0
  %1794 = vmatpush2.xpose.msra.mxu0 0.0
  %1795 = vmatprep.subr.mxu0 0.0
  %1796 = vmatpush2.xpose.msra.mxu0 0.0
  %1797 = vmatprep.subr.mxu0 0.0
  %1798 = vmatpush2.xpose.msra.mxu0 0.0
  %1799 = vmatprep.subr.mxu0 0.0
  %1800 = vmatpush2.xpose.msra.mxu0 0.0
  %1801 = vmatprep.subr.mxu0 0.0
  %1802 = vmatpush2.xpose.msra.mxu0 0.0
  %1803 = vmatprep.subr.mxu0 0.0
  %1804 = vmatpush2.xpose.msra.mxu0 0.0
  %1805 = vmatprep.subr.mxu0 0.0
  %1806 = vmatpush2.xpose.msra.mxu0 0.0
  %1807 = vmatprep.subr.mxu0 0.0
  %1808 = vmatpush2.xpose.msra.mxu0 0.0
  %1809 = vmatprep.subr.mxu0 0.0
  %1810 = vmatpush2.xpose.msra.mxu0 0.0
  %1811 = vmatprep.subr.mxu0 0.0
  %1812 = vmatpush2.xpose.msra.mxu0 0.0
  %1813 = vmatprep.subr.mxu0 0.0
  %1814 = vmatpush2.xpose.msra.mxu0 0.0
  %1815 = vmatprep.subr.mxu0 0.0
  %1816 = vmatpush2.xpose.msra.mxu0 0.0
  %1817 = vmatprep.subr.mxu0 0.0
  %1818 = vmatpush2.xpose.msra.mxu0 0.0
  %1819 = vmatprep.mubr.f32.mxu0 0.0
  %1820 = vmatmul.mubr.f32.gmra.mxu0 %v210
  %v1821 = vpop.f32.mrf.mxu0
  %v1822 = vadd.f32 0.0, %v1821
  %v1823 = vpop.f32.mrf.mxu0
  %1824 = vdwg.mxu0
  %1825 = vmatprep.subr.mxu0 0.0
  %1826 = vmatpush1.xpose.msra.mxu0 0.0
  %1827 = vmatprep.subr.mxu0 0.0
  %1828 = vmatpush1.xpose.msra.mxu0 0.0
  %1829 = vmatprep.subr.mxu0 0.0
  %1830 = vmatpush1.xpose.msra.mxu0 0.0
  %1831 = vmatprep.subr.mxu0 0.0
  %1832 = vmatpush1.xpose.msra.mxu0 0.0
  %1833 = vmatprep.subr.mxu0 0.0
  %1834 = vmatpush1.xpose.msra.mxu0 0.0
  %1835 = vmatprep.subr.mxu0 0.0
  %1836 = vmatpush1.xpose.msra.mxu0 0.0
  %1837 = vmatprep.subr.mxu0 0.0
  %1838 = vmatpush1.xpose.msra.mxu0 0.0
  %1839 = vmatprep.subr.mxu0 0.0
  %1840 = vmatpush1.xpose.msra.mxu0 0.0
  %1841 = vmatprep.subr.mxu0 0.0
  %1842 = vmatpush1.xpose.msra.mxu0 0.0
  %1843 = vmatprep.subr.mxu0 0.0
  %1844 = vmatpush1.xpose.msra.mxu0 0.0
  %1845 = vmatprep.subr.mxu0 0.0
  %1846 = vmatpush1.xpose.msra.mxu0 0.0
  %1847 = vmatprep.subr.mxu0 0.0
  %1848 = vmatpush1.xpose.msra.mxu0 0.0
  %1849 = vmatprep.subr.mxu0 0.0
  %1850 = vmatpush1.xpose.msra.mxu0 0.0
  %1851 = vmatprep.subr.mxu0 0.0
  %1852 = vmatpush1.xpose.msra.mxu0 0.0
  %1853 = vmatprep.subr.mxu0 0.0
  %1854 = vmatpush1.xpose.msra.mxu0 0.0
  %1855 = vmatprep.subr.mxu0 0.0
  %1856 = vmatpush1.xpose.msra.mxu0 %v210
  %1857 = vmatprep.subr.mxu0 0.0
  %1858 = vmatpush2.xpose.msra.mxu0 0.0
  %1859 = vmatprep.subr.mxu0 0.0
  %1860 = vmatpush2.xpose.msra.mxu0 0.0
  %1861 = vmatprep.subr.mxu0 0.0
  %1862 = vmatpush2.xpose.msra.mxu0 0.0
  %1863 = vmatprep.subr.mxu0 0.0
  %1864 = vmatpush2.xpose.msra.mxu0 0.0
  %1865 = vmatprep.subr.mxu0 0.0
  %1866 = vmatpush2.xpose.msra.mxu0 0.0
  %1867 = vmatprep.subr.mxu0 0.0
  %1868 = vmatpush2.xpose.msra.mxu0 0.0
  %1869 = vmatprep.subr.mxu0 0.0
  %1870 = vmatpush2.xpose.msra.mxu0 0.0
  %1871 = vmatprep.subr.mxu0 0.0
  %1872 = vmatpush2.xpose.msra.mxu0 0.0
  %1873 = vmatprep.subr.mxu0 0.0
  %1874 = vmatpush2.xpose.msra.mxu0 0.0
  %1875 = vmatprep.subr.mxu0 0.0
  %1876 = vmatpush2.xpose.msra.mxu0 0.0
  %1877 = vmatprep.subr.mxu0 0.0
  %1878 = vmatpush2.xpose.msra.mxu0 0.0
  %1879 = vmatprep.subr.mxu0 0.0
  %1880 = vmatpush2.xpose.msra.mxu0 0.0
  %1881 = vmatprep.subr.mxu0 0.0
  %1882 = vmatpush2.xpose.msra.mxu0 0.0
  %1883 = vmatprep.subr.mxu0 0.0
  %1884 = vmatpush2.xpose.msra.mxu0 0.0
  %1885 = vmatprep.subr.mxu0 0.0
  %1886 = vmatpush2.xpose.msra.mxu0 0.0
  %1887 = vmatprep.subr.mxu0 0.0
  %1888 = vmatpush2.xpose.msra.mxu0 0.0
  %1889 = vmatprep.mubr.f32.mxu0 0.0
  %1890 = vmatmul.mubr.f32.gmra.mxu0 %v1753
  %v1891 = vpop.f32.mrf.mxu0
  %v1892 = vadd.f32 %v1822, %v1891
  %v1893 = vpop.f32.mrf.mxu0
  %1894 = vdwg.mxu0
  %v1895 = vmul.f32 %v1749, 2.0
  %v1896 = vsub.f32 %v1892, %v1895
  %vm1897 = vcmp.lt.f32.partialorder %v1896, 25.0
  %v1898 = vxor.u32 %v105, 2147483648
  %v1899 = vmul.f32 %v1898, 1.442695
  %v1900 = vpow.pop %v1899
  %v1901 = vadd.f32 %v1900, 1.0
  %v1902 = vrcp.pop %v1901
  %v1903 = vmul.f32 1.0, %v1902
  %v1904 = vtanh.pop %v105
  %v1905 = vmul.f32 %v1903, 0.0
  %1907 = vrot.lane.b32.xlu0 %v1904, 32
  %v1908 = vpop.permute.xlu0 %1907
  %v1910 = vmul.f32 %v1903, %v1908
  %1912 = vrot.lane.b32.xlu0 %v1910, 32
  %v1913 = vpop.permute.xlu0 %1912
  %v1915 = vadd.f32 %v1905, %v1913
  %v1916 = vtanh.pop %v1915
  %1918 = vrot.lane.b32.xlu0 %v1916, 32
  %v1919 = vpop.permute.xlu0 %1918
  %v1921 = vmul.f32 %v1903, %v1919
  %v1922 = vpack.c.bf16 %v1921, %v1921
  %1924 = vrot.lane.b32.xlu0 %v1922, 64
  %v1925 = vpop.permute.xlu0 %1924
  %v1930 = vunpack.c.l.b16 %v34
  %v1931 = vunpack.c.h.b16 %v34
  %v1932 = vunpack.c.l.b16 %v35
  %v1933 = vunpack.c.h.b16 %v35
  %v1934 = vunpack.c.l.b16 %v36
  %v1935 = vunpack.c.h.b16 %v36
  %v1936 = vunpack.c.l.b16 %v37
  %v1937 = vunpack.c.h.b16 %v37
  %v1938 = vpack.c.b16 %v1932, %v1930
  %v1939 = vpack.c.b16 %v1933, %v1931
  %v1940 = vpack.c.b16 %v1936, %v1934
  %v1941 = vpack.c.b16 %v1937, %v1935
  %vm1946 = vcmask 261120
  %v1948 = vsel %vm1946, %v1925, 0
  %1950 = vmatprep.subr.bf16.mxu0 0
  %1951 = vmatpush1.bf16.msra.mxu0 0
  %1952 = vmatprep.subr.bf16.mxu0 0
  %1953 = vmatpush1.bf16.msra.mxu0 0
  %1954 = vmatprep.subr.bf16.mxu0 0
  %1955 = vmatpush1.bf16.msra.mxu0 0
  %1956 = vmatprep.subr.bf16.mxu0 0
  %1957 = vmatpush1.bf16.msra.mxu0 0
  %1958 = vmatprep.subr.bf16.mxu0 0
  %1959 = vmatpush1.bf16.msra.mxu0 0
  %1960 = vmatprep.subr.bf16.mxu0 0
  %1961 = vmatpush1.bf16.msra.mxu0 0
  %1962 = vmatprep.subr.bf16.mxu0 %v1941
  %1963 = vmatpush1.bf16.msra.mxu0 %v1940
  %1964 = vmatprep.subr.bf16.mxu0 %v1939
  %1965 = vmatpush1.bf16.msra.mxu0 %v1938
  %1966 = vmatprep.subr.bf16.mxu0 0
  %1967 = vmatpush2.bf16.msra.mxu0 0
  %1968 = vmatprep.subr.bf16.mxu0 0
  %1969 = vmatpush2.bf16.msra.mxu0 0
  %1970 = vmatprep.subr.bf16.mxu0 0
  %1971 = vmatpush2.bf16.msra.mxu0 0
  %1972 = vmatprep.subr.bf16.mxu0 0
  %1973 = vmatpush2.bf16.msra.mxu0 0
  %1974 = vmatprep.subr.bf16.mxu0 0
  %1975 = vmatpush2.bf16.msra.mxu0 0
  %1976 = vmatprep.subr.bf16.mxu0 0
  %1977 = vmatpush2.bf16.msra.mxu0 0
  %1978 = vmatprep.subr.bf16.mxu0 0
  %1979 = vmatpush2.bf16.msra.mxu0 0
  %1980 = vmatprep.subr.bf16.mxu0 0
  %1981 = vmatpush2.bf16.msra.mxu0 0
  %1982 = vmatprep.mubr.bf16.mxu0 0
  %1983 = vmatmul.mubr.bf16.gmra.mxu0 %v1948
  %v1984 = vpop.f32.mrf.mxu0
  %v1985 = vadd.f32 0.0, %v1984
  %v1986 = vpop.f32.mrf.mxu0
  %v1987 = vadd.f32 0.0, %v1986
  %v1988 = vpop.f32.mrf.mxu0
  %v1989 = vpop.f32.mrf.mxu0
  %1990 = vdwg.mxu0
  %v1991 = vsel %vm357, 1, 0
  %v1992 = vcvt.s32.f32 %v1991
  %v1993 = vpack.c.bf16 %v1992, %v1992
  %v1994 = vpack.c.bf16 %v1985, %v1985
  %vm1995 = vcmask 64512
  %v1997 = vsel %vm1995, %v1993, 0
  %vm1999 = vcmask 1043456
  %v2001 = vsel %vm1999, %v1994, 0
  %2003 = vmatprep.subr.bf16.mxu0 0
  %2004 = vmatpush1.bf16.msra.mxu0 0
  %2005 = vmatprep.subr.bf16.mxu0 0
  %2006 = vmatpush1.bf16.msra.mxu0 0
  %2007 = vmatprep.subr.bf16.mxu0 0
  %2008 = vmatpush1.bf16.msra.mxu0 0
  %2009 = vmatprep.subr.bf16.mxu0 0
  %2010 = vmatpush1.bf16.msra.mxu0 0
  %2011 = vmatprep.subr.bf16.mxu0 0
  %2012 = vmatpush1.bf16.msra.mxu0 0
  %2013 = vmatprep.subr.bf16.mxu0 0
  %2014 = vmatpush1.bf16.msra.mxu0 0
  %2015 = vmatprep.subr.bf16.mxu0 0
  %2016 = vmatpush1.bf16.msra.mxu0 0
  %2017 = vmatprep.subr.bf16.mxu0 0
  %2018 = vmatpush1.bf16.msra.mxu0 %v2001
  %2019 = vmatprep.subr.bf16.mxu0 0
  %2020 = vmatpush2.bf16.msra.mxu0 0
  %2021 = vmatprep.subr.bf16.mxu0 0
  %2022 = vmatpush2.bf16.msra.mxu0 0
  %2023 = vmatprep.subr.bf16.mxu0 0
  %2024 = vmatpush2.bf16.msra.mxu0 0
  %2025 = vmatprep.subr.bf16.mxu0 0
  %2026 = vmatpush2.bf16.msra.mxu0 0
  %2027 = vmatprep.subr.bf16.mxu0 0
  %2028 = vmatpush2.bf16.msra.mxu0 0
  %2029 = vmatprep.subr.bf16.mxu0 0
  %2030 = vmatpush2.bf16.msra.mxu0 0
  %2031 = vmatprep.subr.bf16.mxu0 0
  %2032 = vmatpush2.bf16.msra.mxu0 0
  %2033 = vmatprep.subr.bf16.mxu0 0
  %2034 = vmatpush2.bf16.msra.mxu0 0
  %2035 = vmatprep.mubr.bf16.mxu0 0
  %2036 = vmatmul.mubr.bf16.gmra.mxu0 %v1997
  %v2037 = vpop.f32.mrf.mxu0
  %v2038 = vadd.f32 0.0, %v2037
  %v2039 = vpop.f32.mrf.mxu0
  %v2040 = vpop.f32.mrf.mxu0
  %v2041 = vpop.f32.mrf.mxu0
  %2042 = vdwg.mxu0
  %v2043 = vadd.f32 %v105, %v2038
  %v2044 = vadd.f32 %v2043, %v1987
  %v2045 = vxor.u32 %v2044, 2147483648
  %v2046 = vmul.f32 %v2045, 1.442695
  %v2047 = vpow.pop %v2046
  %v2048 = vadd.f32 %v2047, 1.0
  %v2049 = vrcp.pop %v2048
  %v2050 = vmul.f32 1.0, %v2049
  %v2051 = vtanh.pop %v2044
  %v2052 = vmul.f32 %v2050, %v1915
  %2054 = vrot.lane.b32.xlu0 %v2051, 32
  %v2055 = vpop.permute.xlu0 %2054
  %v2057 = vmul.f32 %v2050, %v2055
  %2059 = vrot.lane.b32.xlu0 %v2057, 32
  %v2060 = vpop.permute.xlu0 %2059
  %v2062 = vadd.f32 %v2052, %v2060
  %v2063 = vtanh.pop %v2062
  %2065 = vrot.lane.b32.xlu0 %v2063, 32
  %v2066 = vpop.permute.xlu0 %2065
  %v2068 = vmul.f32 %v2050, %v2066
  %v2069 = vpack.c.bf16 %v2068, %v2068
  %2071 = vrot.lane.b32.xlu0 %v2069, 64
  %v2072 = vpop.permute.xlu0 %2071
  %v2074 = vsel %vm1946, %v2072, 0
  %2076 = vmatprep.subr.bf16.mxu0 0
  %2077 = vmatpush1.bf16.msra.mxu0 0
  %2078 = vmatprep.subr.bf16.mxu0 0
  %2079 = vmatpush1.bf16.msra.mxu0 0
  %2080 = vmatprep.subr.bf16.mxu0 0
  %2081 = vmatpush1.bf16.msra.mxu0 0
  %2082 = vmatprep.subr.bf16.mxu0 0
  %2083 = vmatpush1.bf16.msra.mxu0 0
  %2084 = vmatprep.subr.bf16.mxu0 0
  %2085 = vmatpush1.bf16.msra.mxu0 0
  %2086 = vmatprep.subr.bf16.mxu0 0
  %2087 = vmatpush1.bf16.msra.mxu0 0
  %2088 = vmatprep.subr.bf16.mxu0 %v1941
  %2089 = vmatpush1.bf16.msra.mxu0 %v1940
  %2090 = vmatprep.subr.bf16.mxu0 %v1939
  %2091 = vmatpush1.bf16.msra.mxu0 %v1938
  %2092 = vmatprep.subr.bf16.mxu0 0
  %2093 = vmatpush2.bf16.msra.mxu0 0
  %2094 = vmatprep.subr.bf16.mxu0 0
  %2095 = vmatpush2.bf16.msra.mxu0 0
  %2096 = vmatprep.subr.bf16.mxu0 0
  %2097 = vmatpush2.bf16.msra.mxu0 0
  %2098 = vmatprep.subr.bf16.mxu0 0
  %2099 = vmatpush2.bf16.msra.mxu0 0
  %2100 = vmatprep.subr.bf16.mxu0 0
  %2101 = vmatpush2.bf16.msra.mxu0 0
  %2102 = vmatprep.subr.bf16.mxu0 0
  %2103 = vmatpush2.bf16.msra.mxu0 0
  %2104 = vmatprep.subr.bf16.mxu0 0
  %2105 = vmatpush2.bf16.msra.mxu0 0
  %2106 = vmatprep.subr.bf16.mxu0 0
  %2107 = vmatpush2.bf16.msra.mxu0 0
  %2108 = vmatprep.mubr.bf16.mxu0 0
  %2109 = vmatmul.mubr.bf16.gmra.mxu0 %v2074
  %v2110 = vpop.f32.mrf.mxu0
  %v2111 = vadd.f32 0.0, %v2110
  %v2112 = vpop.f32.mrf.mxu0
  %v2113 = vadd.f32 0.0, %v2112
  %v2114 = vpop.f32.mrf.mxu0
  %v2115 = vpop.f32.mrf.mxu0
  %2116 = vdwg.mxu0
  %v2117 = vsel %vm577, 1, 0
  %v2118 = vcvt.s32.f32 %v2117
  %v2119 = vpack.c.bf16 %v2118, %v2118
  %v2120 = vpack.c.bf16 %v2111, %v2111
  %v2122 = vsel %vm1995, %v2119, 0
  %v2125 = vsel %vm1999, %v2120, 0
  %2127 = vmatprep.subr.bf16.mxu0 0
  %2128 = vmatpush1.bf16.msra.mxu0 0
  %2129 = vmatprep.subr.bf16.mxu0 0
  %2130 = vmatpush1.bf16.msra.mxu0 0
  %2131 = vmatprep.subr.bf16.mxu0 0
  %2132 = vmatpush1.bf16.msra.mxu0 0
  %2133 = vmatprep.subr.bf16.mxu0 0
  %2134 = vmatpush1.bf16.msra.mxu0 0
  %2135 = vmatprep.subr.bf16.mxu0 0
  %2136 = vmatpush1.bf16.msra.mxu0 0
  %2137 = vmatprep.subr.bf16.mxu0 0
  %2138 = vmatpush1.bf16.msra.mxu0 0
  %2139 = vmatprep.subr.bf16.mxu0 0
  %2140 = vmatpush1.bf16.msra.mxu0 0
  %2141 = vmatprep.subr.bf16.mxu0 0
  %2142 = vmatpush1.bf16.msra.mxu0 %v2125
  %2143 = vmatprep.subr.bf16.mxu0 0
  %2144 = vmatpush2.bf16.msra.mxu0 0
  %2145 = vmatprep.subr.bf16.mxu0 0
  %2146 = vmatpush2.bf16.msra.mxu0 0
  %2147 = vmatprep.subr.bf16.mxu0 0
  %2148 = vmatpush2.bf16.msra.mxu0 0
  %2149 = vmatprep.subr.bf16.mxu0 0
  %2150 = vmatpush2.bf16.msra.mxu0 0
  %2151 = vmatprep.subr.bf16.mxu0 0
  %2152 = vmatpush2.bf16.msra.mxu0 0
  %2153 = vmatprep.subr.bf16.mxu0 0
  %2154 = vmatpush2.bf16.msra.mxu0 0
  %2155 = vmatprep.subr.bf16.mxu0 0
  %2156 = vmatpush2.bf16.msra.mxu0 0
  %2157 = vmatprep.subr.bf16.mxu0 0
  %2158 = vmatpush2.bf16.msra.mxu0 0
  %2159 = vmatprep.mubr.bf16.mxu0 0
  %2160 = vmatmul.mubr.bf16.gmra.mxu0 %v2122
  %v2161 = vpop.f32.mrf.mxu0
  %v2162 = vadd.f32 0.0, %v2161
  %v2163 = vpop.f32.mrf.mxu0
  %v2164 = vpop.f32.mrf.mxu0
  %v2165 = vpop.f32.mrf.mxu0
  %2166 = vdwg.mxu0
  %v2167 = vadd.f32 %v108, %v2162
  %v2168 = vadd.f32 %v2167, %v2113
  %v2169 = vxor.u32 %v2168, 2147483648
  %v2170 = vmul.f32 %v2169, 1.442695
  %v2171 = vpow.pop %v2170
  %v2172 = vadd.f32 %v2171, 1.0
  %v2173 = vrcp.pop %v2172
  %v2174 = vmul.f32 1.0, %v2173
  %v2175 = vtanh.pop %v2168
  %v2176 = vmul.f32 %v2174, %v2062
  %2178 = vrot.lane.b32.xlu0 %v2175, 32
  %v2179 = vpop.permute.xlu0 %2178
  %v2181 = vmul.f32 %v2174, %v2179
  %2183 = vrot.lane.b32.xlu0 %v2181, 32
  %v2184 = vpop.permute.xlu0 %2183
  %v2186 = vadd.f32 %v2176, %v2184
  %v2187 = vtanh.pop %v2186
  %2189 = vrot.lane.b32.xlu0 %v2187, 32
  %v2190 = vpop.permute.xlu0 %2189
  %v2192 = vmul.f32 %v2174, %v2190
  %v2193 = vpack.c.bf16 %v2192, %v2192
  %2195 = vrot.lane.b32.xlu0 %v2193, 64
  %v2196 = vpop.permute.xlu0 %2195
  %v2198 = vsel %vm1946, %v2196, 0
  %2200 = vmatprep.subr.bf16.mxu0 0
  %2201 = vmatpush1.bf16.msra.mxu0 0
  %2202 = vmatprep.subr.bf16.mxu0 0
  %2203 = vmatpush1.bf16.msra.mxu0 0
  %2204 = vmatprep.subr.bf16.mxu0 0
  %2205 = vmatpush1.bf16.msra.mxu0 0
  %2206 = vmatprep.subr.bf16.mxu0 0
  %2207 = vmatpush1.bf16.msra.mxu0 0
  %2208 = vmatprep.subr.bf16.mxu0 0
  %2209 = vmatpush1.bf16.msra.mxu0 0
  %2210 = vmatprep.subr.bf16.mxu0 0
  %2211 = vmatpush1.bf16.msra.mxu0 0
  %2212 = vmatprep.subr.bf16.mxu0 %v1941
  %2213 = vmatpush1.bf16.msra.mxu0 %v1940
  %2214 = vmatprep.subr.bf16.mxu0 %v1939
  %2215 = vmatpush1.bf16.msra.mxu0 %v1938
  %2216 = vmatprep.subr.bf16.mxu0 0
  %2217 = vmatpush2.bf16.msra.mxu0 0
  %2218 = vmatprep.subr.bf16.mxu0 0
  %2219 = vmatpush2.bf16.msra.mxu0 0
  %2220 = vmatprep.subr.bf16.mxu0 0
  %2221 = vmatpush2.bf16.msra.mxu0 0
  %2222 = vmatprep.subr.bf16.mxu0 0
  %2223 = vmatpush2.bf16.msra.mxu0 0
  %2224 = vmatprep.subr.bf16.mxu0 0
  %2225 = vmatpush2.bf16.msra.mxu0 0
  %2226 = vmatprep.subr.bf16.mxu0 0
  %2227 = vmatpush2.bf16.msra.mxu0 0
  %2228 = vmatprep.subr.bf16.mxu0 0
  %2229 = vmatpush2.bf16.msra.mxu0 0
  %2230 = vmatprep.subr.bf16.mxu0 0
  %2231 = vmatpush2.bf16.msra.mxu0 0
  %2232 = vmatprep.mubr.bf16.mxu0 0
  %2233 = vmatmul.mubr.bf16.gmra.mxu0 %v2198
  %v2234 = vpop.f32.mrf.mxu0
  %v2235 = vadd.f32 0.0, %v2234
  %v2236 = vpop.f32.mrf.mxu0
  %v2237 = vadd.f32 0.0, %v2236
  %v2238 = vpop.f32.mrf.mxu0
  %v2239 = vpop.f32.mrf.mxu0
  %2240 = vdwg.mxu0
  %v2241 = vsel %vm797, 1, 0
  %v2242 = vcvt.s32.f32 %v2241
  %v2243 = vpack.c.bf16 %v2242, %v2242
  %v2244 = vpack.c.bf16 %v2235, %v2235
  %v2246 = vsel %vm1995, %v2243, 0
  %v2249 = vsel %vm1999, %v2244, 0
  %2251 = vmatprep.subr.bf16.mxu0 0
  %2252 = vmatpush1.bf16.msra.mxu0 0
  %2253 = vmatprep.subr.bf16.mxu0 0
  %2254 = vmatpush1.bf16.msra.mxu0 0
  %2255 = vmatprep.subr.bf16.mxu0 0
  %2256 = vmatpush1.bf16.msra.mxu0 0
  %2257 = vmatprep.subr.bf16.mxu0 0
  %2258 = vmatpush1.bf16.msra.mxu0 0
  %2259 = vmatprep.subr.bf16.mxu0 0
  %2260 = vmatpush1.bf16.msra.mxu0 0
  %2261 = vmatprep.subr.bf16.mxu0 0
  %2262 = vmatpush1.bf16.msra.mxu0 0
  %2263 = vmatprep.subr.bf16.mxu0 0
  %2264 = vmatpush1.bf16.msra.mxu0 0
  %2265 = vmatprep.subr.bf16.mxu0 0
  %2266 = vmatpush1.bf16.msra.mxu0 %v2249
  %2267 = vmatprep.subr.bf16.mxu0 0
  %2268 = vmatpush2.bf16.msra.mxu0 0
  %2269 = vmatprep.subr.bf16.mxu0 0
  %2270 = vmatpush2.bf16.msra.mxu0 0
  %2271 = vmatprep.subr.bf16.mxu0 0
  %2272 = vmatpush2.bf16.msra.mxu0 0
  %2273 = vmatprep.subr.bf16.mxu0 0
  %2274 = vmatpush2.bf16.msra.mxu0 0
  %2275 = vmatprep.subr.bf16.mxu0 0
  %2276 = vmatpush2.bf16.msra.mxu0 0
  %2277 = vmatprep.subr.bf16.mxu0 0
  %2278 = vmatpush2.bf16.msra.mxu0 0
  %2279 = vmatprep.subr.bf16.mxu0 0
  %2280 = vmatpush2.bf16.msra.mxu0 0
  %2281 = vmatprep.subr.bf16.mxu0 0
  %2282 = vmatpush2.bf16.msra.mxu0 0
  %2283 = vmatprep.mubr.bf16.mxu0 0
  %2284 = vmatmul.mubr.bf16.gmra.mxu0 %v2246
  %v2285 = vpop.f32.mrf.mxu0
  %v2286 = vadd.f32 0.0, %v2285
  %v2287 = vpop.f32.mrf.mxu0
  %v2288 = vpop.f32.mrf.mxu0
  %v2289 = vpop.f32.mrf.mxu0
  %2290 = vdwg.mxu0
  %v2291 = vadd.f32 %v113, %v2286
  %v2292 = vadd.f32 %v2291, %v2237
  %v2293 = vxor.u32 %v2292, 2147483648
  %v2294 = vmul.f32 %v2293, 1.442695
  %v2295 = vpow.pop %v2294
  %v2296 = vadd.f32 %v2295, 1.0
  %v2297 = vrcp.pop %v2296
  %v2298 = vmul.f32 1.0, %v2297
  %v2299 = vtanh.pop %v2292
  %v2300 = vmul.f32 %v2298, %v2186
  %2302 = vrot.lane.b32.xlu0 %v2299, 32
  %v2303 = vpop.permute.xlu0 %2302
  %v2305 = vmul.f32 %v2298, %v2303
  %2307 = vrot.lane.b32.xlu0 %v2305, 32
  %v2308 = vpop.permute.xlu0 %2307
  %v2310 = vadd.f32 %v2300, %v2308
  %v2311 = vtanh.pop %v2310
  %2313 = vrot.lane.b32.xlu0 %v2311, 32
  %v2314 = vpop.permute.xlu0 %2313
  %v2316 = vmul.f32 %v2298, %v2314
  %v2317 = vpack.c.bf16 %v2316, %v2316
  %2319 = vrot.lane.b32.xlu0 %v2317, 64
  %v2320 = vpop.permute.xlu0 %2319
  %v2322 = vsel %vm1946, %v2320, 0
  %2324 = vmatprep.subr.bf16.mxu0 0
  %2325 = vmatpush1.bf16.msra.mxu0 0
  %2326 = vmatprep.subr.bf16.mxu0 0
  %2327 = vmatpush1.bf16.msra.mxu0 0
  %2328 = vmatprep.subr.bf16.mxu0 0
  %2329 = vmatpush1.bf16.msra.mxu0 0
  %2330 = vmatprep.subr.bf16.mxu0 0
  %2331 = vmatpush1.bf16.msra.mxu0 0
  %2332 = vmatprep.subr.bf16.mxu0 0
  %2333 = vmatpush1.bf16.msra.mxu0 0
  %2334 = vmatprep.subr.bf16.mxu0 0
  %2335 = vmatpush1.bf16.msra.mxu0 0
  %2336 = vmatprep.subr.bf16.mxu0 %v1941
  %2337 = vmatpush1.bf16.msra.mxu0 %v1940
  %2338 = vmatprep.subr.bf16.mxu0 %v1939
  %2339 = vmatpush1.bf16.msra.mxu0 %v1938
  %2340 = vmatprep.subr.bf16.mxu0 0
  %2341 = vmatpush2.bf16.msra.mxu0 0
  %2342 = vmatprep.subr.bf16.mxu0 0
  %2343 = vmatpush2.bf16.msra.mxu0 0
  %2344 = vmatprep.subr.bf16.mxu0 0
  %2345 = vmatpush2.bf16.msra.mxu0 0
  %2346 = vmatprep.subr.bf16.mxu0 0
  %2347 = vmatpush2.bf16.msra.mxu0 0
  %2348 = vmatprep.subr.bf16.mxu0 0
  %2349 = vmatpush2.bf16.msra.mxu0 0
  %2350 = vmatprep.subr.bf16.mxu0 0
  %2351 = vmatpush2.bf16.msra.mxu0 0
  %2352 = vmatprep.subr.bf16.mxu0 0
  %2353 = vmatpush2.bf16.msra.mxu0 0
  %2354 = vmatprep.subr.bf16.mxu0 0
  %2355 = vmatpush2.bf16.msra.mxu0 0
  %2356 = vmatprep.mubr.bf16.mxu0 0
  %2357 = vmatmul.mubr.bf16.gmra.mxu0 %v2322
  %v2358 = vpop.f32.mrf.mxu0
  %v2359 = vadd.f32 0.0, %v2358
  %v2360 = vpop.f32.mrf.mxu0
  %v2361 = vadd.f32 0.0, %v2360
  %v2362 = vpop.f32.mrf.mxu0
  %v2363 = vpop.f32.mrf.mxu0
  %2364 = vdwg.mxu0
  %v2365 = vsel %vm1017, 1, 0
  %v2366 = vcvt.s32.f32 %v2365
  %v2367 = vpack.c.bf16 %v2366, %v2366
  %v2368 = vpack.c.bf16 %v2359, %v2359
  %v2370 = vsel %vm1995, %v2367, 0
  %v2373 = vsel %vm1999, %v2368, 0
  %2375 = vmatprep.subr.bf16.mxu0 0
  %2376 = vmatpush1.bf16.msra.mxu0 0
  %2377 = vmatprep.subr.bf16.mxu0 0
  %2378 = vmatpush1.bf16.msra.mxu0 0
  %2379 = vmatprep.subr.bf16.mxu0 0
  %2380 = vmatpush1.bf16.msra.mxu0 0
  %2381 = vmatprep.subr.bf16.mxu0 0
  %2382 = vmatpush1.bf16.msra.mxu0 0
  %2383 = vmatprep.subr.bf16.mxu0 0
  %2384 = vmatpush1.bf16.msra.mxu0 0
  %2385 = vmatprep.subr.bf16.mxu0 0
  %2386 = vmatpush1.bf16.msra.mxu0 0
  %2387 = vmatprep.subr.bf16.mxu0 0
  %2388 = vmatpush1.bf16.msra.mxu0 0
  %2389 = vmatprep.subr.bf16.mxu0 0
  %2390 = vmatpush1.bf16.msra.mxu0 %v2373
  %2391 = vmatprep.subr.bf16.mxu0 0
  %2392 = vmatpush2.bf16.msra.mxu0 0
  %2393 = vmatprep.subr.bf16.mxu0 0
  %2394 = vmatpush2.bf16.msra.mxu0 0
  %2395 = vmatprep.subr.bf16.mxu0 0
  %2396 = vmatpush2.bf16.msra.mxu0 0
  %2397 = vmatprep.subr.bf16.mxu0 0
  %2398 = vmatpush2.bf16.msra.mxu0 0
  %2399 = vmatprep.subr.bf16.mxu0 0
  %2400 = vmatpush2.bf16.msra.mxu0 0
  %2401 = vmatprep.subr.bf16.mxu0 0
  %2402 = vmatpush2.bf16.msra.mxu0 0
  %2403 = vmatprep.subr.bf16.mxu0 0
  %2404 = vmatpush2.bf16.msra.mxu0 0
  %2405 = vmatprep.subr.bf16.mxu0 0
  %2406 = vmatpush2.bf16.msra.mxu0 0
  %2407 = vmatprep.mubr.bf16.mxu0 0
  %2408 = vmatmul.mubr.bf16.gmra.mxu0 %v2370
  %v2409 = vpop.f32.mrf.mxu0
  %v2410 = vadd.f32 0.0, %v2409
  %v2411 = vpop.f32.mrf.mxu0
  %v2412 = vpop.f32.mrf.mxu0
  %v2413 = vpop.f32.mrf.mxu0
  %2414 = vdwg.mxu0
  %v2415 = vadd.f32 %v116, %v2410
  %v2416 = vadd.f32 %v2415, %v2361
  %v2417 = vxor.u32 %v2416, 2147483648
  %v2418 = vmul.f32 %v2417, 1.442695
  %v2419 = vpow.pop %v2418
  %v2420 = vadd.f32 %v2419, 1.0
  %v2421 = vrcp.pop %v2420
  %v2422 = vmul.f32 1.0, %v2421
  %v2423 = vtanh.pop %v2416
  %v2424 = vmul.f32 %v2422, %v2310
  %2426 = vrot.lane.b32.xlu0 %v2423, 32
  %v2427 = vpop.permute.xlu0 %2426
  %v2429 = vmul.f32 %v2422, %v2427
  %2431 = vrot.lane.b32.xlu0 %v2429, 32
  %v2432 = vpop.permute.xlu0 %2431
  %v2434 = vadd.f32 %v2424, %v2432
  %v2435 = vtanh.pop %v2434
  %2437 = vrot.lane.b32.xlu0 %v2435, 32
  %v2438 = vpop.permute.xlu0 %2437
  %v2440 = vmul.f32 %v2422, %v2438
  %v2441 = vpack.c.bf16 %v2440, %v2440
  %2443 = vrot.lane.b32.xlu0 %v2441, 64
  %v2444 = vpop.permute.xlu0 %2443
  %v2446 = vsel %vm1946, %v2444, 0
  %2448 = vmatprep.subr.bf16.mxu0 0
  %2449 = vmatpush1.bf16.msra.mxu0 0
  %2450 = vmatprep.subr.bf16.mxu0 0
  %2451 = vmatpush1.bf16.msra.mxu0 0
  %2452 = vmatprep.subr.bf16.mxu0 0
  %2453 = vmatpush1.bf16.msra.mxu0 0
  %2454 = vmatprep.subr.bf16.mxu0 0
  %2455 = vmatpush1.bf16.msra.mxu0 0
  %2456 = vmatprep.subr.bf16.mxu0 0
  %2457 = vmatpush1.bf16.msra.mxu0 0
  %2458 = vmatprep.subr.bf16.mxu0 0
  %2459 = vmatpush1.bf16.msra.mxu0 0
  %2460 = vmatprep.subr.bf16.mxu0 %v1941
  %2461 = vmatpush1.bf16.msra.mxu0 %v1940
  %2462 = vmatprep.subr.bf16.mxu0 %v1939
  %2463 = vmatpush1.bf16.msra.mxu0 %v1938
  %2464 = vmatprep.subr.bf16.mxu0 0
  %2465 = vmatpush2.bf16.msra.mxu0 0
  %2466 = vmatprep.subr.bf16.mxu0 0
  %2467 = vmatpush2.bf16.msra.mxu0 0
  %2468 = vmatprep.subr.bf16.mxu0 0
  %2469 = vmatpush2.bf16.msra.mxu0 0
  %2470 = vmatprep.subr.bf16.mxu0 0
  %2471 = vmatpush2.bf16.msra.mxu0 0
  %2472 = vmatprep.subr.bf16.mxu0 0
  %2473 = vmatpush2.bf16.msra.mxu0 0
  %2474 = vmatprep.subr.bf16.mxu0 0
  %2475 = vmatpush2.bf16.msra.mxu0 0
  %2476 = vmatprep.subr.bf16.mxu0 0
  %2477 = vmatpush2.bf16.msra.mxu0 0
  %2478 = vmatprep.subr.bf16.mxu0 0
  %2479 = vmatpush2.bf16.msra.mxu0 0
  %2480 = vmatprep.mubr.bf16.mxu0 0
  %2481 = vmatmul.mubr.bf16.gmra.mxu0 %v2446
  %v2482 = vpop.f32.mrf.mxu0
  %v2483 = vadd.f32 0.0, %v2482
  %v2484 = vpop.f32.mrf.mxu0
  %v2485 = vadd.f32 0.0, %v2484
  %v2486 = vpop.f32.mrf.mxu0
  %v2487 = vpop.f32.mrf.mxu0
  %2488 = vdwg.mxu0
  %v2489 = vsel %vm1237, 1, 0
  %v2490 = vcvt.s32.f32 %v2489
  %v2491 = vpack.c.bf16 %v2490, %v2490
  %v2492 = vpack.c.bf16 %v2483, %v2483
  %v2494 = vsel %vm1995, %v2491, 0
  %v2497 = vsel %vm1999, %v2492, 0
  %2499 = vmatprep.subr.bf16.mxu0 0
  %2500 = vmatpush1.bf16.msra.mxu0 0
  %2501 = vmatprep.subr.bf16.mxu0 0
  %2502 = vmatpush1.bf16.msra.mxu0 0
  %2503 = vmatprep.subr.bf16.mxu0 0
  %2504 = vmatpush1.bf16.msra.mxu0 0
  %2505 = vmatprep.subr.bf16.mxu0 0
  %2506 = vmatpush1.bf16.msra.mxu0 0
  %2507 = vmatprep.subr.bf16.mxu0 0
  %2508 = vmatpush1.bf16.msra.mxu0 0
  %2509 = vmatprep.subr.bf16.mxu0 0
  %2510 = vmatpush1.bf16.msra.mxu0 0
  %2511 = vmatprep.subr.bf16.mxu0 0
  %2512 = vmatpush1.bf16.msra.mxu0 0
  %2513 = vmatprep.subr.bf16.mxu0 0
  %2514 = vmatpush1.bf16.msra.mxu0 %v2497
  %2515 = vmatprep.subr.bf16.mxu0 0
  %2516 = vmatpush2.bf16.msra.mxu0 0
  %2517 = vmatprep.subr.bf16.mxu0 0
  %2518 = vmatpush2.bf16.msra.mxu0 0
  %2519 = vmatprep.subr.bf16.mxu0 0
  %2520 = vmatpush2.bf16.msra.mxu0 0
  %2521 = vmatprep.subr.bf16.mxu0 0
  %2522 = vmatpush2.bf16.msra.mxu0 0
  %2523 = vmatprep.subr.bf16.mxu0 0
  %2524 = vmatpush2.bf16.msra.mxu0 0
  %2525 = vmatprep.subr.bf16.mxu0 0
  %2526 = vmatpush2.bf16.msra.mxu0 0
  %2527 = vmatprep.subr.bf16.mxu0 0
  %2528 = vmatpush2.bf16.msra.mxu0 0
  %2529 = vmatprep.subr.bf16.mxu0 0
  %2530 = vmatpush2.bf16.msra.mxu0 0
  %2531 = vmatprep.mubr.bf16.mxu0 0
  %2532 = vmatmul.mubr.bf16.gmra.mxu0 %v2494
  %v2533 = vpop.f32.mrf.mxu0
  %v2534 = vadd.f32 0.0, %v2533
  %v2535 = vpop.f32.mrf.mxu0
  %v2536 = vpop.f32.mrf.mxu0
  %v2537 = vpop.f32.mrf.mxu0
  %2538 = vdwg.mxu0
  %v2539 = vadd.f32 %v121, %v2534
  %v2540 = vadd.f32 %v2539, %v2485
  %v2541 = vxor.u32 %v2540, 2147483648
  %v2542 = vmul.f32 %v2541, 1.442695
  %v2543 = vpow.pop %v2542
  %v2544 = vadd.f32 %v2543, 1.0
  %v2545 = vrcp.pop %v2544
  %v2546 = vmul.f32 1.0, %v2545
  %v2547 = vtanh.pop %v2540
  %v2548 = vmul.f32 %v2546, %v2434
  %2550 = vrot.lane.b32.xlu0 %v2547, 32
  %v2551 = vpop.permute.xlu0 %2550
  %v2553 = vmul.f32 %v2546, %v2551
  %2555 = vrot.lane.b32.xlu0 %v2553, 32
  %v2556 = vpop.permute.xlu0 %2555
  %v2558 = vadd.f32 %v2548, %v2556
  %v2559 = vtanh.pop %v2558
  %2561 = vrot.lane.b32.xlu0 %v2559, 32
  %v2562 = vpop.permute.xlu0 %2561
  %v2564 = vmul.f32 %v2546, %v2562
  %v2565 = vpack.c.bf16 %v2564, %v2564
  %2567 = vrot.lane.b32.xlu0 %v2565, 64
  %v2568 = vpop.permute.xlu0 %2567
  %v2570 = vsel %vm1946, %v2568, 0
  %2572 = vmatprep.subr.bf16.mxu0 0
  %2573 = vmatpush1.bf16.msra.mxu0 0
  %2574 = vmatprep.subr.bf16.mxu0 0
  %2575 = vmatpush1.bf16.msra.mxu0 0
  %2576 = vmatprep.subr.bf16.mxu0 0
  %2577 = vmatpush1.bf16.msra.mxu0 0
  %2578 = vmatprep.subr.bf16.mxu0 0
  %2579 = vmatpush1.bf16.msra.mxu0 0
  %2580 = vmatprep.subr.bf16.mxu0 0
  %2581 = vmatpush1.bf16.msra.mxu0 0
  %2582 = vmatprep.subr.bf16.mxu0 0
  %2583 = vmatpush1.bf16.msra.mxu0 0
  %2584 = vmatprep.subr.bf16.mxu0 %v1941
  %2585 = vmatpush1.bf16.msra.mxu0 %v1940
  %2586 = vmatprep.subr.bf16.mxu0 %v1939
  %2587 = vmatpush1.bf16.msra.mxu0 %v1938
  %2588 = vmatprep.subr.bf16.mxu0 0
  %2589 = vmatpush2.bf16.msra.mxu0 0
  %2590 = vmatprep.subr.bf16.mxu0 0
  %2591 = vmatpush2.bf16.msra.mxu0 0
  %2592 = vmatprep.subr.bf16.mxu0 0
  %2593 = vmatpush2.bf16.msra.mxu0 0
  %2594 = vmatprep.subr.bf16.mxu0 0
  %2595 = vmatpush2.bf16.msra.mxu0 0
  %2596 = vmatprep.subr.bf16.mxu0 0
  %2597 = vmatpush2.bf16.msra.mxu0 0
  %2598 = vmatprep.subr.bf16.mxu0 0
  %2599 = vmatpush2.bf16.msra.mxu0 0
  %2600 = vmatprep.subr.bf16.mxu0 0
  %2601 = vmatpush2.bf16.msra.mxu0 0
  %2602 = vmatprep.subr.bf16.mxu0 0
  %2603 = vmatpush2.bf16.msra.mxu0 0
  %2604 = vmatprep.mubr.bf16.mxu0 0
  %2605 = vmatmul.mubr.bf16.gmra.mxu0 %v2570
  %v2606 = vpop.f32.mrf.mxu0
  %v2607 = vadd.f32 0.0, %v2606
  %v2608 = vpop.f32.mrf.mxu0
  %v2609 = vadd.f32 0.0, %v2608
  %v2610 = vpop.f32.mrf.mxu0
  %v2611 = vpop.f32.mrf.mxu0
  %2612 = vdwg.mxu0
  %v2613 = vsel %vm1457, 1, 0
  %v2614 = vcvt.s32.f32 %v2613
  %v2615 = vpack.c.bf16 %v2614, %v2614
  %v2616 = vpack.c.bf16 %v2607, %v2607
  %v2618 = vsel %vm1995, %v2615, 0
  %v2621 = vsel %vm1999, %v2616, 0
  %2623 = vmatprep.subr.bf16.mxu0 0
  %2624 = vmatpush1.bf16.msra.mxu0 0
  %2625 = vmatprep.subr.bf16.mxu0 0
  %2626 = vmatpush1.bf16.msra.mxu0 0
  %2627 = vmatprep.subr.bf16.mxu0 0
  %2628 = vmatpush1.bf16.msra.mxu0 0
  %2629 = vmatprep.subr.bf16.mxu0 0
  %2630 = vmatpush1.bf16.msra.mxu0 0
  %2631 = vmatprep.subr.bf16.mxu0 0
  %2632 = vmatpush1.bf16.msra.mxu0 0
  %2633 = vmatprep.subr.bf16.mxu0 0
  %2634 = vmatpush1.bf16.msra.mxu0 0
  %2635 = vmatprep.subr.bf16.mxu0 0
  %2636 = vmatpush1.bf16.msra.mxu0 0
  %2637 = vmatprep.subr.bf16.mxu0 0
  %2638 = vmatpush1.bf16.msra.mxu0 %v2621
  %2639 = vmatprep.subr.bf16.mxu0 0
  %2640 = vmatpush2.bf16.msra.mxu0 0
  %2641 = vmatprep.subr.bf16.mxu0 0
  %2642 = vmatpush2.bf16.msra.mxu0 0
  %2643 = vmatprep.subr.bf16.mxu0 0
  %2644 = vmatpush2.bf16.msra.mxu0 0
  %2645 = vmatprep.subr.bf16.mxu0 0
  %2646 = vmatpush2.bf16.msra.mxu0 0
  %2647 = vmatprep.subr.bf16.mxu0 0
  %2648 = vmatpush2.bf16.msra.mxu0 0
  %2649 = vmatprep.subr.bf16.mxu0 0
  %2650 = vmatpush2.bf16.msra.mxu0 0
  %2651 = vmatprep.subr.bf16.mxu0 0
  %2652 = vmatpush2.bf16.msra.mxu0 0
  %2653 = vmatprep.subr.bf16.mxu0 0
  %2654 = vmatpush2.bf16.msra.mxu0 0
  %2655 = vmatprep.mubr.bf16.mxu0 0
  %2656 = vmatmul.mubr.bf16.gmra.mxu0 %v2618
  %v2657 = vpop.f32.mrf.mxu0
  %v2658 = vadd.f32 0.0, %v2657
  %v2659 = vpop.f32.mrf.mxu0
  %v2660 = vpop.f32.mrf.mxu0
  %v2661 = vpop.f32.mrf.mxu0
  %2662 = vdwg.mxu0
  %v2663 = vadd.f32 %v124, %v2658
  %v2664 = vadd.f32 %v2663, %v2609
  %v2665 = vxor.u32 %v2664, 2147483648
  %v2666 = vmul.f32 %v2665, 1.442695
  %v2667 = vpow.pop %v2666
  %v2668 = vadd.f32 %v2667, 1.0
  %v2669 = vrcp.pop %v2668
  %v2670 = vmul.f32 1.0, %v2669
  %v2671 = vtanh.pop %v2664
  %v2672 = vmul.f32 %v2670, %v2558
  %2674 = vrot.lane.b32.xlu0 %v2671, 32
  %v2675 = vpop.permute.xlu0 %2674
  %v2677 = vmul.f32 %v2670, %v2675
  %2679 = vrot.lane.b32.xlu0 %v2677, 32
  %v2680 = vpop.permute.xlu0 %2679
  %v2682 = vadd.f32 %v2672, %v2680
  %v2683 = vtanh.pop %v2682
  %2685 = vrot.lane.b32.xlu0 %v2683, 32
  %v2686 = vpop.permute.xlu0 %2685
  %v2688 = vmul.f32 %v2670, %v2686
  %v2689 = vpack.c.bf16 %v2688, %v2688
  %2691 = vrot.lane.b32.xlu0 %v2689, 64
  %v2692 = vpop.permute.xlu0 %2691
  %v2694 = vsel %vm1946, %v2692, 0
  %2696 = vmatprep.subr.bf16.mxu0 0
  %2697 = vmatpush1.bf16.msra.mxu0 0
  %2698 = vmatprep.subr.bf16.mxu0 0
  %2699 = vmatpush1.bf16.msra.mxu0 0
  %2700 = vmatprep.subr.bf16.mxu0 0
  %2701 = vmatpush1.bf16.msra.mxu0 0
  %2702 = vmatprep.subr.bf16.mxu0 0
  %2703 = vmatpush1.bf16.msra.mxu0 0
  %2704 = vmatprep.subr.bf16.mxu0 0
  %2705 = vmatpush1.bf16.msra.mxu0 0
  %2706 = vmatprep.subr.bf16.mxu0 0
  %2707 = vmatpush1.bf16.msra.mxu0 0
  %2708 = vmatprep.subr.bf16.mxu0 %v1941
  %2709 = vmatpush1.bf16.msra.mxu0 %v1940
  %2710 = vmatprep.subr.bf16.mxu0 %v1939
  %2711 = vmatpush1.bf16.msra.mxu0 %v1938
  %2712 = vmatprep.subr.bf16.mxu0 0
  %2713 = vmatpush2.bf16.msra.mxu0 0
  %2714 = vmatprep.subr.bf16.mxu0 0
  %2715 = vmatpush2.bf16.msra.mxu0 0
  %2716 = vmatprep.subr.bf16.mxu0 0
  %2717 = vmatpush2.bf16.msra.mxu0 0
  %2718 = vmatprep.subr.bf16.mxu0 0
  %2719 = vmatpush2.bf16.msra.mxu0 0
  %2720 = vmatprep.subr.bf16.mxu0 0
  %2721 = vmatpush2.bf16.msra.mxu0 0
  %2722 = vmatprep.subr.bf16.mxu0 0
  %2723 = vmatpush2.bf16.msra.mxu0 0
  %2724 = vmatprep.subr.bf16.mxu0 0
  %2725 = vmatpush2.bf16.msra.mxu0 0
  %2726 = vmatprep.subr.bf16.mxu0 0
  %2727 = vmatpush2.bf16.msra.mxu0 0
  %2728 = vmatprep.mubr.bf16.mxu0 0
  %2729 = vmatmul.mubr.bf16.gmra.mxu0 %v2694
  %v2730 = vpop.f32.mrf.mxu0
  %v2731 = vadd.f32 0.0, %v2730
  %v2732 = vpop.f32.mrf.mxu0
  %v2733 = vadd.f32 0.0, %v2732
  %v2734 = vpop.f32.mrf.mxu0
  %v2735 = vpop.f32.mrf.mxu0
  %2736 = vdwg.mxu0
  %v2737 = vsel %vm1677, 1, 0
  %v2738 = vcvt.s32.f32 %v2737
  %v2739 = vpack.c.bf16 %v2738, %v2738
  %v2740 = vpack.c.bf16 %v2731, %v2731
  %v2742 = vsel %vm1995, %v2739, 0
  %v2745 = vsel %vm1999, %v2740, 0
  %2747 = vmatprep.subr.bf16.mxu0 0
  %2748 = vmatpush1.bf16.msra.mxu0 0
  %2749 = vmatprep.subr.bf16.mxu0 0
  %2750 = vmatpush1.bf16.msra.mxu0 0
  %2751 = vmatprep.subr.bf16.mxu0 0
  %2752 = vmatpush1.bf16.msra.mxu0 0
  %2753 = vmatprep.subr.bf16.mxu0 0
  %2754 = vmatpush1.bf16.msra.mxu0 0
  %2755 = vmatprep.subr.bf16.mxu0 0
  %2756 = vmatpush1.bf16.msra.mxu0 0
  %2757 = vmatprep.subr.bf16.mxu0 0
  %2758 = vmatpush1.bf16.msra.mxu0 0
  %2759 = vmatprep.subr.bf16.mxu0 0
  %2760 = vmatpush1.bf16.msra.mxu0 0
  %2761 = vmatprep.subr.bf16.mxu0 0
  %2762 = vmatpush1.bf16.msra.mxu0 %v2745
  %2763 = vmatprep.subr.bf16.mxu0 0
  %2764 = vmatpush2.bf16.msra.mxu0 0
  %2765 = vmatprep.subr.bf16.mxu0 0
  %2766 = vmatpush2.bf16.msra.mxu0 0
  %2767 = vmatprep.subr.bf16.mxu0 0
  %2768 = vmatpush2.bf16.msra.mxu0 0
  %2769 = vmatprep.subr.bf16.mxu0 0
  %2770 = vmatpush2.bf16.msra.mxu0 0
  %2771 = vmatprep.subr.bf16.mxu0 0
  %2772 = vmatpush2.bf16.msra.mxu0 0
  %2773 = vmatprep.subr.bf16.mxu0 0
  %2774 = vmatpush2.bf16.msra.mxu0 0
  %2775 = vmatprep.subr.bf16.mxu0 0
  %2776 = vmatpush2.bf16.msra.mxu0 0
  %2777 = vmatprep.subr.bf16.mxu0 0
  %2778 = vmatpush2.bf16.msra.mxu0 0
  %2779 = vmatprep.mubr.bf16.mxu0 0
  %2780 = vmatmul.mubr.bf16.gmra.mxu0 %v2742
  %v2781 = vpop.f32.mrf.mxu0
  %v2782 = vadd.f32 0.0, %v2781
  %v2783 = vpop.f32.mrf.mxu0
  %v2784 = vpop.f32.mrf.mxu0
  %v2785 = vpop.f32.mrf.mxu0
  %2786 = vdwg.mxu0
  %v2787 = vadd.f32 %v129, %v2782
  %v2788 = vadd.f32 %v2787, %v2733
  %v2789 = vxor.u32 %v2788, 2147483648
  %v2790 = vmul.f32 %v2789, 1.442695
  %v2791 = vpow.pop %v2790
  %v2792 = vadd.f32 %v2791, 1.0
  %v2793 = vrcp.pop %v2792
  %v2794 = vmul.f32 1.0, %v2793
  %v2795 = vtanh.pop %v2788
  %v2796 = vmul.f32 %v2794, %v2682
  %2798 = vrot.lane.b32.xlu0 %v2795, 32
  %v2799 = vpop.permute.xlu0 %2798
  %v2801 = vmul.f32 %v2794, %v2799
  %2803 = vrot.lane.b32.xlu0 %v2801, 32
  %v2804 = vpop.permute.xlu0 %2803
  %v2806 = vadd.f32 %v2796, %v2804
  %v2807 = vtanh.pop %v2806
  %2809 = vrot.lane.b32.xlu0 %v2807, 32
  %v2810 = vpop.permute.xlu0 %2809
  %v2812 = vmul.f32 %v2794, %v2810
  %v2813 = vpack.c.bf16 %v2812, %v2812
  %2815 = vrot.lane.b32.xlu0 %v2813, 64
  %v2816 = vpop.permute.xlu0 %2815
  %v2818 = vsel %vm1946, %v2816, 0
  %2820 = vmatprep.subr.bf16.mxu0 0
  %2821 = vmatpush1.bf16.msra.mxu0 0
  %2822 = vmatprep.subr.bf16.mxu0 0
  %2823 = vmatpush1.bf16.msra.mxu0 0
  %2824 = vmatprep.subr.bf16.mxu0 0
  %2825 = vmatpush1.bf16.msra.mxu0 0
  %2826 = vmatprep.subr.bf16.mxu0 0
  %2827 = vmatpush1.bf16.msra.mxu0 0
  %2828 = vmatprep.subr.bf16.mxu0 0
  %2829 = vmatpush1.bf16.msra.mxu0 0
  %2830 = vmatprep.subr.bf16.mxu0 0
  %2831 = vmatpush1.bf16.msra.mxu0 0
  %2832 = vmatprep.subr.bf16.mxu0 %v1941
  %2833 = vmatpush1.bf16.msra.mxu0 %v1940
  %2834 = vmatprep.subr.bf16.mxu0 %v1939
  %2835 = vmatpush1.bf16.msra.mxu0 %v1938
  %2836 = vmatprep.subr.bf16.mxu0 0
  %2837 = vmatpush2.bf16.msra.mxu0 0
  %2838 = vmatprep.subr.bf16.mxu0 0
  %2839 = vmatpush2.bf16.msra.mxu0 0
  %2840 = vmatprep.subr.bf16.mxu0 0
  %2841 = vmatpush2.bf16.msra.mxu0 0
  %2842 = vmatprep.subr.bf16.mxu0 0
  %2843 = vmatpush2.bf16.msra.mxu0 0
  %2844 = vmatprep.subr.bf16.mxu0 0
  %2845 = vmatpush2.bf16.msra.mxu0 0
  %2846 = vmatprep.subr.bf16.mxu0 0
  %2847 = vmatpush2.bf16.msra.mxu0 0
  %2848 = vmatprep.subr.bf16.mxu0 0
  %2849 = vmatpush2.bf16.msra.mxu0 0
  %2850 = vmatprep.subr.bf16.mxu0 0
  %2851 = vmatpush2.bf16.msra.mxu0 0
  %2852 = vmatprep.mubr.bf16.mxu0 0
  %2853 = vmatmul.mubr.bf16.gmra.mxu0 %v2818
  %v2854 = vpop.f32.mrf.mxu0
  %v2855 = vadd.f32 0.0, %v2854
  %v2856 = vpop.f32.mrf.mxu0
  %v2857 = vadd.f32 0.0, %v2856
  %v2858 = vpop.f32.mrf.mxu0
  %v2859 = vpop.f32.mrf.mxu0
  %2860 = vdwg.mxu0
  %v2861 = vsel %vm1897, 1, 0
  %v2862 = vcvt.s32.f32 %v2861
  %v2863 = vpack.c.bf16 %v2862, %v2862
  %v2864 = vpack.c.bf16 %v2855, %v2855
  %v2866 = vsel %vm1995, %v2863, 0
  %v2869 = vsel %vm1999, %v2864, 0
  %2871 = vmatprep.subr.bf16.mxu0 0
  %2872 = vmatpush1.bf16.msra.mxu0 0
  %2873 = vmatprep.subr.bf16.mxu0 0
  %2874 = vmatpush1.bf16.msra.mxu0 0
  %2875 = vmatprep.subr.bf16.mxu0 0
  %2876 = vmatpush1.bf16.msra.mxu0 0
  %2877 = vmatprep.subr.bf16.mxu0 0
  %2878 = vmatpush1.bf16.msra.mxu0 0
  %2879 = vmatprep.subr.bf16.mxu0 0
  %2880 = vmatpush1.bf16.msra.mxu0 0
  %2881 = vmatprep.subr.bf16.mxu0 0
  %2882 = vmatpush1.bf16.msra.mxu0 0
  %2883 = vmatprep.subr.bf16.mxu0 0
  %2884 = vmatpush1.bf16.msra.mxu0 0
  %2885 = vmatprep.subr.bf16.mxu0 0
  %2886 = vmatpush1.bf16.msra.mxu0 %v2869
  %2887 = vmatprep.subr.bf16.mxu0 0
  %2888 = vmatpush2.bf16.msra.mxu0 0
  %2889 = vmatprep.subr.bf16.mxu0 0
  %2890 = vmatpush2.bf16.msra.mxu0 0
  %2891 = vmatprep.subr.bf16.mxu0 0
  %2892 = vmatpush2.bf16.msra.mxu0 0
  %2893 = vmatprep.subr.bf16.mxu0 0
  %2894 = vmatpush2.bf16.msra.mxu0 0
  %2895 = vmatprep.subr.bf16.mxu0 0
  %2896 = vmatpush2.bf16.msra.mxu0 0
  %2897 = vmatprep.subr.bf16.mxu0 0
  %2898 = vmatpush2.bf16.msra.mxu0 0
  %2899 = vmatprep.subr.bf16.mxu0 0
  %2900 = vmatpush2.bf16.msra.mxu0 0
  %2901 = vmatprep.subr.bf16.mxu0 0
  %2902 = vmatpush2.bf16.msra.mxu0 0
  %2903 = vmatprep.mubr.bf16.mxu0 0
  %2904 = vmatmul.mubr.bf16.gmra.mxu0 %v2866
  %v2905 = vpop.f32.mrf.mxu0
  %v2906 = vadd.f32 0.0, %v2905
  %v2907 = vpop.f32.mrf.mxu0
  %v2908 = vpop.f32.mrf.mxu0
  %v2909 = vpop.f32.mrf.mxu0
  %2910 = vdwg.mxu0
  %v2911 = vadd.f32 %v132, %v2906
  %v2912 = vadd.f32 %v2911, %v2857
  %v2913 = vxor.u32 %v2912, 2147483648
  %v2914 = vmul.f32 %v2913, 1.442695
  %v2915 = vpow.pop %v2914
  %v2916 = vadd.f32 %v2915, 1.0
  %v2917 = vrcp.pop %v2916
  %v2918 = vmul.f32 1.0, %v2917
  %v2919 = vtanh.pop %v2912
  %v2920 = vmul.f32 %v2918, %v2806
  %2922 = vrot.lane.b32.xlu0 %v2919, 32
  %v2923 = vpop.permute.xlu0 %2922
  %v2925 = vmul.f32 %v2918, %v2923
  %2927 = vrot.lane.b32.xlu0 %v2925, 32
  %v2928 = vpop.permute.xlu0 %2927
  %v2930 = vadd.f32 %v2920, %v2928
  %v2931 = vtanh.pop %v2930
  %2933 = vrot.lane.b32.xlu0 %v2931, 32
  %v2934 = vpop.permute.xlu0 %2933
  %v2936 = vmul.f32 %v2918, %v2934
  %v2937 = vpack.c.bf16 %v2936, %v2936
  %v2939 = vlaneseq
  %v2940 = vshrl.u32 %v2939, 7
  %v2941 = vsub.s32 0, %v2940
  %v2942 = vrot.slane %v42, %v2941
  %2945 = vrot.lane.b32.xlu0 %v2937, 64
  %v2946 = vpop.permute.xlu0 %2945
  %v2951 = vunpack.c.l.b16 %v38
  %v2952 = vunpack.c.l.b16 %v39
  %v2953 = vunpack.c.l.b16 %v40
  %v2954 = vunpack.c.l.b16 %v41
  %v2955 = vpack.c.b16 %v2952, %v2951
  %v2956 = vpack.c.b16 %v2954, %v2953
  %v2960 = vsel %vm1946, %v2946, 0
  %2962 = vmatprep.subr.bf16.mxu0 0
  %2963 = vmatpush1.bf16.msra.mxu0 0
  %2964 = vmatprep.subr.bf16.mxu0 0
  %2965 = vmatpush1.bf16.msra.mxu0 0
  %2966 = vmatprep.subr.bf16.mxu0 0
  %2967 = vmatpush1.bf16.msra.mxu0 0
  %2968 = vmatprep.subr.bf16.mxu0 0
  %2969 = vmatpush1.bf16.msra.mxu0 0
  %2970 = vmatprep.subr.bf16.mxu0 0
  %2971 = vmatpush1.bf16.msra.mxu0 0
  %2972 = vmatprep.subr.bf16.mxu0 0
  %2973 = vmatpush1.bf16.msra.mxu0 0
  %2974 = vmatprep.subr.bf16.mxu0 0
  %2975 = vmatpush1.bf16.msra.mxu0 %v2956
  %2976 = vmatprep.subr.bf16.mxu0 0
  %2977 = vmatpush1.bf16.msra.mxu0 %v2955
  %2978 = vmatprep.subr.bf16.mxu0 0
  %2979 = vmatpush2.bf16.msra.mxu0 0
  %2980 = vmatprep.subr.bf16.mxu0 0
  %2981 = vmatpush2.bf16.msra.mxu0 0
  %2982 = vmatprep.subr.bf16.mxu0 0
  %2983 = vmatpush2.bf16.msra.mxu0 0
  %2984 = vmatprep.subr.bf16.mxu0 0
  %2985 = vmatpush2.bf16.msra.mxu0 0
  %2986 = vmatprep.subr.bf16.mxu0 0
  %2987 = vmatpush2.bf16.msra.mxu0 0
  %2988 = vmatprep.subr.bf16.mxu0 0
  %2989 = vmatpush2.bf16.msra.mxu0 0
  %2990 = vmatprep.subr.bf16.mxu0 0
  %2991 = vmatpush2.bf16.msra.mxu0 0
  %2992 = vmatprep.subr.bf16.mxu0 0
  %2993 = vmatpush2.bf16.msra.mxu0 0
  %2994 = vmatprep.mubr.bf16.mxu0 0
  %2995 = vmatmul.mubr.bf16.gmra.mxu0 %v2960
  %v2996 = vpop.f32.mrf.mxu0
  %v2997 = vadd.f32 %v2942, %v2996
  %v2998 = vpop.f32.mrf.mxu0
  %v2999 = vpop.f32.mrf.mxu0
  %v3000 = vpop.f32.mrf.mxu0
  %3001 = vdwg.mxu0
  %v3002 = vpack.c.bf16 %v2997, %v2997
  %v3004 = vsel %vm53, %v3002, 0
  %3006 = vmatprep.subr.bf16.mxu0 0
  %3007 = vmatpush1.bf16.msra.mxu0 0
  %3008 = vmatprep.subr.bf16.mxu0 0
  %3009 = vmatpush1.bf16.msra.mxu0 0
  %3010 = vmatprep.subr.bf16.mxu0 0
  %3011 = vmatpush1.bf16.msra.mxu0 0
  %3012 = vmatprep.subr.bf16.mxu0 0
  %3013 = vmatpush1.bf16.msra.mxu0 0
  %3014 = vmatprep.subr.bf16.mxu0 0
  %3015 = vmatpush1.bf16.msra.mxu0 0
  %3016 = vmatprep.subr.bf16.mxu0 0
  %3017 = vmatpush1.bf16.msra.mxu0 0
  %3018 = vmatprep.subr.bf16.mxu0 0
  %3019 = vmatpush1.bf16.msra.mxu0 0
  %3020 = vmatprep.subr.bf16.mxu0 0
  %3021 = vmatpush1.bf16.msra.mxu0 %v68
  %3022 = vmatprep.subr.bf16.mxu0 0
  %3023 = vmatpush2.bf16.msra.mxu0 0
  %3024 = vmatprep.subr.bf16.mxu0 0
  %3025 = vmatpush2.bf16.msra.mxu0 0
  %3026 = vmatprep.subr.bf16.mxu0 0
  %3027 = vmatpush2.bf16.msra.mxu0 0
  %3028 = vmatprep.subr.bf16.mxu0 0
  %3029 = vmatpush2.bf16.msra.mxu0 0
  %3030 = vmatprep.subr.bf16.mxu0 0
  %3031 = vmatpush2.bf16.msra.mxu0 0
  %3032 = vmatprep.subr.bf16.mxu0 0
  %3033 = vmatpush2.bf16.msra.mxu0 0
  %3034 = vmatprep.subr.bf16.mxu0 0
  %3035 = vmatpush2.bf16.msra.mxu0 0
  %3036 = vmatprep.subr.bf16.mxu0 0
  %3037 = vmatpush2.bf16.msra.mxu0 0
  %3038 = vmatprep.mubr.bf16.mxu0 0
  %3039 = vmatmul.mubr.bf16.gmra.mxu0 %v3004
  %v3040 = vpop.f32.mrf.mxu0
  %v3041 = vadd.f32 %v51, %v3040
  %v3042 = vpop.f32.mrf.mxu0
  %v3043 = vpop.f32.mrf.mxu0
  %v3044 = vpop.f32.mrf.mxu0
  %3045 = vdwg.mxu0
  %v3046 = vmul.f32 %v2997, %v2997
  %v3048 = vsel %vm53, %v2997, 0
  %3050 = vmatprep.subr.mxu0 0.0
  %3051 = vmatpush1.xpose.msra.mxu0 0.0
  %3052 = vmatprep.subr.mxu0 0.0
  %3053 = vmatpush1.xpose.msra.mxu0 0.0
  %3054 = vmatprep.subr.mxu0 0.0
  %3055 = vmatpush1.xpose.msra.mxu0 0.0
  %3056 = vmatprep.subr.mxu0 0.0
  %3057 = vmatpush1.xpose.msra.mxu0 0.0
  %3058 = vmatprep.subr.mxu0 0.0
  %3059 = vmatpush1.xpose.msra.mxu0 0.0
  %3060 = vmatprep.subr.mxu0 0.0
  %3061 = vmatpush1.xpose.msra.mxu0 0.0
  %3062 = vmatprep.subr.mxu0 0.0
  %3063 = vmatpush1.xpose.msra.mxu0 0.0
  %3064 = vmatprep.subr.mxu0 0.0
  %3065 = vmatpush1.xpose.msra.mxu0 0.0
  %3066 = vmatprep.subr.mxu0 0.0
  %3067 = vmatpush1.xpose.msra.mxu0 0.0
  %3068 = vmatprep.subr.mxu0 0.0
  %3069 = vmatpush1.xpose.msra.mxu0 0.0
  %3070 = vmatprep.subr.mxu0 0.0
  %3071 = vmatpush1.xpose.msra.mxu0 0.0
  %3072 = vmatprep.subr.mxu0 0.0
  %3073 = vmatpush1.xpose.msra.mxu0 0.0
  %3074 = vmatprep.subr.mxu0 0.0
  %3075 = vmatpush1.xpose.msra.mxu0 0.0
  %3076 = vmatprep.subr.mxu0 0.0
  %3077 = vmatpush1.xpose.msra.mxu0 0.0
  %3078 = vmatprep.subr.mxu0 0.0
  %3079 = vmatpush1.xpose.msra.mxu0 0.0
  %3080 = vmatprep.subr.mxu0 0.0
  %3081 = vmatpush1.xpose.msra.mxu0 %v3048
  %3082 = vmatprep.subr.mxu0 0.0
  %3083 = vmatpush2.xpose.msra.mxu0 0.0
  %3084 = vmatprep.subr.mxu0 0.0
  %3085 = vmatpush2.xpose.msra.mxu0 0.0
  %3086 = vmatprep.subr.mxu0 0.0
  %3087 = vmatpush2.xpose.msra.mxu0 0.0
  %3088 = vmatprep.subr.mxu0 0.0
  %3089 = vmatpush2.xpose.msra.mxu0 0.0
  %3090 = vmatprep.subr.mxu0 0.0
  %3091 = vmatpush2.xpose.msra.mxu0 0.0
  %3092 = vmatprep.subr.mxu0 0.0
  %3093 = vmatpush2.xpose.msra.mxu0 0.0
  %3094 = vmatprep.subr.mxu0 0.0
  %3095 = vmatpush2.xpose.msra.mxu0 0.0
  %3096 = vmatprep.subr.mxu0 0.0
  %3097 = vmatpush2.xpose.msra.mxu0 0.0
  %3098 = vmatprep.subr.mxu0 0.0
  %3099 = vmatpush2.xpose.msra.mxu0 0.0
  %3100 = vmatprep.subr.mxu0 0.0
  %3101 = vmatpush2.xpose.msra.mxu0 0.0
  %3102 = vmatprep.subr.mxu0 0.0
  %3103 = vmatpush2.xpose.msra.mxu0 0.0
  %3104 = vmatprep.subr.mxu0 0.0
  %3105 = vmatpush2.xpose.msra.mxu0 0.0
  %3106 = vmatprep.subr.mxu0 0.0
  %3107 = vmatpush2.xpose.msra.mxu0 0.0
  %3108 = vmatprep.subr.mxu0 0.0
  %3109 = vmatpush2.xpose.msra.mxu0 0.0
  %3110 = vmatprep.subr.mxu0 0.0
  %3111 = vmatpush2.xpose.msra.mxu0 0.0
  %3112 = vmatprep.subr.mxu0 0.0
  %3113 = vmatpush2.xpose.msra.mxu0 0.0
  %3114 = vmatprep.mubr.f32.mxu0 0.0
  %3115 = vmatmul.mubr.f32.gmra.mxu0 %v3048
  %v3116 = vpop.f32.mrf.mxu0
  %v3117 = vadd.f32 0.0, %v3116
  %v3118 = vpop.f32.mrf.mxu0
  %3119 = vdwg.mxu0
  %v3121 = vsel %vm53, %v3046, 0
  %3123 = vmatprep.subr.mxu0 0.0
  %3124 = vmatpush1.xpose.msra.mxu0 0.0
  %3125 = vmatprep.subr.mxu0 0.0
  %3126 = vmatpush1.xpose.msra.mxu0 0.0
  %3127 = vmatprep.subr.mxu0 0.0
  %3128 = vmatpush1.xpose.msra.mxu0 0.0
  %3129 = vmatprep.subr.mxu0 0.0
  %3130 = vmatpush1.xpose.msra.mxu0 0.0
  %3131 = vmatprep.subr.mxu0 0.0
  %3132 = vmatpush1.xpose.msra.mxu0 0.0
  %3133 = vmatprep.subr.mxu0 0.0
  %3134 = vmatpush1.xpose.msra.mxu0 0.0
  %3135 = vmatprep.subr.mxu0 0.0
  %3136 = vmatpush1.xpose.msra.mxu0 0.0
  %3137 = vmatprep.subr.mxu0 0.0
  %3138 = vmatpush1.xpose.msra.mxu0 0.0
  %3139 = vmatprep.subr.mxu0 0.0
  %3140 = vmatpush1.xpose.msra.mxu0 0.0
  %3141 = vmatprep.subr.mxu0 0.0
  %3142 = vmatpush1.xpose.msra.mxu0 0.0
  %3143 = vmatprep.subr.mxu0 0.0
  %3144 = vmatpush1.xpose.msra.mxu0 0.0
  %3145 = vmatprep.subr.mxu0 0.0
  %3146 = vmatpush1.xpose.msra.mxu0 0.0
  %3147 = vmatprep.subr.mxu0 0.0
  %3148 = vmatpush1.xpose.msra.mxu0 0.0
  %3149 = vmatprep.subr.mxu0 0.0
  %3150 = vmatpush1.xpose.msra.mxu0 0.0
  %3151 = vmatprep.subr.mxu0 0.0
  %3152 = vmatpush1.xpose.msra.mxu0 0.0
  %3153 = vmatprep.subr.mxu0 0.0
  %3154 = vmatpush1.xpose.msra.mxu0 %v3121
  %3155 = vmatprep.subr.mxu0 0.0
  %3156 = vmatpush2.xpose.msra.mxu0 0.0
  %3157 = vmatprep.subr.mxu0 0.0
  %3158 = vmatpush2.xpose.msra.mxu0 0.0
  %3159 = vmatprep.subr.mxu0 0.0
  %3160 = vmatpush2.xpose.msra.mxu0 0.0
  %3161 = vmatprep.subr.mxu0 0.0
  %3162 = vmatpush2.xpose.msra.mxu0 0.0
  %3163 = vmatprep.subr.mxu0 0.0
  %3164 = vmatpush2.xpose.msra.mxu0 0.0
  %3165 = vmatprep.subr.mxu0 0.0
  %3166 = vmatpush2.xpose.msra.mxu0 0.0
  %3167 = vmatprep.subr.mxu0 0.0
  %3168 = vmatpush2.xpose.msra.mxu0 0.0
  %3169 = vmatprep.subr.mxu0 0.0
  %3170 = vmatpush2.xpose.msra.mxu0 0.0
  %3171 = vmatprep.subr.mxu0 0.0
  %3172 = vmatpush2.xpose.msra.mxu0 0.0
  %3173 = vmatprep.subr.mxu0 0.0
  %3174 = vmatpush2.xpose.msra.mxu0 0.0
  %3175 = vmatprep.subr.mxu0 0.0
  %3176 = vmatpush2.xpose.msra.mxu0 0.0
  %3177 = vmatprep.subr.mxu0 0.0
  %3178 = vmatpush2.xpose.msra.mxu0 0.0
  %3179 = vmatprep.subr.mxu0 0.0
  %3180 = vmatpush2.xpose.msra.mxu0 0.0
  %3181 = vmatprep.subr.mxu0 0.0
  %3182 = vmatpush2.xpose.msra.mxu0 0.0
  %3183 = vmatprep.subr.mxu0 0.0
  %3184 = vmatpush2.xpose.msra.mxu0 0.0
  %3185 = vmatprep.subr.mxu0 0.0
  %3186 = vmatpush2.xpose.msra.mxu0 0.0
  %3187 = vmatprep.mubr.f32.mxu0 0.0
  %3188 = vmatmul.mubr.f32.gmra.mxu0 %v210
  %v3189 = vpop.f32.mrf.mxu0
  %v3190 = vadd.f32 0.0, %v3189
  %v3191 = vpop.f32.mrf.mxu0
  %3192 = vdwg.mxu0
  %3193 = vmatprep.subr.mxu0 0.0
  %3194 = vmatpush1.xpose.msra.mxu0 0.0
  %3195 = vmatprep.subr.mxu0 0.0
  %3196 = vmatpush1.xpose.msra.mxu0 0.0
  %3197 = vmatprep.subr.mxu0 0.0
  %3198 = vmatpush1.xpose.msra.mxu0 0.0
  %3199 = vmatprep.subr.mxu0 0.0
  %3200 = vmatpush1.xpose.msra.mxu0 0.0
  %3201 = vmatprep.subr.mxu0 0.0
  %3202 = vmatpush1.xpose.msra.mxu0 0.0
  %3203 = vmatprep.subr.mxu0 0.0
  %3204 = vmatpush1.xpose.msra.mxu0 0.0
  %3205 = vmatprep.subr.mxu0 0.0
  %3206 = vmatpush1.xpose.msra.mxu0 0.0
  %3207 = vmatprep.subr.mxu0 0.0
  %3208 = vmatpush1.xpose.msra.mxu0 0.0
  %3209 = vmatprep.subr.mxu0 0.0
  %3210 = vmatpush1.xpose.msra.mxu0 0.0
  %3211 = vmatprep.subr.mxu0 0.0
  %3212 = vmatpush1.xpose.msra.mxu0 0.0
  %3213 = vmatprep.subr.mxu0 0.0
  %3214 = vmatpush1.xpose.msra.mxu0 0.0
  %3215 = vmatprep.subr.mxu0 0.0
  %3216 = vmatpush1.xpose.msra.mxu0 0.0
  %3217 = vmatprep.subr.mxu0 0.0
  %3218 = vmatpush1.xpose.msra.mxu0 0.0
  %3219 = vmatprep.subr.mxu0 0.0
  %3220 = vmatpush1.xpose.msra.mxu0 0.0
  %3221 = vmatprep.subr.mxu0 0.0
  %3222 = vmatpush1.xpose.msra.mxu0 0.0
  %3223 = vmatprep.subr.mxu0 0.0
  %3224 = vmatpush1.xpose.msra.mxu0 %v210
  %3225 = vmatprep.subr.mxu0 0.0
  %3226 = vmatpush2.xpose.msra.mxu0 0.0
  %3227 = vmatprep.subr.mxu0 0.0
  %3228 = vmatpush2.xpose.msra.mxu0 0.0
  %3229 = vmatprep.subr.mxu0 0.0
  %3230 = vmatpush2.xpose.msra.mxu0 0.0
  %3231 = vmatprep.subr.mxu0 0.0
  %3232 = vmatpush2.xpose.msra.mxu0 0.0
  %3233 = vmatprep.subr.mxu0 0.0
  %3234 = vmatpush2.xpose.msra.mxu0 0.0
  %3235 = vmatprep.subr.mxu0 0.0
  %3236 = vmatpush2.xpose.msra.mxu0 0.0
  %3237 = vmatprep.subr.mxu0 0.0
  %3238 = vmatpush2.xpose.msra.mxu0 0.0
  %3239 = vmatprep.subr.mxu0 0.0
  %3240 = vmatpush2.xpose.msra.mxu0 0.0
  %3241 = vmatprep.subr.mxu0 0.0
  %3242 = vmatpush2.xpose.msra.mxu0 0.0
  %3243 = vmatprep.subr.mxu0 0.0
  %3244 = vmatpush2.xpose.msra.mxu0 0.0
  %3245 = vmatprep.subr.mxu0 0.0
  %3246 = vmatpush2.xpose.msra.mxu0 0.0
  %3247 = vmatprep.subr.mxu0 0.0
  %3248 = vmatpush2.xpose.msra.mxu0 0.0
  %3249 = vmatprep.subr.mxu0 0.0
  %3250 = vmatpush2.xpose.msra.mxu0 0.0
  %3251 = vmatprep.subr.mxu0 0.0
  %3252 = vmatpush2.xpose.msra.mxu0 0.0
  %3253 = vmatprep.subr.mxu0 0.0
  %3254 = vmatpush2.xpose.msra.mxu0 0.0
  %3255 = vmatprep.subr.mxu0 0.0
  %3256 = vmatpush2.xpose.msra.mxu0 0.0
  %3257 = vmatprep.mubr.f32.mxu0 0.0
  %3258 = vmatmul.mubr.f32.gmra.mxu0 %v3121
  %v3259 = vpop.f32.mrf.mxu0
  %v3260 = vadd.f32 %v3190, %v3259
  %v3261 = vpop.f32.mrf.mxu0
  %3262 = vdwg.mxu0
  %v3263 = vmul.f32 %v3117, 2.0
  %v3264 = vsub.f32 %v3260, %v3263
  %vm3265 = vcmp.lt.f32.partialorder %v3264, 25.0
  %3266 = vmatprep.subr.bf16.mxu0 0
  %3267 = vmatpush1.bf16.msra.mxu0 0
  %3268 = vmatprep.subr.bf16.mxu0 0
  %3269 = vmatpush1.bf16.msra.mxu0 0
  %3270 = vmatprep.subr.bf16.mxu0 0
  %3271 = vmatpush1.bf16.msra.mxu0 0
  %3272 = vmatprep.subr.bf16.mxu0 0
  %3273 = vmatpush1.bf16.msra.mxu0 0
  %3274 = vmatprep.subr.bf16.mxu0 0
  %3275 = vmatpush1.bf16.msra.mxu0 0
  %3276 = vmatprep.subr.bf16.mxu0 0
  %3277 = vmatpush1.bf16.msra.mxu0 0
  %3278 = vmatprep.subr.bf16.mxu0 %v1941
  %3279 = vmatpush1.bf16.msra.mxu0 %v1940
  %3280 = vmatprep.subr.bf16.mxu0 %v1939
  %3281 = vmatpush1.bf16.msra.mxu0 %v1938
  %3282 = vmatprep.subr.bf16.mxu0 0
  %3283 = vmatpush2.bf16.msra.mxu0 0
  %3284 = vmatprep.subr.bf16.mxu0 0
  %3285 = vmatpush2.bf16.msra.mxu0 0
  %3286 = vmatprep.subr.bf16.mxu0 0
  %3287 = vmatpush2.bf16.msra.mxu0 0
  %3288 = vmatprep.subr.bf16.mxu0 0
  %3289 = vmatpush2.bf16.msra.mxu0 0
  %3290 = vmatprep.subr.bf16.mxu0 0
  %3291 = vmatpush2.bf16.msra.mxu0 0
  %3292 = vmatprep.subr.bf16.mxu0 0
  %3293 = vmatpush2.bf16.msra.mxu0 0
  %3294 = vmatprep.subr.bf16.mxu0 0
  %3295 = vmatpush2.bf16.msra.mxu0 0
  %3296 = vmatprep.subr.bf16.mxu0 0
  %3297 = vmatpush2.bf16.msra.mxu0 0
  %3298 = vmatprep.mubr.bf16.mxu0 0
  %3299 = vmatmul.mubr.bf16.gmra.mxu0 %v2960
  %v3300 = vpop.f32.mrf.mxu0
  %v3301 = vadd.f32 0.0, %v3300
  %v3302 = vpop.f32.mrf.mxu0
  %v3303 = vadd.f32 0.0, %v3302
  %v3304 = vpop.f32.mrf.mxu0
  %v3305 = vpop.f32.mrf.mxu0
  %3306 = vdwg.mxu0
  %v3307 = vsel %vm3265, 1, 0
  %v3308 = vcvt.s32.f32 %v3307
  %v3309 = vpack.c.bf16 %v3308, %v3308
  %v3310 = vpack.c.bf16 %v3301, %v3301
  %v3312 = vsel %vm1995, %v3309, 0
  %v3315 = vsel %vm1999, %v3310, 0
  %3317 = vmatprep.subr.bf16.mxu0 0
  %3318 = vmatpush1.bf16.msra.mxu0 0
  %3319 = vmatprep.subr.bf16.mxu0 0
  %3320 = vmatpush1.bf16.msra.mxu0 0
  %3321 = vmatprep.subr.bf16.mxu0 0
  %3322 = vmatpush1.bf16.msra.mxu0 0
  %3323 = vmatprep.subr.bf16.mxu0 0
  %3324 = vmatpush1.bf16.msra.mxu0 0
  %3325 = vmatprep.subr.bf16.mxu0 0
  %3326 = vmatpush1.bf16.msra.mxu0 0
  %3327 = vmatprep.subr.bf16.mxu0 0
  %3328 = vmatpush1.bf16.msra.mxu0 0
  %3329 = vmatprep.subr.bf16.mxu0 0
  %3330 = vmatpush1.bf16.msra.mxu0 0
  %3331 = vmatprep.subr.bf16.mxu0 0
  %3332 = vmatpush1.bf16.msra.mxu0 %v3315
  %3333 = vmatprep.subr.bf16.mxu0 0
  %3334 = vmatpush2.bf16.msra.mxu0 0
  %3335 = vmatprep.subr.bf16.mxu0 0
  %3336 = vmatpush2.bf16.msra.mxu0 0
  %3337 = vmatprep.subr.bf16.mxu0 0
  %3338 = vmatpush2.bf16.msra.mxu0 0
  %3339 = vmatprep.subr.bf16.mxu0 0
  %3340 = vmatpush2.bf16.msra.mxu0 0
  %3341 = vmatprep.subr.bf16.mxu0 0
  %3342 = vmatpush2.bf16.msra.mxu0 0
  %3343 = vmatprep.subr.bf16.mxu0 0
  %3344 = vmatpush2.bf16.msra.mxu0 0
  %3345 = vmatprep.subr.bf16.mxu0 0
  %3346 = vmatpush2.bf16.msra.mxu0 0
  %3347 = vmatprep.subr.bf16.mxu0 0
  %3348 = vmatpush2.bf16.msra.mxu0 0
  %3349 = vmatprep.mubr.bf16.mxu0 0
  %3350 = vmatmul.mubr.bf16.gmra.mxu0 %v3312
  %v3351 = vpop.f32.mrf.mxu0
  %v3352 = vadd.f32 0.0, %v3351
  %v3353 = vpop.f32.mrf.mxu0
  %v3354 = vpop.f32.mrf.mxu0
  %v3355 = vpop.f32.mrf.mxu0
  %3356 = vdwg.mxu0
  %v3357 = vadd.f32 %v3041, %v3352
  %v3358 = vadd.f32 %v3357, %v3303
  %v3359 = vxor.u32 %v3358, 2147483648
  %v3360 = vmul.f32 %v3359, 1.442695
  %v3361 = vpow.pop %v3360
  %v3362 = vadd.f32 %v3361, 1.0
  %v3363 = vrcp.pop %v3362
  %v3364 = vmul.f32 1.0, %v3363
  %v3365 = vtanh.pop %v3358
  %v3366 = vmul.f32 %v3364, %v2930
  %3368 = vrot.lane.b32.xlu0 %v3365, 32
  %v3369 = vpop.permute.xlu0 %3368
  %v3371 = vmul.f32 %v3364, %v3369
  %3373 = vrot.lane.b32.xlu0 %v3371, 32
  %v3374 = vpop.permute.xlu0 %3373
  %v3376 = vadd.f32 %v3366, %v3374
  %v3377 = vtanh.pop %v3376
  %3379 = vrot.lane.b32.xlu0 %v3377, 32
  %v3380 = vpop.permute.xlu0 %3379
  %v3382 = vmul.f32 %v3364, %v3380
  %v3383 = vpack.c.bf16 %v3382, %v3382
  %3385 = vrot.lane.b32.xlu0 %v3383, 64
  %v3386 = vpop.permute.xlu0 %3385
  %v3388 = vsel %vm1946, %v3386, 0
  %3390 = vmatprep.subr.bf16.mxu0 0
  %3391 = vmatpush1.bf16.msra.mxu0 0
  %3392 = vmatprep.subr.bf16.mxu0 0
  %3393 = vmatpush1.bf16.msra.mxu0 0
  %3394 = vmatprep.subr.bf16.mxu0 0
  %3395 = vmatpush1.bf16.msra.mxu0 0
  %3396 = vmatprep.subr.bf16.mxu0 0
  %3397 = vmatpush1.bf16.msra.mxu0 0
  %3398 = vmatprep.subr.bf16.mxu0 0
  %3399 = vmatpush1.bf16.msra.mxu0 0
  %3400 = vmatprep.subr.bf16.mxu0 0
  %3401 = vmatpush1.bf16.msra.mxu0 0
  %3402 = vmatprep.subr.bf16.mxu0 0
  %3403 = vmatpush1.bf16.msra.mxu0 %v2956
  %3404 = vmatprep.subr.bf16.mxu0 0
  %3405 = vmatpush1.bf16.msra.mxu0 %v2955
  %3406 = vmatprep.subr.bf16.mxu0 0
  %3407 = vmatpush2.bf16.msra.mxu0 0
  %3408 = vmatprep.subr.bf16.mxu0 0
  %3409 = vmatpush2.bf16.msra.mxu0 0
  %3410 = vmatprep.subr.bf16.mxu0 0
  %3411 = vmatpush2.bf16.msra.mxu0 0
  %3412 = vmatprep.subr.bf16.mxu0 0
  %3413 = vmatpush2.bf16.msra.mxu0 0
  %3414 = vmatprep.subr.bf16.mxu0 0
  %3415 = vmatpush2.bf16.msra.mxu0 0
  %3416 = vmatprep.subr.bf16.mxu0 0
  %3417 = vmatpush2.bf16.msra.mxu0 0
  %3418 = vmatprep.subr.bf16.mxu0 0
  %3419 = vmatpush2.bf16.msra.mxu0 0
  %3420 = vmatprep.subr.bf16.mxu0 0
  %3421 = vmatpush2.bf16.msra.mxu0 0
  %3422 = vmatprep.mubr.bf16.mxu0 0
  %3423 = vmatmul.mubr.bf16.gmra.mxu0 %v3388
  %v3424 = vpop.f32.mrf.mxu0
  %v3425 = vadd.f32 %v2942, %v3424
  %v3426 = vpop.f32.mrf.mxu0
  %v3427 = vpop.f32.mrf.mxu0
  %v3428 = vpop.f32.mrf.mxu0
  %3429 = vdwg.mxu0
  %v3430 = vpack.c.bf16 %v3425, %v3425
  %v3432 = vsel %vm53, %v3430, 0
  %3434 = vmatprep.subr.bf16.mxu0 0
  %3435 = vmatpush1.bf16.msra.mxu0 0
  %3436 = vmatprep.subr.bf16.mxu0 0
  %3437 = vmatpush1.bf16.msra.mxu0 0
  %3438 = vmatprep.subr.bf16.mxu0 0
  %3439 = vmatpush1.bf16.msra.mxu0 0
  %3440 = vmatprep.subr.bf16.mxu0 0
  %3441 = vmatpush1.bf16.msra.mxu0 0
  %3442 = vmatprep.subr.bf16.mxu0 0
  %3443 = vmatpush1.bf16.msra.mxu0 0
  %3444 = vmatprep.subr.bf16.mxu0 0
  %3445 = vmatpush1.bf16.msra.mxu0 0
  %3446 = vmatprep.subr.bf16.mxu0 0
  %3447 = vmatpush1.bf16.msra.mxu0 0
  %3448 = vmatprep.subr.bf16.mxu0 0
  %3449 = vmatpush1.bf16.msra.mxu0 %v68
  %3450 = vmatprep.subr.bf16.mxu0 0
  %3451 = vmatpush2.bf16.msra.mxu0 0
  %3452 = vmatprep.subr.bf16.mxu0 0
  %3453 = vmatpush2.bf16.msra.mxu0 0
  %3454 = vmatprep.subr.bf16.mxu0 0
  %3455 = vmatpush2.bf16.msra.mxu0 0
  %3456 = vmatprep.subr.bf16.mxu0 0
  %3457 = vmatpush2.bf16.msra.mxu0 0
  %3458 = vmatprep.subr.bf16.mxu0 0
  %3459 = vmatpush2.bf16.msra.mxu0 0
  %3460 = vmatprep.subr.bf16.mxu0 0
  %3461 = vmatpush2.bf16.msra.mxu0 0
  %3462 = vmatprep.subr.bf16.mxu0 0
  %3463 = vmatpush2.bf16.msra.mxu0 0
  %3464 = vmatprep.subr.bf16.mxu0 0
  %3465 = vmatpush2.bf16.msra.mxu0 0
  %3466 = vmatprep.mubr.bf16.mxu0 0
  %3467 = vmatmul.mubr.bf16.gmra.mxu0 %v3432
  %v3468 = vpop.f32.mrf.mxu0
  %v3469 = vadd.f32 %v51, %v3468
  %v3470 = vpop.f32.mrf.mxu0
  %v3471 = vpop.f32.mrf.mxu0
  %v3472 = vpop.f32.mrf.mxu0
  %3473 = vdwg.mxu0
  %v3474 = vmul.f32 %v3425, %v3425
  %v3476 = vsel %vm53, %v3425, 0
  %3478 = vmatprep.subr.mxu0 0.0
  %3479 = vmatpush1.xpose.msra.mxu0 0.0
  %3480 = vmatprep.subr.mxu0 0.0
  %3481 = vmatpush1.xpose.msra.mxu0 0.0
  %3482 = vmatprep.subr.mxu0 0.0
  %3483 = vmatpush1.xpose.msra.mxu0 0.0
  %3484 = vmatprep.subr.mxu0 0.0
  %3485 = vmatpush1.xpose.msra.mxu0 0.0
  %3486 = vmatprep.subr.mxu0 0.0
  %3487 = vmatpush1.xpose.msra.mxu0 0.0
  %3488 = vmatprep.subr.mxu0 0.0
  %3489 = vmatpush1.xpose.msra.mxu0 0.0
  %3490 = vmatprep.subr.mxu0 0.0
  %3491 = vmatpush1.xpose.msra.mxu0 0.0
  %3492 = vmatprep.subr.mxu0 0.0
  %3493 = vmatpush1.xpose.msra.mxu0 0.0
  %3494 = vmatprep.subr.mxu0 0.0
  %3495 = vmatpush1.xpose.msra.mxu0 0.0
  %3496 = vmatprep.subr.mxu0 0.0
  %3497 = vmatpush1.xpose.msra.mxu0 0.0
  %3498 = vmatprep.subr.mxu0 0.0
  %3499 = vmatpush1.xpose.msra.mxu0 0.0
  %3500 = vmatprep.subr.mxu0 0.0
  %3501 = vmatpush1.xpose.msra.mxu0 0.0
  %3502 = vmatprep.subr.mxu0 0.0
  %3503 = vmatpush1.xpose.msra.mxu0 0.0
  %3504 = vmatprep.subr.mxu0 0.0
  %3505 = vmatpush1.xpose.msra.mxu0 0.0
  %3506 = vmatprep.subr.mxu0 0.0
  %3507 = vmatpush1.xpose.msra.mxu0 0.0
  %3508 = vmatprep.subr.mxu0 0.0
  %3509 = vmatpush1.xpose.msra.mxu0 %v3476
  %3510 = vmatprep.subr.mxu0 0.0
  %3511 = vmatpush2.xpose.msra.mxu0 0.0
  %3512 = vmatprep.subr.mxu0 0.0
  %3513 = vmatpush2.xpose.msra.mxu0 0.0
  %3514 = vmatprep.subr.mxu0 0.0
  %3515 = vmatpush2.xpose.msra.mxu0 0.0
  %3516 = vmatprep.subr.mxu0 0.0
  %3517 = vmatpush2.xpose.msra.mxu0 0.0
  %3518 = vmatprep.subr.mxu0 0.0
  %3519 = vmatpush2.xpose.msra.mxu0 0.0
  %3520 = vmatprep.subr.mxu0 0.0
  %3521 = vmatpush2.xpose.msra.mxu0 0.0
  %3522 = vmatprep.subr.mxu0 0.0
  %3523 = vmatpush2.xpose.msra.mxu0 0.0
  %3524 = vmatprep.subr.mxu0 0.0
  %3525 = vmatpush2.xpose.msra.mxu0 0.0
  %3526 = vmatprep.subr.mxu0 0.0
  %3527 = vmatpush2.xpose.msra.mxu0 0.0
  %3528 = vmatprep.subr.mxu0 0.0
  %3529 = vmatpush2.xpose.msra.mxu0 0.0
  %3530 = vmatprep.subr.mxu0 0.0
  %3531 = vmatpush2.xpose.msra.mxu0 0.0
  %3532 = vmatprep.subr.mxu0 0.0
  %3533 = vmatpush2.xpose.msra.mxu0 0.0
  %3534 = vmatprep.subr.mxu0 0.0
  %3535 = vmatpush2.xpose.msra.mxu0 0.0
  %3536 = vmatprep.subr.mxu0 0.0
  %3537 = vmatpush2.xpose.msra.mxu0 0.0
  %3538 = vmatprep.subr.mxu0 0.0
  %3539 = vmatpush2.xpose.msra.mxu0 0.0
  %3540 = vmatprep.subr.mxu0 0.0
  %3541 = vmatpush2.xpose.msra.mxu0 0.0
  %3542 = vmatprep.mubr.f32.mxu0 0.0
  %3543 = vmatmul.mubr.f32.gmra.mxu0 %v3476
  %v3544 = vpop.f32.mrf.mxu0
  %v3545 = vadd.f32 0.0, %v3544
  %v3546 = vpop.f32.mrf.mxu0
  %3547 = vdwg.mxu0
  %v3549 = vsel %vm53, %v3474, 0
  %3551 = vmatprep.subr.mxu0 0.0
  %3552 = vmatpush1.xpose.msra.mxu0 0.0
  %3553 = vmatprep.subr.mxu0 0.0
  %3554 = vmatpush1.xpose.msra.mxu0 0.0
  %3555 = vmatprep.subr.mxu0 0.0
  %3556 = vmatpush1.xpose.msra.mxu0 0.0
  %3557 = vmatprep.subr.mxu0 0.0
  %3558 = vmatpush1.xpose.msra.mxu0 0.0
  %3559 = vmatprep.subr.mxu0 0.0
  %3560 = vmatpush1.xpose.msra.mxu0 0.0
  %3561 = vmatprep.subr.mxu0 0.0
  %3562 = vmatpush1.xpose.msra.mxu0 0.0
  %3563 = vmatprep.subr.mxu0 0.0
  %3564 = vmatpush1.xpose.msra.mxu0 0.0
  %3565 = vmatprep.subr.mxu0 0.0
  %3566 = vmatpush1.xpose.msra.mxu0 0.0
  %3567 = vmatprep.subr.mxu0 0.0
  %3568 = vmatpush1.xpose.msra.mxu0 0.0
  %3569 = vmatprep.subr.mxu0 0.0
  %3570 = vmatpush1.xpose.msra.mxu0 0.0
  %3571 = vmatprep.subr.mxu0 0.0
  %3572 = vmatpush1.xpose.msra.mxu0 0.0
  %3573 = vmatprep.subr.mxu0 0.0
  %3574 = vmatpush1.xpose.msra.mxu0 0.0
  %3575 = vmatprep.subr.mxu0 0.0
  %3576 = vmatpush1.xpose.msra.mxu0 0.0
  %3577 = vmatprep.subr.mxu0 0.0
  %3578 = vmatpush1.xpose.msra.mxu0 0.0
  %3579 = vmatprep.subr.mxu0 0.0
  %3580 = vmatpush1.xpose.msra.mxu0 0.0
  %3581 = vmatprep.subr.mxu0 0.0
  %3582 = vmatpush1.xpose.msra.mxu0 %v3549
  %3583 = vmatprep.subr.mxu0 0.0
  %3584 = vmatpush2.xpose.msra.mxu0 0.0
  %3585 = vmatprep.subr.mxu0 0.0
  %3586 = vmatpush2.xpose.msra.mxu0 0.0
  %3587 = vmatprep.subr.mxu0 0.0
  %3588 = vmatpush2.xpose.msra.mxu0 0.0
  %3589 = vmatprep.subr.mxu0 0.0
  %3590 = vmatpush2.xpose.msra.mxu0 0.0
  %3591 = vmatprep.subr.mxu0 0.0
  %3592 = vmatpush2.xpose.msra.mxu0 0.0
  %3593 = vmatprep.subr.mxu0 0.0
  %3594 = vmatpush2.xpose.msra.mxu0 0.0
  %3595 = vmatprep.subr.mxu0 0.0
  %3596 = vmatpush2.xpose.msra.mxu0 0.0
  %3597 = vmatprep.subr.mxu0 0.0
  %3598 = vmatpush2.xpose.msra.mxu0 0.0
  %3599 = vmatprep.subr.mxu0 0.0
  %3600 = vmatpush2.xpose.msra.mxu0 0.0
  %3601 = vmatprep.subr.mxu0 0.0
  %3602 = vmatpush2.xpose.msra.mxu0 0.0
  %3603 = vmatprep.subr.mxu0 0.0
  %3604 = vmatpush2.xpose.msra.mxu0 0.0
  %3605 = vmatprep.subr.mxu0 0.0
  %3606 = vmatpush2.xpose.msra.mxu0 0.0
  %3607 = vmatprep.subr.mxu0 0.0
  %3608 = vmatpush2.xpose.msra.mxu0 0.0
  %3609 = vmatprep.subr.mxu0 0.0
  %3610 = vmatpush2.xpose.msra.mxu0 0.0
  %3611 = vmatprep.subr.mxu0 0.0
  %3612 = vmatpush2.xpose.msra.mxu0 0.0
  %3613 = vmatprep.subr.mxu0 0.0
  %3614 = vmatpush2.xpose.msra.mxu0 0.0
  %3615 = vmatprep.mubr.f32.mxu0 0.0
  %3616 = vmatmul.mubr.f32.gmra.mxu0 %v210
  %v3617 = vpop.f32.mrf.mxu0
  %v3618 = vadd.f32 0.0, %v3617
  %v3619 = vpop.f32.mrf.mxu0
  %3620 = vdwg.mxu0
  %3621 = vmatprep.subr.mxu0 0.0
  %3622 = vmatpush1.xpose.msra.mxu0 0.0
  %3623 = vmatprep.subr.mxu0 0.0
  %3624 = vmatpush1.xpose.msra.mxu0 0.0
  %3625 = vmatprep.subr.mxu0 0.0
  %3626 = vmatpush1.xpose.msra.mxu0 0.0
  %3627 = vmatprep.subr.mxu0 0.0
  %3628 = vmatpush1.xpose.msra.mxu0 0.0
  %3629 = vmatprep.subr.mxu0 0.0
  %3630 = vmatpush1.xpose.msra.mxu0 0.0
  %3631 = vmatprep.subr.mxu0 0.0
  %3632 = vmatpush1.xpose.msra.mxu0 0.0
  %3633 = vmatprep.subr.mxu0 0.0
  %3634 = vmatpush1.xpose.msra.mxu0 0.0
  %3635 = vmatprep.subr.mxu0 0.0
  %3636 = vmatpush1.xpose.msra.mxu0 0.0
  %3637 = vmatprep.subr.mxu0 0.0
  %3638 = vmatpush1.xpose.msra.mxu0 0.0
  %3639 = vmatprep.subr.mxu0 0.0
  %3640 = vmatpush1.xpose.msra.mxu0 0.0
  %3641 = vmatprep.subr.mxu0 0.0
  %3642 = vmatpush1.xpose.msra.mxu0 0.0
  %3643 = vmatprep.subr.mxu0 0.0
  %3644 = vmatpush1.xpose.msra.mxu0 0.0
  %3645 = vmatprep.subr.mxu0 0.0
  %3646 = vmatpush1.xpose.msra.mxu0 0.0
  %3647 = vmatprep.subr.mxu0 0.0
  %3648 = vmatpush1.xpose.msra.mxu0 0.0
  %3649 = vmatprep.subr.mxu0 0.0
  %3650 = vmatpush1.xpose.msra.mxu0 0.0
  %3651 = vmatprep.subr.mxu0 0.0
  %3652 = vmatpush1.xpose.msra.mxu0 %v210
  %3653 = vmatprep.subr.mxu0 0.0
  %3654 = vmatpush2.xpose.msra.mxu0 0.0
  %3655 = vmatprep.subr.mxu0 0.0
  %3656 = vmatpush2.xpose.msra.mxu0 0.0
  %3657 = vmatprep.subr.mxu0 0.0
  %3658 = vmatpush2.xpose.msra.mxu0 0.0
  %3659 = vmatprep.subr.mxu0 0.0
  %3660 = vmatpush2.xpose.msra.mxu0 0.0
  %3661 = vmatprep.subr.mxu0 0.0
  %3662 = vmatpush2.xpose.msra.mxu0 0.0
  %3663 = vmatprep.subr.mxu0 0.0
  %3664 = vmatpush2.xpose.msra.mxu0 0.0
  %3665 = vmatprep.subr.mxu0 0.0
  %3666 = vmatpush2.xpose.msra.mxu0 0.0
  %3667 = vmatprep.subr.mxu0 0.0
  %3668 = vmatpush2.xpose.msra.mxu0 0.0
  %3669 = vmatprep.subr.mxu0 0.0
  %3670 = vmatpush2.xpose.msra.mxu0 0.0
  %3671 = vmatprep.subr.mxu0 0.0
  %3672 = vmatpush2.xpose.msra.mxu0 0.0
  %3673 = vmatprep.subr.mxu0 0.0
  %3674 = vmatpush2.xpose.msra.mxu0 0.0
  %3675 = vmatprep.subr.mxu0 0.0
  %3676 = vmatpush2.xpose.msra.mxu0 0.0
  %3677 = vmatprep.subr.mxu0 0.0
  %3678 = vmatpush2.xpose.msra.mxu0 0.0
  %3679 = vmatprep.subr.mxu0 0.0
  %3680 = vmatpush2.xpose.msra.mxu0 0.0
  %3681 = vmatprep.subr.mxu0 0.0
  %3682 = vmatpush2.xpose.msra.mxu0 0.0
  %3683 = vmatprep.subr.mxu0 0.0
  %3684 = vmatpush2.xpose.msra.mxu0 0.0
  %3685 = vmatprep.mubr.f32.mxu0 0.0
  %3686 = vmatmul.mubr.f32.gmra.mxu0 %v3549
  %v3687 = vpop.f32.mrf.mxu0
  %v3688 = vadd.f32 %v3618, %v3687
  %v3689 = vpop.f32.mrf.mxu0
  %3690 = vdwg.mxu0
  %v3691 = vmul.f32 %v3545, 2.0
  %v3692 = vsub.f32 %v3688, %v3691
  %vm3693 = vcmp.lt.f32.partialorder %v3692, 25.0
  %3694 = vmatprep.subr.bf16.mxu0 0
  %3695 = vmatpush1.bf16.msra.mxu0 0
  %3696 = vmatprep.subr.bf16.mxu0 0
  %3697 = vmatpush1.bf16.msra.mxu0 0
  %3698 = vmatprep.subr.bf16.mxu0 0
  %3699 = vmatpush1.bf16.msra.mxu0 0
  %3700 = vmatprep.subr.bf16.mxu0 0
  %3701 = vmatpush1.bf16.msra.mxu0 0
  %3702 = vmatprep.subr.bf16.mxu0 0
  %3703 = vmatpush1.bf16.msra.mxu0 0
  %3704 = vmatprep.subr.bf16.mxu0 0
  %3705 = vmatpush1.bf16.msra.mxu0 0
  %3706 = vmatprep.subr.bf16.mxu0 %v1941
  %3707 = vmatpush1.bf16.msra.mxu0 %v1940
  %3708 = vmatprep.subr.bf16.mxu0 %v1939
  %3709 = vmatpush1.bf16.msra.mxu0 %v1938
  %3710 = vmatprep.subr.bf16.mxu0 0
  %3711 = vmatpush2.bf16.msra.mxu0 0
  %3712 = vmatprep.subr.bf16.mxu0 0
  %3713 = vmatpush2.bf16.msra.mxu0 0
  %3714 = vmatprep.subr.bf16.mxu0 0
  %3715 = vmatpush2.bf16.msra.mxu0 0
  %3716 = vmatprep.subr.bf16.mxu0 0
  %3717 = vmatpush2.bf16.msra.mxu0 0
  %3718 = vmatprep.subr.bf16.mxu0 0
  %3719 = vmatpush2.bf16.msra.mxu0 0
  %3720 = vmatprep.subr.bf16.mxu0 0
  %3721 = vmatpush2.bf16.msra.mxu0 0
  %3722 = vmatprep.subr.bf16.mxu0 0
  %3723 = vmatpush2.bf16.msra.mxu0 0
  %3724 = vmatprep.subr.bf16.mxu0 0
  %3725 = vmatpush2.bf16.msra.mxu0 0
  %3726 = vmatprep.mubr.bf16.mxu0 0
  %3727 = vmatmul.mubr.bf16.gmra.mxu0 %v3388
  %v3728 = vpop.f32.mrf.mxu0
  %v3729 = vadd.f32 0.0, %v3728
  %v3730 = vpop.f32.mrf.mxu0
  %v3731 = vadd.f32 0.0, %v3730
  %v3732 = vpop.f32.mrf.mxu0
  %v3733 = vpop.f32.mrf.mxu0
  %3734 = vdwg.mxu0
  %v3735 = vsel %vm3693, 1, 0
  %v3736 = vcvt.s32.f32 %v3735
  %v3737 = vpack.c.bf16 %v3736, %v3736
  %v3738 = vpack.c.bf16 %v3729, %v3729
  %v3740 = vsel %vm1995, %v3737, 0
  %v3743 = vsel %vm1999, %v3738, 0
  %3745 = vmatprep.subr.bf16.mxu0 0
  %3746 = vmatpush1.bf16.msra.mxu0 0
  %3747 = vmatprep.subr.bf16.mxu0 0
  %3748 = vmatpush1.bf16.msra.mxu0 0
  %3749 = vmatprep.subr.bf16.mxu0 0
  %3750 = vmatpush1.bf16.msra.mxu0 0
  %3751 = vmatprep.subr.bf16.mxu0 0
  %3752 = vmatpush1.bf16.msra.mxu0 0
  %3753 = vmatprep.subr.bf16.mxu0 0
  %3754 = vmatpush1.bf16.msra.mxu0 0
  %3755 = vmatprep.subr.bf16.mxu0 0
  %3756 = vmatpush1.bf16.msra.mxu0 0
  %3757 = vmatprep.subr.bf16.mxu0 0
  %3758 = vmatpush1.bf16.msra.mxu0 0
  %3759 = vmatprep.subr.bf16.mxu0 0
  %3760 = vmatpush1.bf16.msra.mxu0 %v3743
  %3761 = vmatprep.subr.bf16.mxu0 0
  %3762 = vmatpush2.bf16.msra.mxu0 0
  %3763 = vmatprep.subr.bf16.mxu0 0
  %3764 = vmatpush2.bf16.msra.mxu0 0
  %3765 = vmatprep.subr.bf16.mxu0 0
  %3766 = vmatpush2.bf16.msra.mxu0 0
  %3767 = vmatprep.subr.bf16.mxu0 0
  %3768 = vmatpush2.bf16.msra.mxu0 0
  %3769 = vmatprep.subr.bf16.mxu0 0
  %3770 = vmatpush2.bf16.msra.mxu0 0
  %3771 = vmatprep.subr.bf16.mxu0 0
  %3772 = vmatpush2.bf16.msra.mxu0 0
  %3773 = vmatprep.subr.bf16.mxu0 0
  %3774 = vmatpush2.bf16.msra.mxu0 0
  %3775 = vmatprep.subr.bf16.mxu0 0
  %3776 = vmatpush2.bf16.msra.mxu0 0
  %3777 = vmatprep.mubr.bf16.mxu0 0
  %3778 = vmatmul.mubr.bf16.gmra.mxu0 %v3740
  %v3779 = vpop.f32.mrf.mxu0
  %v3780 = vadd.f32 0.0, %v3779
  %v3781 = vpop.f32.mrf.mxu0
  %v3782 = vpop.f32.mrf.mxu0
  %v3783 = vpop.f32.mrf.mxu0
  %3784 = vdwg.mxu0
  %v3785 = vadd.f32 %v3469, %v3780
  %v3786 = vadd.f32 %v3785, %v3731
  %v3787 = vxor.u32 %v3786, 2147483648
  %v3788 = vmul.f32 %v3787, 1.442695
  %v3789 = vpow.pop %v3788
  %v3790 = vadd.f32 %v3789, 1.0
  %v3791 = vrcp.pop %v3790
  %v3792 = vmul.f32 1.0, %v3791
  %v3793 = vtanh.pop %v3786
  %v3794 = vmul.f32 %v3792, %v3376
  %3796 = vrot.lane.b32.xlu0 %v3793, 32
  %v3797 = vpop.permute.xlu0 %3796
  %v3799 = vmul.f32 %v3792, %v3797
  %3801 = vrot.lane.b32.xlu0 %v3799, 32
  %v3802 = vpop.permute.xlu0 %3801
  %v3804 = vadd.f32 %v3794, %v3802
  %v3805 = vtanh.pop %v3804
  %3807 = vrot.lane.b32.xlu0 %v3805, 32
  %v3808 = vpop.permute.xlu0 %3807
  %v3810 = vmul.f32 %v3792, %v3808
  %v3811 = vpack.c.bf16 %v3810, %v3810
  %3813 = vrot.lane.b32.xlu0 %v3811, 64
  %v3814 = vpop.permute.xlu0 %3813
  %v3816 = vsel %vm1946, %v3814, 0
  %3818 = vmatprep.subr.bf16.mxu0 0
  %3819 = vmatpush1.bf16.msra.mxu0 0
  %3820 = vmatprep.subr.bf16.mxu0 0
  %3821 = vmatpush1.bf16.msra.mxu0 0
  %3822 = vmatprep.subr.bf16.mxu0 0
  %3823 = vmatpush1.bf16.msra.mxu0 0
  %3824 = vmatprep.subr.bf16.mxu0 0
  %3825 = vmatpush1.bf16.msra.mxu0 0
  %3826 = vmatprep.subr.bf16.mxu0 0
  %3827 = vmatpush1.bf16.msra.mxu0 0
  %3828 = vmatprep.subr.bf16.mxu0 0
  %3829 = vmatpush1.bf16.msra.mxu0 0
  %3830 = vmatprep.subr.bf16.mxu0 0
  %3831 = vmatpush1.bf16.msra.mxu0 %v2956
  %3832 = vmatprep.subr.bf16.mxu0 0
  %3833 = vmatpush1.bf16.msra.mxu0 %v2955
  %3834 = vmatprep.subr.bf16.mxu0 0
  %3835 = vmatpush2.bf16.msra.mxu0 0
  %3836 = vmatprep.subr.bf16.mxu0 0
  %3837 = vmatpush2.bf16.msra.mxu0 0
  %3838 = vmatprep.subr.bf16.mxu0 0
  %3839 = vmatpush2.bf16.msra.mxu0 0
  %3840 = vmatprep.subr.bf16.mxu0 0
  %3841 = vmatpush2.bf16.msra.mxu0 0
  %3842 = vmatprep.subr.bf16.mxu0 0
  %3843 = vmatpush2.bf16.msra.mxu0 0
  %3844 = vmatprep.subr.bf16.mxu0 0
  %3845 = vmatpush2.bf16.msra.mxu0 0
  %3846 = vmatprep.subr.bf16.mxu0 0
  %3847 = vmatpush2.bf16.msra.mxu0 0
  %3848 = vmatprep.subr.bf16.mxu0 0
  %3849 = vmatpush2.bf16.msra.mxu0 0
  %3850 = vmatprep.mubr.bf16.mxu0 0
  %3851 = vmatmul.mubr.bf16.gmra.mxu0 %v3816
  %v3852 = vpop.f32.mrf.mxu0
  %v3853 = vadd.f32 %v2942, %v3852
  %v3854 = vpop.f32.mrf.mxu0
  %v3855 = vpop.f32.mrf.mxu0
  %v3856 = vpop.f32.mrf.mxu0
  %3857 = vdwg.mxu0
  %v3858 = vpack.c.bf16 %v3853, %v3853
  %v3860 = vsel %vm53, %v3858, 0
  %3862 = vmatprep.subr.bf16.mxu0 0
  %3863 = vmatpush1.bf16.msra.mxu0 0
  %3864 = vmatprep.subr.bf16.mxu0 0
  %3865 = vmatpush1.bf16.msra.mxu0 0
  %3866 = vmatprep.subr.bf16.mxu0 0
  %3867 = vmatpush1.bf16.msra.mxu0 0
  %3868 = vmatprep.subr.bf16.mxu0 0
  %3869 = vmatpush1.bf16.msra.mxu0 0
  %3870 = vmatprep.subr.bf16.mxu0 0
  %3871 = vmatpush1.bf16.msra.mxu0 0
  %3872 = vmatprep.subr.bf16.mxu0 0
  %3873 = vmatpush1.bf16.msra.mxu0 0
  %3874 = vmatprep.subr.bf16.mxu0 0
  %3875 = vmatpush1.bf16.msra.mxu0 0
  %3876 = vmatprep.subr.bf16.mxu0 0
  %3877 = vmatpush1.bf16.msra.mxu0 %v68
  %3878 = vmatprep.subr.bf16.mxu0 0
  %3879 = vmatpush2.bf16.msra.mxu0 0
  %3880 = vmatprep.subr.bf16.mxu0 0
  %3881 = vmatpush2.bf16.msra.mxu0 0
  %3882 = vmatprep.subr.bf16.mxu0 0
  %3883 = vmatpush2.bf16.msra.mxu0 0
  %3884 = vmatprep.subr.bf16.mxu0 0
  %3885 = vmatpush2.bf16.msra.mxu0 0
  %3886 = vmatprep.subr.bf16.mxu0 0
  %3887 = vmatpush2.bf16.msra.mxu0 0
  %3888 = vmatprep.subr.bf16.mxu0 0
  %3889 = vmatpush2.bf16.msra.mxu0 0
  %3890 = vmatprep.subr.bf16.mxu0 0
  %3891 = vmatpush2.bf16.msra.mxu0 0
  %3892 = vmatprep.subr.bf16.mxu0 0
  %3893 = vmatpush2.bf16.msra.mxu0 0
  %3894 = vmatprep.mubr.bf16.mxu0 0
  %3895 = vmatmul.mubr.bf16.gmra.mxu0 %v3860
  %v3896 = vpop.f32.mrf.mxu0
  %v3897 = vadd.f32 %v51, %v3896
  %v3898 = vpop.f32.mrf.mxu0
  %v3899 = vpop.f32.mrf.mxu0
  %v3900 = vpop.f32.mrf.mxu0
  %3901 = vdwg.mxu0
  %v3902 = vmul.f32 %v3853, %v3853
  %v3904 = vsel %vm53, %v3853, 0
  %3906 = vmatprep.subr.mxu0 0.0
  %3907 = vmatpush1.xpose.msra.mxu0 0.0
  %3908 = vmatprep.subr.mxu0 0.0
  %3909 = vmatpush1.xpose.msra.mxu0 0.0
  %3910 = vmatprep.subr.mxu0 0.0
  %3911 = vmatpush1.xpose.msra.mxu0 0.0
  %3912 = vmatprep.subr.mxu0 0.0
  %3913 = vmatpush1.xpose.msra.mxu0 0.0
  %3914 = vmatprep.subr.mxu0 0.0
  %3915 = vmatpush1.xpose.msra.mxu0 0.0
  %3916 = vmatprep.subr.mxu0 0.0
  %3917 = vmatpush1.xpose.msra.mxu0 0.0
  %3918 = vmatprep.subr.mxu0 0.0
  %3919 = vmatpush1.xpose.msra.mxu0 0.0
  %3920 = vmatprep.subr.mxu0 0.0
  %3921 = vmatpush1.xpose.msra.mxu0 0.0
  %3922 = vmatprep.subr.mxu0 0.0
  %3923 = vmatpush1.xpose.msra.mxu0 0.0
  %3924 = vmatprep.subr.mxu0 0.0
  %3925 = vmatpush1.xpose.msra.mxu0 0.0
  %3926 = vmatprep.subr.mxu0 0.0
  %3927 = vmatpush1.xpose.msra.mxu0 0.0
  %3928 = vmatprep.subr.mxu0 0.0
  %3929 = vmatpush1.xpose.msra.mxu0 0.0
  %3930 = vmatprep.subr.mxu0 0.0
  %3931 = vmatpush1.xpose.msra.mxu0 0.0
  %3932 = vmatprep.subr.mxu0 0.0
  %3933 = vmatpush1.xpose.msra.mxu0 0.0
  %3934 = vmatprep.subr.mxu0 0.0
  %3935 = vmatpush1.xpose.msra.mxu0 0.0
  %3936 = vmatprep.subr.mxu0 0.0
  %3937 = vmatpush1.xpose.msra.mxu0 %v3904
  %3938 = vmatprep.subr.mxu0 0.0
  %3939 = vmatpush2.xpose.msra.mxu0 0.0
  %3940 = vmatprep.subr.mxu0 0.0
  %3941 = vmatpush2.xpose.msra.mxu0 0.0
  %3942 = vmatprep.subr.mxu0 0.0
  %3943 = vmatpush2.xpose.msra.mxu0 0.0
  %3944 = vmatprep.subr.mxu0 0.0
  %3945 = vmatpush2.xpose.msra.mxu0 0.0
  %3946 = vmatprep.subr.mxu0 0.0
  %3947 = vmatpush2.xpose.msra.mxu0 0.0
  %3948 = vmatprep.subr.mxu0 0.0
  %3949 = vmatpush2.xpose.msra.mxu0 0.0
  %3950 = vmatprep.subr.mxu0 0.0
  %3951 = vmatpush2.xpose.msra.mxu0 0.0
  %3952 = vmatprep.subr.mxu0 0.0
  %3953 = vmatpush2.xpose.msra.mxu0 0.0
  %3954 = vmatprep.subr.mxu0 0.0
  %3955 = vmatpush2.xpose.msra.mxu0 0.0
  %3956 = vmatprep.subr.mxu0 0.0
  %3957 = vmatpush2.xpose.msra.mxu0 0.0
  %3958 = vmatprep.subr.mxu0 0.0
  %3959 = vmatpush2.xpose.msra.mxu0 0.0
  %3960 = vmatprep.subr.mxu0 0.0
  %3961 = vmatpush2.xpose.msra.mxu0 0.0
  %3962 = vmatprep.subr.mxu0 0.0
  %3963 = vmatpush2.xpose.msra.mxu0 0.0
  %3964 = vmatprep.subr.mxu0 0.0
  %3965 = vmatpush2.xpose.msra.mxu0 0.0
  %3966 = vmatprep.subr.mxu0 0.0
  %3967 = vmatpush2.xpose.msra.mxu0 0.0
  %3968 = vmatprep.subr.mxu0 0.0
  %3969 = vmatpush2.xpose.msra.mxu0 0.0
  %3970 = vmatprep.mubr.f32.mxu0 0.0
  %3971 = vmatmul.mubr.f32.gmra.mxu0 %v3904
  %v3972 = vpop.f32.mrf.mxu0
  %v3973 = vadd.f32 0.0, %v3972
  %v3974 = vpop.f32.mrf.mxu0
  %3975 = vdwg.mxu0
  %v3977 = vsel %vm53, %v3902, 0
  %3979 = vmatprep.subr.mxu0 0.0
  %3980 = vmatpush1.xpose.msra.mxu0 0.0
  %3981 = vmatprep.subr.mxu0 0.0
  %3982 = vmatpush1.xpose.msra.mxu0 0.0
  %3983 = vmatprep.subr.mxu0 0.0
  %3984 = vmatpush1.xpose.msra.mxu0 0.0
  %3985 = vmatprep.subr.mxu0 0.0
  %3986 = vmatpush1.xpose.msra.mxu0 0.0
  %3987 = vmatprep.subr.mxu0 0.0
  %3988 = vmatpush1.xpose.msra.mxu0 0.0
  %3989 = vmatprep.subr.mxu0 0.0
  %3990 = vmatpush1.xpose.msra.mxu0 0.0
  %3991 = vmatprep.subr.mxu0 0.0
  %3992 = vmatpush1.xpose.msra.mxu0 0.0
  %3993 = vmatprep.subr.mxu0 0.0
  %3994 = vmatpush1.xpose.msra.mxu0 0.0
  %3995 = vmatprep.subr.mxu0 0.0
  %3996 = vmatpush1.xpose.msra.mxu0 0.0
  %3997 = vmatprep.subr.mxu0 0.0
  %3998 = vmatpush1.xpose.msra.mxu0 0.0
  %3999 = vmatprep.subr.mxu0 0.0
  %4000 = vmatpush1.xpose.msra.mxu0 0.0
  %4001 = vmatprep.subr.mxu0 0.0
  %4002 = vmatpush1.xpose.msra.mxu0 0.0
  %4003 = vmatprep.subr.mxu0 0.0
  %4004 = vmatpush1.xpose.msra.mxu0 0.0
  %4005 = vmatprep.subr.mxu0 0.0
  %4006 = vmatpush1.xpose.msra.mxu0 0.0
  %4007 = vmatprep.subr.mxu0 0.0
  %4008 = vmatpush1.xpose.msra.mxu0 0.0
  %4009 = vmatprep.subr.mxu0 0.0
  %4010 = vmatpush1.xpose.msra.mxu0 %v3977
  %4011 = vmatprep.subr.mxu0 0.0
  %4012 = vmatpush2.xpose.msra.mxu0 0.0
  %4013 = vmatprep.subr.mxu0 0.0
  %4014 = vmatpush2.xpose.msra.mxu0 0.0
  %4015 = vmatprep.subr.mxu0 0.0
  %4016 = vmatpush2.xpose.msra.mxu0 0.0
  %4017 = vmatprep.subr.mxu0 0.0
  %4018 = vmatpush2.xpose.msra.mxu0 0.0
  %4019 = vmatprep.subr.mxu0 0.0
  %4020 = vmatpush2.xpose.msra.mxu0 0.0
  %4021 = vmatprep.subr.mxu0 0.0
  %4022 = vmatpush2.xpose.msra.mxu0 0.0
  %4023 = vmatprep.subr.mxu0 0.0
  %4024 = vmatpush2.xpose.msra.mxu0 0.0
  %4025 = vmatprep.subr.mxu0 0.0
  %4026 = vmatpush2.xpose.msra.mxu0 0.0
  %4027 = vmatprep.subr.mxu0 0.0
  %4028 = vmatpush2.xpose.msra.mxu0 0.0
  %4029 = vmatprep.subr.mxu0 0.0
  %4030 = vmatpush2.xpose.msra.mxu0 0.0
  %4031 = vmatprep.subr.mxu0 0.0
  %4032 = vmatpush2.xpose.msra.mxu0 0.0
  %4033 = vmatprep.subr.mxu0 0.0
  %4034 = vmatpush2.xpose.msra.mxu0 0.0
  %4035 = vmatprep.subr.mxu0 0.0
  %4036 = vmatpush2.xpose.msra.mxu0 0.0
  %4037 = vmatprep.subr.mxu0 0.0
  %4038 = vmatpush2.xpose.msra.mxu0 0.0
  %4039 = vmatprep.subr.mxu0 0.0
  %4040 = vmatpush2.xpose.msra.mxu0 0.0
  %4041 = vmatprep.subr.mxu0 0.0
  %4042 = vmatpush2.xpose.msra.mxu0 0.0
  %4043 = vmatprep.mubr.f32.mxu0 0.0
  %4044 = vmatmul.mubr.f32.gmra.mxu0 %v210
  %v4045 = vpop.f32.mrf.mxu0
  %v4046 = vadd.f32 0.0, %v4045
  %v4047 = vpop.f32.mrf.mxu0
  %4048 = vdwg.mxu0
  %4049 = vmatprep.subr.mxu0 0.0
  %4050 = vmatpush1.xpose.msra.mxu0 0.0
  %4051 = vmatprep.subr.mxu0 0.0
  %4052 = vmatpush1.xpose.msra.mxu0 0.0
  %4053 = vmatprep.subr.mxu0 0.0
  %4054 = vmatpush1.xpose.msra.mxu0 0.0
  %4055 = vmatprep.subr.mxu0 0.0
  %4056 = vmatpush1.xpose.msra.mxu0 0.0
  %4057 = vmatprep.subr.mxu0 0.0
  %4058 = vmatpush1.xpose.msra.mxu0 0.0
  %4059 = vmatprep.subr.mxu0 0.0
  %4060 = vmatpush1.xpose.msra.mxu0 0.0
  %4061 = vmatprep.subr.mxu0 0.0
  %4062 = vmatpush1.xpose.msra.mxu0 0.0
  %4063 = vmatprep.subr.mxu0 0.0
  %4064 = vmatpush1.xpose.msra.mxu0 0.0
  %4065 = vmatprep.subr.mxu0 0.0
  %4066 = vmatpush1.xpose.msra.mxu0 0.0
  %4067 = vmatprep.subr.mxu0 0.0
  %4068 = vmatpush1.xpose.msra.mxu0 0.0
  %4069 = vmatprep.subr.mxu0 0.0
  %4070 = vmatpush1.xpose.msra.mxu0 0.0
  %4071 = vmatprep.subr.mxu0 0.0
  %4072 = vmatpush1.xpose.msra.mxu0 0.0
  %4073 = vmatprep.subr.mxu0 0.0
  %4074 = vmatpush1.xpose.msra.mxu0 0.0
  %4075 = vmatprep.subr.mxu0 0.0
  %4076 = vmatpush1.xpose.msra.mxu0 0.0
  %4077 = vmatprep.subr.mxu0 0.0
  %4078 = vmatpush1.xpose.msra.mxu0 0.0
  %4079 = vmatprep.subr.mxu0 0.0
  %4080 = vmatpush1.xpose.msra.mxu0 %v210
  %4081 = vmatprep.subr.mxu0 0.0
  %4082 = vmatpush2.xpose.msra.mxu0 0.0
  %4083 = vmatprep.subr.mxu0 0.0
  %4084 = vmatpush2.xpose.msra.mxu0 0.0
  %4085 = vmatprep.subr.mxu0 0.0
  %4086 = vmatpush2.xpose.msra.mxu0 0.0
  %4087 = vmatprep.subr.mxu0 0.0
  %4088 = vmatpush2.xpose.msra.mxu0 0.0
  %4089 = vmatprep.subr.mxu0 0.0
  %4090 = vmatpush2.xpose.msra.mxu0 0.0
  %4091 = vmatprep.subr.mxu0 0.0
  %4092 = vmatpush2.xpose.msra.mxu0 0.0
  %4093 = vmatprep.subr.mxu0 0.0
  %4094 = vmatpush2.xpose.msra.mxu0 0.0
  %4095 = vmatprep.subr.mxu0 0.0
  %4096 = vmatpush2.xpose.msra.mxu0 0.0
  %4097 = vmatprep.subr.mxu0 0.0
  %4098 = vmatpush2.xpose.msra.mxu0 0.0
  %4099 = vmatprep.subr.mxu0 0.0
  %4100 = vmatpush2.xpose.msra.mxu0 0.0
  %4101 = vmatprep.subr.mxu0 0.0
  %4102 = vmatpush2.xpose.msra.mxu0 0.0
  %4103 = vmatprep.subr.mxu0 0.0
  %4104 = vmatpush2.xpose.msra.mxu0 0.0
  %4105 = vmatprep.subr.mxu0 0.0
  %4106 = vmatpush2.xpose.msra.mxu0 0.0
  %4107 = vmatprep.subr.mxu0 0.0
  %4108 = vmatpush2.xpose.msra.mxu0 0.0
  %4109 = vmatprep.subr.mxu0 0.0
  %4110 = vmatpush2.xpose.msra.mxu0 0.0
  %4111 = vmatprep.subr.mxu0 0.0
  %4112 = vmatpush2.xpose.msra.mxu0 0.0
  %4113 = vmatprep.mubr.f32.mxu0 0.0
  %4114 = vmatmul.mubr.f32.gmra.mxu0 %v3977
  %v4115 = vpop.f32.mrf.mxu0
  %v4116 = vadd.f32 %v4046, %v4115
  %v4117 = vpop.f32.mrf.mxu0
  %4118 = vdwg.mxu0
  %v4119 = vmul.f32 %v3973, 2.0
  %v4120 = vsub.f32 %v4116, %v4119
  %vm4121 = vcmp.lt.f32.partialorder %v4120, 25.0
  %4122 = vmatprep.subr.bf16.mxu0 0
  %4123 = vmatpush1.bf16.msra.mxu0 0
  %4124 = vmatprep.subr.bf16.mxu0 0
  %4125 = vmatpush1.bf16.msra.mxu0 0
  %4126 = vmatprep.subr.bf16.mxu0 0
  %4127 = vmatpush1.bf16.msra.mxu0 0
  %4128 = vmatprep.subr.bf16.mxu0 0
  %4129 = vmatpush1.bf16.msra.mxu0 0
  %4130 = vmatprep.subr.bf16.mxu0 0
  %4131 = vmatpush1.bf16.msra.mxu0 0
  %4132 = vmatprep.subr.bf16.mxu0 0
  %4133 = vmatpush1.bf16.msra.mxu0 0
  %4134 = vmatprep.subr.bf16.mxu0 %v1941
  %4135 = vmatpush1.bf16.msra.mxu0 %v1940
  %4136 = vmatprep.subr.bf16.mxu0 %v1939
  %4137 = vmatpush1.bf16.msra.mxu0 %v1938
  %4138 = vmatprep.subr.bf16.mxu0 0
  %4139 = vmatpush2.bf16.msra.mxu0 0
  %4140 = vmatprep.subr.bf16.mxu0 0
  %4141 = vmatpush2.bf16.msra.mxu0 0
  %4142 = vmatprep.subr.bf16.mxu0 0
  %4143 = vmatpush2.bf16.msra.mxu0 0
  %4144 = vmatprep.subr.bf16.mxu0 0
  %4145 = vmatpush2.bf16.msra.mxu0 0
  %4146 = vmatprep.subr.bf16.mxu0 0
  %4147 = vmatpush2.bf16.msra.mxu0 0
  %4148 = vmatprep.subr.bf16.mxu0 0
  %4149 = vmatpush2.bf16.msra.mxu0 0
  %4150 = vmatprep.subr.bf16.mxu0 0
  %4151 = vmatpush2.bf16.msra.mxu0 0
  %4152 = vmatprep.subr.bf16.mxu0 0
  %4153 = vmatpush2.bf16.msra.mxu0 0
  %4154 = vmatprep.mubr.bf16.mxu0 0
  %4155 = vmatmul.mubr.bf16.gmra.mxu0 %v3816
  %v4156 = vpop.f32.mrf.mxu0
  %v4157 = vadd.f32 0.0, %v4156
  %v4158 = vpop.f32.mrf.mxu0
  %v4159 = vadd.f32 0.0, %v4158
  %v4160 = vpop.f32.mrf.mxu0
  %v4161 = vpop.f32.mrf.mxu0
  %4162 = vdwg.mxu0
  %v4163 = vsel %vm4121, 1, 0
  %v4164 = vcvt.s32.f32 %v4163
  %v4165 = vpack.c.bf16 %v4164, %v4164
  %v4166 = vpack.c.bf16 %v4157, %v4157
  %v4168 = vsel %vm1995, %v4165, 0
  %v4171 = vsel %vm1999, %v4166, 0
  %4173 = vmatprep.subr.bf16.mxu0 0
  %4174 = vmatpush1.bf16.msra.mxu0 0
  %4175 = vmatprep.subr.bf16.mxu0 0
  %4176 = vmatpush1.bf16.msra.mxu0 0
  %4177 = vmatprep.subr.bf16.mxu0 0
  %4178 = vmatpush1.bf16.msra.mxu0 0
  %4179 = vmatprep.subr.bf16.mxu0 0
  %4180 = vmatpush1.bf16.msra.mxu0 0
  %4181 = vmatprep.subr.bf16.mxu0 0
  %4182 = vmatpush1.bf16.msra.mxu0 0
  %4183 = vmatprep.subr.bf16.mxu0 0
  %4184 = vmatpush1.bf16.msra.mxu0 0
  %4185 = vmatprep.subr.bf16.mxu0 0
  %4186 = vmatpush1.bf16.msra.mxu0 0
  %4187 = vmatprep.subr.bf16.mxu0 0
  %4188 = vmatpush1.bf16.msra.mxu0 %v4171
  %4189 = vmatprep.subr.bf16.mxu0 0
  %4190 = vmatpush2.bf16.msra.mxu0 0
  %4191 = vmatprep.subr.bf16.mxu0 0
  %4192 = vmatpush2.bf16.msra.mxu0 0
  %4193 = vmatprep.subr.bf16.mxu0 0
  %4194 = vmatpush2.bf16.msra.mxu0 0
  %4195 = vmatprep.subr.bf16.mxu0 0
  %4196 = vmatpush2.bf16.msra.mxu0 0
  %4197 = vmatprep.subr.bf16.mxu0 0
  %4198 = vmatpush2.bf16.msra.mxu0 0
  %4199 = vmatprep.subr.bf16.mxu0 0
  %4200 = vmatpush2.bf16.msra.mxu0 0
  %4201 = vmatprep.subr.bf16.mxu0 0
  %4202 = vmatpush2.bf16.msra.mxu0 0
  %4203 = vmatprep.subr.bf16.mxu0 0
  %4204 = vmatpush2.bf16.msra.mxu0 0
  %4205 = vmatprep.mubr.bf16.mxu0 0
  %4206 = vmatmul.mubr.bf16.gmra.mxu0 %v4168
  %v4207 = vpop.f32.mrf.mxu0
  %v4208 = vadd.f32 0.0, %v4207
  %v4209 = vpop.f32.mrf.mxu0
  %v4210 = vpop.f32.mrf.mxu0
  %v4211 = vpop.f32.mrf.mxu0
  %4212 = vdwg.mxu0
  %v4213 = vadd.f32 %v3897, %v4208
  %v4214 = vadd.f32 %v4213, %v4159
  %v4215 = vxor.u32 %v4214, 2147483648
  %v4216 = vmul.f32 %v4215, 1.442695
  %v4217 = vpow.pop %v4216
  %v4218 = vadd.f32 %v4217, 1.0
  %v4219 = vrcp.pop %v4218
  %v4220 = vmul.f32 1.0, %v4219
  %v4221 = vtanh.pop %v4214
  %v4222 = vmul.f32 %v4220, %v3804
  %4224 = vrot.lane.b32.xlu0 %v4221, 32
  %v4225 = vpop.permute.xlu0 %4224
  %v4227 = vmul.f32 %v4220, %v4225
  %4229 = vrot.lane.b32.xlu0 %v4227, 32
  %v4230 = vpop.permute.xlu0 %4229
  %v4232 = vadd.f32 %v4222, %v4230
  %v4233 = vtanh.pop %v4232
  %4235 = vrot.lane.b32.xlu0 %v4233, 32
  %v4236 = vpop.permute.xlu0 %4235
  %v4238 = vmul.f32 %v4220, %v4236
  %v4239 = vpack.c.bf16 %v4238, %v4238
  %4241 = vrot.lane.b32.xlu0 %v4239, 64
  %v4242 = vpop.permute.xlu0 %4241
  %v4244 = vsel %vm1946, %v4242, 0
  %4246 = vmatprep.subr.bf16.mxu0 0
  %4247 = vmatpush1.bf16.msra.mxu0 0
  %4248 = vmatprep.subr.bf16.mxu0 0
  %4249 = vmatpush1.bf16.msra.mxu0 0
  %4250 = vmatprep.subr.bf16.mxu0 0
  %4251 = vmatpush1.bf16.msra.mxu0 0
  %4252 = vmatprep.subr.bf16.mxu0 0
  %4253 = vmatpush1.bf16.msra.mxu0 0
  %4254 = vmatprep.subr.bf16.mxu0 0
  %4255 = vmatpush1.bf16.msra.mxu0 0
  %4256 = vmatprep.subr.bf16.mxu0 0
  %4257 = vmatpush1.bf16.msra.mxu0 0
  %4258 = vmatprep.subr.bf16.mxu0 0
  %4259 = vmatpush1.bf16.msra.mxu0 %v2956
  %4260 = vmatprep.subr.bf16.mxu0 0
  %4261 = vmatpush1.bf16.msra.mxu0 %v2955
  %4262 = vmatprep.subr.bf16.mxu0 0
  %4263 = vmatpush2.bf16.msra.mxu0 0
  %4264 = vmatprep.subr.bf16.mxu0 0
  %4265 = vmatpush2.bf16.msra.mxu0 0
  %4266 = vmatprep.subr.bf16.mxu0 0
  %4267 = vmatpush2.bf16.msra.mxu0 0
  %4268 = vmatprep.subr.bf16.mxu0 0
  %4269 = vmatpush2.bf16.msra.mxu0 0
  %4270 = vmatprep.subr.bf16.mxu0 0
  %4271 = vmatpush2.bf16.msra.mxu0 0
  %4272 = vmatprep.subr.bf16.mxu0 0
  %4273 = vmatpush2.bf16.msra.mxu0 0
  %4274 = vmatprep.subr.bf16.mxu0 0
  %4275 = vmatpush2.bf16.msra.mxu0 0
  %4276 = vmatprep.subr.bf16.mxu0 0
  %4277 = vmatpush2.bf16.msra.mxu0 0
  %4278 = vmatprep.mubr.bf16.mxu0 0
  %4279 = vmatmul.mubr.bf16.gmra.mxu0 %v4244
  %v4280 = vpop.f32.mrf.mxu0
  %v4281 = vadd.f32 %v2942, %v4280
  %v4282 = vpop.f32.mrf.mxu0
  %v4283 = vpop.f32.mrf.mxu0
  %v4284 = vpop.f32.mrf.mxu0
  %4285 = vdwg.mxu0
  %4286 = vst.msk [vmem:[%s6] sm:$0xff] %vm53, %v2997
  %4287 = vst.msk [vmem:[%s6 + $0x8] sm:$0xff] %vm53, %v3425
  %4288 = vst.msk [vmem:[%s6 + $0x10] sm:$0xff] %vm53, %v3853
  %4289 = vst.msk [vmem:[%s6 + $0x18] sm:$0xff] %vm53, %v4281
  // Predicated region
  $region26: #{tpu_custom_call.1} parent=0 // pred_check
    _
  $region27: #{tpu_custom_call.1} parent=0 // pred_check_branch
    %4291 = sbr.rel (0) target = $region29
  $region28: #{tpu_custom_call.1} parent=0 // pred_region
    _
  $region29: #{tpu_custom_call.1} parent=0 // pred_fallthru
    _
  // Predicated region
  $region30: #{tpu_custom_call.1} parent=0 // pred_check
    _
  $region31: #{tpu_custom_call.1} parent=0 // pred_check_branch
    %4293 = sbr.rel (0) target = $region33
  $region32: #{tpu_custom_call.1} parent=0 // pred_region
    _
  $region33: #{tpu_custom_call.1} parent=0 // pred_fallthru
    _

</llo_original>
